<compile_context>
chip_gen: v6e
topology: v6e:2x2x1
jax: 0.10.0
libtpu: 0.0.40
codegen_flags: <defaults>
</compile_context>

<pallas_src>
import functools
import math

import jax
import jax.numpy as jnp
from jax.experimental import pallas as pl
from jax.experimental.pallas import tpu as pltpu

NUM_HEADS = 8
LN_EPS = 1e-5


def _gelu_tanh(x):
    c = math.sqrt(2.0 / math.pi)
    return 0.5 * x * (1.0 + jnp.tanh(c * (x + 0.044715 * x * x * x)))


def _layer_norm(x, gamma, beta):
    mean = jnp.mean(x, axis=-1, keepdims=True)
    xc = x - mean
    var = jnp.mean(xc * xc, axis=-1, keepdims=True)
    return xc * jax.lax.rsqrt(var + LN_EPS) * gamma + beta


def encoder_layer_kernel(x_ref, wq_ref, wk_ref, wv_ref, bq_ref, bk_ref, bv_ref,
                         wo_ref, bo_ref, g1_ref, be1_ref,
                         w1_ref, b1_ref, w2_ref, b2_ref, g2_ref, be2_ref,
                         out_ref, *, num_heads):
    f32 = jnp.float32
    bf16 = jnp.bfloat16

    x = x_ref[0]                              # (S, D) float32
    s_len, d_model = x.shape
    dh = d_model // num_heads
    xb = x.astype(bf16)

    # ---- multi-head self-attention (projections contract over D on MXU) ----
    q = jnp.dot(xb, wq_ref[...], preferred_element_type=f32) + bq_ref[...]
    k = jnp.dot(xb, wk_ref[...], preferred_element_type=f32) + bk_ref[...]
    v = jnp.dot(xb, wv_ref[...], preferred_element_type=f32) + bv_ref[...]

    scale = 1.0 / math.sqrt(dh)
    head_outs = []
    for h in range(num_heads):                # static unroll; tiny S, static slices
        lo = h * dh
        qh = q[:, lo:lo + dh]                 # (S, dh)
        kh = k[:, lo:lo + dh]
        vh = v[:, lo:lo + dh]
        scores = jax.lax.dot_general(         # (S, S), contract over dh
            qh, kh, (((1,), (1,)), ((), ())),
            preferred_element_type=f32) * scale
        scores = scores - jnp.max(scores, axis=-1, keepdims=True)
        p = jnp.exp(scores)
        p = p / jnp.sum(p, axis=-1, keepdims=True)
        head_outs.append(jnp.dot(p, vh, preferred_element_type=f32))   # (S, dh)
    ctx = jnp.concatenate(head_outs, axis=-1)                          # (S, D)

    attn = jnp.dot(ctx.astype(bf16), wo_ref[...],
                   preferred_element_type=f32) + bo_ref[...]
    x1 = _layer_norm(x + attn, g1_ref[...], be1_ref[...])              # (S, D)

    # ---- feed-forward (D -> 4D -> D, GELU), bf16 operands / f32 accumulate --
    h1 = _gelu_tanh(jnp.dot(x1.astype(bf16), w1_ref[...],
                            preferred_element_type=f32) + b1_ref[...])  # (S, 4D)
    ff = jnp.dot(h1.astype(bf16), w2_ref[...],
                 preferred_element_type=f32) + b2_ref[...]              # (S, D)
    out_ref[0, :, :] = _layer_norm(x1 + ff, g2_ref[...],
                                   be2_ref[...]).astype(out_ref.dtype)


@jax.jit
def difference_extractor_forward(reps, params):
    """reps: (B, S, D) float32; params follow nn.TransformerEncoderLayer naming."""
    b, s, d = reps.shape
    d_ff = params["w1"].shape[0]
    f32, bf16 = jnp.float32, jnp.bfloat16

    # Glue (plain JAX): transpose weights to x @ W layout, cast matmul
    # operands to bf16, present biases / LN params as lane-dense (1, D) rows.
    w_in, b_in = params["w_in"], params["b_in"]          # (3D, D), (3D,)
    wq_t = w_in[:d].T.astype(bf16)
    wk_t = w_in[d:2 * d].T.astype(bf16)
    wv_t = w_in[2 * d:].T.astype(bf16)
    bq = b_in[:d].reshape(1, d).astype(f32)
    bk = b_in[d:2 * d].reshape(1, d).astype(f32)
    bv = b_in[2 * d:].reshape(1, d).astype(f32)
    wo_t = params["w_out"].T.astype(bf16)                # (D, D)
    bo = params["b_out"].reshape(1, d).astype(f32)
    w1_t = params["w1"].T.astype(bf16)                   # (D, 4D)
    b1 = params["b1"].reshape(1, d_ff).astype(f32)
    w2_t = params["w2"].T.astype(bf16)                   # (4D, D)
    b2 = params["b2"].reshape(1, d).astype(f32)
    g1 = params["ln1_g"].reshape(1, d).astype(f32)
    be1 = params["ln1_b"].reshape(1, d).astype(f32)
    g2 = params["ln2_g"].reshape(1, d).astype(f32)
    be2 = params["ln2_b"].reshape(1, d).astype(f32)

    def fixed(shape):
        return pl.BlockSpec(shape, lambda i: (0,) * len(shape))

    kernel = functools.partial(encoder_layer_kernel, num_heads=NUM_HEADS)
    return pl.pallas_call(
        kernel,
        out_shape=jax.ShapeDtypeStruct((b, s, d), jnp.float32),
        grid=(b,),
        in_specs=[
            pl.BlockSpec((1, s, d), lambda i: (i, 0, 0)),   # per-batch row
            fixed((d, d)), fixed((d, d)), fixed((d, d)),    # Wq, Wk, Wv
            fixed((1, d)), fixed((1, d)), fixed((1, d)),    # bq, bk, bv
            fixed((d, d)), fixed((1, d)),                   # Wo, bo
            fixed((1, d)), fixed((1, d)),                   # ln1 gamma/beta
            fixed((d, d_ff)), fixed((1, d_ff)),             # W1, b1
            fixed((d_ff, d)), fixed((1, d)),                # W2, b2
            fixed((1, d)), fixed((1, d)),                   # ln2 gamma/beta
        ],
        out_specs=pl.BlockSpec((1, s, d), lambda i: (i, 0, 0)),
        compiler_params=pltpu.CompilerParams(
            dimension_semantics=("parallel",)),
    )(reps.astype(f32), wq_t, wk_t, wv_t, bq, bk, bv, wo_t, bo,
      g1, be1, w1_t, b1, w2_t, b2, g2, be2)


def difference_extractor_reference(reps, params):
    """Pure-JAX f32 reference mirroring the torch forward (eval mode)."""
    b, s, d = reps.shape
    h = NUM_HEADS
    dh = d // h
    x = reps.astype(jnp.float32)

    qkv = x @ params["w_in"].T + params["b_in"]          # (B, S, 3D)
    q, k, v = jnp.split(qkv, 3, axis=-1)

    def heads(t):
        return t.reshape(b, s, h, dh).transpose(0, 2, 1, 3)

    qh, kh, vh = heads(q), heads(k), heads(v)
    scores = jnp.einsum("bhqd,bhkd->bhqk", qh, kh) / math.sqrt(dh)
    attn = jax.nn.softmax(scores, axis=-1)
    ctx = jnp.einsum("bhqk,bhkd->bhqd", attn, vh)
    ctx = ctx.transpose(0, 2, 1, 3).reshape(b, s, d)
    attn_out = ctx @ params["w_out"].T + params["b_out"]

    def ln(t, g, be):
        mu = t.mean(-1, keepdims=True)
        var = ((t - mu) ** 2).mean(-1, keepdims=True)
        return (t - mu) / jnp.sqrt(var + LN_EPS) * g + be

    x1 = ln(x + attn_out, params["ln1_g"], params["ln1_b"])
    hid = _gelu_tanh(x1 @ params["w1"].T + params["b1"])
    x2 = ln(x1 + hid @ params["w2"].T + params["b2"],
            params["ln2_g"], params["ln2_b"])
    return x2


if __name__ == "__main__":
    B, S, D = 2, 8, 128          # batch, seq, hidden (8 heads -> head_dim 16)
    D_FF = 4 * D

    keys = jax.random.split(jax.random.PRNGKey(0), 13)

    def init(k, shape, scale):
        return scale * jax.random.normal(k, shape, dtype=jnp.float32)

    params = {
        "w_in":  init(keys[0], (3 * D, D), 1.0 / math.sqrt(D)),
        "b_in":  init(keys[1], (3 * D,), 0.02),
        "w_out": init(keys[2], (D, D), 1.0 / math.sqrt(D)),
        "b_out": init(keys[3], (D,), 0.02),
        "w1":    init(keys[4], (D_FF, D), 1.0 / math.sqrt(D)),
        "b1":    init(keys[5], (D_FF,), 0.02),
        "w2":    init(keys[6], (D, D_FF), 1.0 / math.sqrt(D_FF)),
        "b2":    init(keys[7], (D,), 0.02),
        "ln1_g": 1.0 + init(keys[8], (D,), 0.05),
        "ln1_b": init(keys[9], (D,), 0.05),
        "ln2_g": 1.0 + init(keys[10], (D,), 0.05),
        "ln2_b": init(keys[11], (D,), 0.05),
    }
    reps = jax.random.normal(keys[12], (B, S, D), dtype=jnp.float32)

    out = difference_extractor_forward(reps, params)
    jax.block_until_ready(out)

    ref = difference_extractor_reference(reps, params)
    assert out.shape == (B, S, D)
    # bf16 MXU operands with f32 accumulation -> small absolute error vs the
    # all-f32 reference; elementwise/LN math is f32 in both.
    assert jnp.allclose(out, ref, atol=5e-2, rtol=5e-2), (
        f"max abs err {jnp.max(jnp.abs(out - ref))}")

    print("KERNEL_OK")
</pallas_src>

<mosaic_0001>
module attributes {stable_mosaic.version = 11 : i64} {
  func.func @encoder_layer_kernel(%arg0: i32, %arg1: memref<1x8x128xf32, #tpu.memory_space<vmem>>, %arg2: memref<128x128xbf16, #tpu.memory_space<vmem>>, %arg3: memref<128x128xbf16, #tpu.memory_space<vmem>>, %arg4: memref<128x128xbf16, #tpu.memory_space<vmem>>, %arg5: memref<1x128xf32, #tpu.memory_space<vmem>>, %arg6: memref<1x128xf32, #tpu.memory_space<vmem>>, %arg7: memref<1x128xf32, #tpu.memory_space<vmem>>, %arg8: memref<128x128xbf16, #tpu.memory_space<vmem>>, %arg9: memref<1x128xf32, #tpu.memory_space<vmem>>, %arg10: memref<1x128xf32, #tpu.memory_space<vmem>>, %arg11: memref<1x128xf32, #tpu.memory_space<vmem>>, %arg12: memref<128x512xbf16, #tpu.memory_space<vmem>>, %arg13: memref<1x512xf32, #tpu.memory_space<vmem>>, %arg14: memref<512x128xbf16, #tpu.memory_space<vmem>>, %arg15: memref<1x128xf32, #tpu.memory_space<vmem>>, %arg16: memref<1x128xf32, #tpu.memory_space<vmem>>, %arg17: memref<1x128xf32, #tpu.memory_space<vmem>>, %arg18: memref<1x8x128xf32, #tpu.memory_space<vmem>>) attributes {dimension_semantics = [#tpu.dimension_semantics<parallel>], iteration_bounds = array<i64: 2>, scalar_prefetch = 0 : i64, scratch_operands = 0 : i64, tpu.core_type = #tpu.core_type<tc>, window_params = [{transform_indices = @transform_0, window_bounds = array<i64: 1, 8, 128>}, {pipeline_mode = #tpu.pipeline_mode<synchronous>, transform_indices = @transform_1, window_bounds = array<i64: 128, 128>}, {pipeline_mode = #tpu.pipeline_mode<synchronous>, transform_indices = @transform_2, window_bounds = array<i64: 128, 128>}, {pipeline_mode = #tpu.pipeline_mode<synchronous>, transform_indices = @transform_3, window_bounds = array<i64: 128, 128>}, {pipeline_mode = #tpu.pipeline_mode<synchronous>, transform_indices = @transform_4, window_bounds = array<i64: 1, 128>}, {pipeline_mode = #tpu.pipeline_mode<synchronous>, transform_indices = @transform_5, window_bounds = array<i64: 1, 128>}, {pipeline_mode = #tpu.pipeline_mode<synchronous>, transform_indices = @transform_6, window_bounds = array<i64: 1, 128>}, {pipeline_mode = #tpu.pipeline_mode<synchronous>, transform_indices = @transform_7, window_bounds = array<i64: 128, 128>}, {pipeline_mode = #tpu.pipeline_mode<synchronous>, transform_indices = @transform_8, window_bounds = array<i64: 1, 128>}, {pipeline_mode = #tpu.pipeline_mode<synchronous>, transform_indices = @transform_9, window_bounds = array<i64: 1, 128>}, {pipeline_mode = #tpu.pipeline_mode<synchronous>, transform_indices = @transform_10, window_bounds = array<i64: 1, 128>}, {pipeline_mode = #tpu.pipeline_mode<synchronous>, transform_indices = @transform_11, window_bounds = array<i64: 128, 512>}, {pipeline_mode = #tpu.pipeline_mode<synchronous>, transform_indices = @transform_12, window_bounds = array<i64: 1, 512>}, {pipeline_mode = #tpu.pipeline_mode<synchronous>, transform_indices = @transform_13, window_bounds = array<i64: 512, 128>}, {pipeline_mode = #tpu.pipeline_mode<synchronous>, transform_indices = @transform_14, window_bounds = array<i64: 1, 128>}, {pipeline_mode = #tpu.pipeline_mode<synchronous>, transform_indices = @transform_15, window_bounds = array<i64: 1, 128>}, {pipeline_mode = #tpu.pipeline_mode<synchronous>, transform_indices = @transform_16, window_bounds = array<i64: 1, 128>}, {transform_indices = @transform_17, window_bounds = array<i64: 1, 8, 128>}]} {
    %c0 = arith.constant 0 : index
    %c0_0 = arith.constant 0 : index
    %c0_1 = arith.constant 0 : index
    %0 = vector.load %arg1[%c0, %c0_0, %c0_1] : memref<1x8x128xf32, #tpu.memory_space<vmem>>, vector<1x8x128xf32>
    %1 = vector.shape_cast %0 : vector<1x8x128xf32> to vector<8x128xf32>
    %2 = arith.truncf %1 : vector<8x128xf32> to vector<8x128xbf16>
    %c0_2 = arith.constant 0 : index
    %c0_3 = arith.constant 0 : index
    %3 = vector.load %arg2[%c0_2, %c0_3] : memref<128x128xbf16, #tpu.memory_space<vmem>>, vector<128x128xbf16>
    %cst = arith.constant dense<0.000000e+00> : vector<8x128xf32>
    %4 = tpu.matmul %2, %3, %cst {dimension_numbers = #tpu.dot_dimension_numbers<[1], [0], [0], [1], [0, 0, 1, 1], [], []>} : vector<8x128xbf16>, vector<128x128xbf16>, vector<8x128xf32> -> vector<8x128xf32>
    %c0_4 = arith.constant 0 : index
    %c0_5 = arith.constant 0 : index
    %5 = vector.load %arg5[%c0_4, %c0_5] : memref<1x128xf32, #tpu.memory_space<vmem>>, vector<1x128xf32>
    %6 = vector.broadcast %5 : vector<1x128xf32> to vector<8x128xf32>
    %7 = arith.addf %4, %6 : vector<8x128xf32>
    %c0_6 = arith.constant 0 : index
    %c0_7 = arith.constant 0 : index
    %8 = vector.load %arg3[%c0_6, %c0_7] : memref<128x128xbf16, #tpu.memory_space<vmem>>, vector<128x128xbf16>
    %cst_8 = arith.constant dense<0.000000e+00> : vector<8x128xf32>
    %9 = tpu.matmul %2, %8, %cst_8 {dimension_numbers = #tpu.dot_dimension_numbers<[1], [0], [0], [1], [0, 0, 1, 1], [], []>} : vector<8x128xbf16>, vector<128x128xbf16>, vector<8x128xf32> -> vector<8x128xf32>
    %c0_9 = arith.constant 0 : index
    %c0_10 = arith.constant 0 : index
    %10 = vector.load %arg6[%c0_9, %c0_10] : memref<1x128xf32, #tpu.memory_space<vmem>>, vector<1x128xf32>
    %11 = vector.broadcast %10 : vector<1x128xf32> to vector<8x128xf32>
    %12 = arith.addf %9, %11 : vector<8x128xf32>
    %c0_11 = arith.constant 0 : index
    %c0_12 = arith.constant 0 : index
    %13 = vector.load %arg4[%c0_11, %c0_12] : memref<128x128xbf16, #tpu.memory_space<vmem>>, vector<128x128xbf16>
    %cst_13 = arith.constant dense<0.000000e+00> : vector<8x128xf32>
    %14 = tpu.matmul %2, %13, %cst_13 {dimension_numbers = #tpu.dot_dimension_numbers<[1], [0], [0], [1], [0, 0, 1, 1], [], []>} : vector<8x128xbf16>, vector<128x128xbf16>, vector<8x128xf32> -> vector<8x128xf32>
    %c0_14 = arith.constant 0 : index
    %c0_15 = arith.constant 0 : index
    %15 = vector.load %arg7[%c0_14, %c0_15] : memref<1x128xf32, #tpu.memory_space<vmem>>, vector<1x128xf32>
    %16 = vector.broadcast %15 : vector<1x128xf32> to vector<8x128xf32>
    %17 = arith.addf %14, %16 : vector<8x128xf32>
    %18 = vector.extract_strided_slice %7 {offsets = [0, 0], sizes = [8, 16], strides = [1, 1]} : vector<8x128xf32> to vector<8x16xf32>
    %19 = vector.extract_strided_slice %12 {offsets = [0, 0], sizes = [8, 16], strides = [1, 1]} : vector<8x128xf32> to vector<8x16xf32>
    %20 = vector.extract_strided_slice %17 {offsets = [0, 0], sizes = [8, 16], strides = [1, 1]} : vector<8x128xf32> to vector<8x16xf32>
    %cst_16 = arith.constant dense<0.000000e+00> : vector<8x8xf32>
    %21 = tpu.matmul %18, %19, %cst_16 {dimension_numbers = #tpu.dot_dimension_numbers<[1], [1], [0], [0], [0, 0, 1, 0], [], []>} : vector<8x16xf32>, vector<8x16xf32>, vector<8x8xf32> -> vector<8x8xf32>
    %cst_17 = arith.constant 2.500000e-01 : f32
    %22 = vector.broadcast %cst_17 : f32 to vector<8x8xf32>
    %23 = arith.mulf %21, %22 : vector<8x8xf32>
    %cst_18 = arith.constant dense<0xFF800000> : vector<8xf32>
    %24 = vector.multi_reduction <maximumf>, %23, %cst_18 [1] : vector<8x8xf32> to vector<8xf32>
    %25 = vector.shape_cast %24 : vector<8xf32> to vector<8x1xf32>
    %26 = vector.broadcast %25 : vector<8x1xf32> to vector<8x8xf32>
    %27 = arith.subf %23, %26 : vector<8x8xf32>
    %28 = math.exp %27 : vector<8x8xf32>
    %cst_19 = arith.constant dense<0.000000e+00> : vector<8xf32>
    %29 = vector.multi_reduction <add>, %28, %cst_19 [1] : vector<8x8xf32> to vector<8xf32>
    %30 = vector.shape_cast %29 : vector<8xf32> to vector<8x1xf32>
    %31 = vector.broadcast %30 : vector<8x1xf32> to vector<8x8xf32>
    %32 = arith.divf %28, %31 : vector<8x8xf32>
    %cst_20 = arith.constant dense<0.000000e+00> : vector<8x16xf32>
    %33 = tpu.matmul %32, %20, %cst_20 {dimension_numbers = #tpu.dot_dimension_numbers<[1], [0], [0], [1], [0, 0, 1, 1], [], []>} : vector<8x8xf32>, vector<8x16xf32>, vector<8x16xf32> -> vector<8x16xf32>
    %34 = vector.extract_strided_slice %7 {offsets = [0, 16], sizes = [8, 16], strides = [1, 1]} : vector<8x128xf32> to vector<8x16xf32>
    %35 = vector.extract_strided_slice %12 {offsets = [0, 16], sizes = [8, 16], strides = [1, 1]} : vector<8x128xf32> to vector<8x16xf32>
    %36 = vector.extract_strided_slice %17 {offsets = [0, 16], sizes = [8, 16], strides = [1, 1]} : vector<8x128xf32> to vector<8x16xf32>
    %cst_21 = arith.constant dense<0.000000e+00> : vector<8x8xf32>
    %37 = tpu.matmul %34, %35, %cst_21 {dimension_numbers = #tpu.dot_dimension_numbers<[1], [1], [0], [0], [0, 0, 1, 0], [], []>} : vector<8x16xf32>, vector<8x16xf32>, vector<8x8xf32> -> vector<8x8xf32>
    %cst_22 = arith.constant 2.500000e-01 : f32
    %38 = vector.broadcast %cst_22 : f32 to vector<8x8xf32>
    %39 = arith.mulf %37, %38 : vector<8x8xf32>
    %cst_23 = arith.constant dense<0xFF800000> : vector<8xf32>
    %40 = vector.multi_reduction <maximumf>, %39, %cst_23 [1] : vector<8x8xf32> to vector<8xf32>
    %41 = vector.shape_cast %40 : vector<8xf32> to vector<8x1xf32>
    %42 = vector.broadcast %41 : vector<8x1xf32> to vector<8x8xf32>
    %43 = arith.subf %39, %42 : vector<8x8xf32>
    %44 = math.exp %43 : vector<8x8xf32>
    %cst_24 = arith.constant dense<0.000000e+00> : vector<8xf32>
    %45 = vector.multi_reduction <add>, %44, %cst_24 [1] : vector<8x8xf32> to vector<8xf32>
    %46 = vector.shape_cast %45 : vector<8xf32> to vector<8x1xf32>
    %47 = vector.broadcast %46 : vector<8x1xf32> to vector<8x8xf32>
    %48 = arith.divf %44, %47 : vector<8x8xf32>
    %cst_25 = arith.constant dense<0.000000e+00> : vector<8x16xf32>
    %49 = tpu.matmul %48, %36, %cst_25 {dimension_numbers = #tpu.dot_dimension_numbers<[1], [0], [0], [1], [0, 0, 1, 1], [], []>} : vector<8x8xf32>, vector<8x16xf32>, vector<8x16xf32> -> vector<8x16xf32>
    %50 = vector.extract_strided_slice %7 {offsets = [0, 32], sizes = [8, 16], strides = [1, 1]} : vector<8x128xf32> to vector<8x16xf32>
    %51 = vector.extract_strided_slice %12 {offsets = [0, 32], sizes = [8, 16], strides = [1, 1]} : vector<8x128xf32> to vector<8x16xf32>
    %52 = vector.extract_strided_slice %17 {offsets = [0, 32], sizes = [8, 16], strides = [1, 1]} : vector<8x128xf32> to vector<8x16xf32>
    %cst_26 = arith.constant dense<0.000000e+00> : vector<8x8xf32>
    %53 = tpu.matmul %50, %51, %cst_26 {dimension_numbers = #tpu.dot_dimension_numbers<[1], [1], [0], [0], [0, 0, 1, 0], [], []>} : vector<8x16xf32>, vector<8x16xf32>, vector<8x8xf32> -> vector<8x8xf32>
    %cst_27 = arith.constant 2.500000e-01 : f32
    %54 = vector.broadcast %cst_27 : f32 to vector<8x8xf32>
    %55 = arith.mulf %53, %54 : vector<8x8xf32>
    %cst_28 = arith.constant dense<0xFF800000> : vector<8xf32>
    %56 = vector.multi_reduction <maximumf>, %55, %cst_28 [1] : vector<8x8xf32> to vector<8xf32>
    %57 = vector.shape_cast %56 : vector<8xf32> to vector<8x1xf32>
    %58 = vector.broadcast %57 : vector<8x1xf32> to vector<8x8xf32>
    %59 = arith.subf %55, %58 : vector<8x8xf32>
    %60 = math.exp %59 : vector<8x8xf32>
    %cst_29 = arith.constant dense<0.000000e+00> : vector<8xf32>
    %61 = vector.multi_reduction <add>, %60, %cst_29 [1] : vector<8x8xf32> to vector<8xf32>
    %62 = vector.shape_cast %61 : vector<8xf32> to vector<8x1xf32>
    %63 = vector.broadcast %62 : vector<8x1xf32> to vector<8x8xf32>
    %64 = arith.divf %60, %63 : vector<8x8xf32>
    %cst_30 = arith.constant dense<0.000000e+00> : vector<8x16xf32>
    %65 = tpu.matmul %64, %52, %cst_30 {dimension_numbers = #tpu.dot_dimension_numbers<[1], [0], [0], [1], [0, 0, 1, 1], [], []>} : vector<8x8xf32>, vector<8x16xf32>, vector<8x16xf32> -> vector<8x16xf32>
    %66 = vector.extract_strided_slice %7 {offsets = [0, 48], sizes = [8, 16], strides = [1, 1]} : vector<8x128xf32> to vector<8x16xf32>
    %67 = vector.extract_strided_slice %12 {offsets = [0, 48], sizes = [8, 16], strides = [1, 1]} : vector<8x128xf32> to vector<8x16xf32>
    %68 = vector.extract_strided_slice %17 {offsets = [0, 48], sizes = [8, 16], strides = [1, 1]} : vector<8x128xf32> to vector<8x16xf32>
    %cst_31 = arith.constant dense<0.000000e+00> : vector<8x8xf32>
    %69 = tpu.matmul %66, %67, %cst_31 {dimension_numbers = #tpu.dot_dimension_numbers<[1], [1], [0], [0], [0, 0, 1, 0], [], []>} : vector<8x16xf32>, vector<8x16xf32>, vector<8x8xf32> -> vector<8x8xf32>
    %cst_32 = arith.constant 2.500000e-01 : f32
    %70 = vector.broadcast %cst_32 : f32 to vector<8x8xf32>
    %71 = arith.mulf %69, %70 : vector<8x8xf32>
    %cst_33 = arith.constant dense<0xFF800000> : vector<8xf32>
    %72 = vector.multi_reduction <maximumf>, %71, %cst_33 [1] : vector<8x8xf32> to vector<8xf32>
    %73 = vector.shape_cast %72 : vector<8xf32> to vector<8x1xf32>
    %74 = vector.broadcast %73 : vector<8x1xf32> to vector<8x8xf32>
    %75 = arith.subf %71, %74 : vector<8x8xf32>
    %76 = math.exp %75 : vector<8x8xf32>
    %cst_34 = arith.constant dense<0.000000e+00> : vector<8xf32>
    %77 = vector.multi_reduction <add>, %76, %cst_34 [1] : vector<8x8xf32> to vector<8xf32>
    %78 = vector.shape_cast %77 : vector<8xf32> to vector<8x1xf32>
    %79 = vector.broadcast %78 : vector<8x1xf32> to vector<8x8xf32>
    %80 = arith.divf %76, %79 : vector<8x8xf32>
    %cst_35 = arith.constant dense<0.000000e+00> : vector<8x16xf32>
    %81 = tpu.matmul %80, %68, %cst_35 {dimension_numbers = #tpu.dot_dimension_numbers<[1], [0], [0], [1], [0, 0, 1, 1], [], []>} : vector<8x8xf32>, vector<8x16xf32>, vector<8x16xf32> -> vector<8x16xf32>
    %82 = vector.extract_strided_slice %7 {offsets = [0, 64], sizes = [8, 16], strides = [1, 1]} : vector<8x128xf32> to vector<8x16xf32>
    %83 = vector.extract_strided_slice %12 {offsets = [0, 64], sizes = [8, 16], strides = [1, 1]} : vector<8x128xf32> to vector<8x16xf32>
    %84 = vector.extract_strided_slice %17 {offsets = [0, 64], sizes = [8, 16], strides = [1, 1]} : vector<8x128xf32> to vector<8x16xf32>
    %cst_36 = arith.constant dense<0.000000e+00> : vector<8x8xf32>
    %85 = tpu.matmul %82, %83, %cst_36 {dimension_numbers = #tpu.dot_dimension_numbers<[1], [1], [0], [0], [0, 0, 1, 0], [], []>} : vector<8x16xf32>, vector<8x16xf32>, vector<8x8xf32> -> vector<8x8xf32>
    %cst_37 = arith.constant 2.500000e-01 : f32
    %86 = vector.broadcast %cst_37 : f32 to vector<8x8xf32>
    %87 = arith.mulf %85, %86 : vector<8x8xf32>
    %cst_38 = arith.constant dense<0xFF800000> : vector<8xf32>
    %88 = vector.multi_reduction <maximumf>, %87, %cst_38 [1] : vector<8x8xf32> to vector<8xf32>
    %89 = vector.shape_cast %88 : vector<8xf32> to vector<8x1xf32>
    %90 = vector.broadcast %89 : vector<8x1xf32> to vector<8x8xf32>
    %91 = arith.subf %87, %90 : vector<8x8xf32>
    %92 = math.exp %91 : vector<8x8xf32>
    %cst_39 = arith.constant dense<0.000000e+00> : vector<8xf32>
    %93 = vector.multi_reduction <add>, %92, %cst_39 [1] : vector<8x8xf32> to vector<8xf32>
    %94 = vector.shape_cast %93 : vector<8xf32> to vector<8x1xf32>
    %95 = vector.broadcast %94 : vector<8x1xf32> to vector<8x8xf32>
    %96 = arith.divf %92, %95 : vector<8x8xf32>
    %cst_40 = arith.constant dense<0.000000e+00> : vector<8x16xf32>
    %97 = tpu.matmul %96, %84, %cst_40 {dimension_numbers = #tpu.dot_dimension_numbers<[1], [0], [0], [1], [0, 0, 1, 1], [], []>} : vector<8x8xf32>, vector<8x16xf32>, vector<8x16xf32> -> vector<8x16xf32>
    %98 = vector.extract_strided_slice %7 {offsets = [0, 80], sizes = [8, 16], strides = [1, 1]} : vector<8x128xf32> to vector<8x16xf32>
    %99 = vector.extract_strided_slice %12 {offsets = [0, 80], sizes = [8, 16], strides = [1, 1]} : vector<8x128xf32> to vector<8x16xf32>
    %100 = vector.extract_strided_slice %17 {offsets = [0, 80], sizes = [8, 16], strides = [1, 1]} : vector<8x128xf32> to vector<8x16xf32>
    %cst_41 = arith.constant dense<0.000000e+00> : vector<8x8xf32>
    %101 = tpu.matmul %98, %99, %cst_41 {dimension_numbers = #tpu.dot_dimension_numbers<[1], [1], [0], [0], [0, 0, 1, 0], [], []>} : vector<8x16xf32>, vector<8x16xf32>, vector<8x8xf32> -> vector<8x8xf32>
    %cst_42 = arith.constant 2.500000e-01 : f32
    %102 = vector.broadcast %cst_42 : f32 to vector<8x8xf32>
    %103 = arith.mulf %101, %102 : vector<8x8xf32>
    %cst_43 = arith.constant dense<0xFF800000> : vector<8xf32>
    %104 = vector.multi_reduction <maximumf>, %103, %cst_43 [1] : vector<8x8xf32> to vector<8xf32>
    %105 = vector.shape_cast %104 : vector<8xf32> to vector<8x1xf32>
    %106 = vector.broadcast %105 : vector<8x1xf32> to vector<8x8xf32>
    %107 = arith.subf %103, %106 : vector<8x8xf32>
    %108 = math.exp %107 : vector<8x8xf32>
    %cst_44 = arith.constant dense<0.000000e+00> : vector<8xf32>
    %109 = vector.multi_reduction <add>, %108, %cst_44 [1] : vector<8x8xf32> to vector<8xf32>
    %110 = vector.shape_cast %109 : vector<8xf32> to vector<8x1xf32>
    %111 = vector.broadcast %110 : vector<8x1xf32> to vector<8x8xf32>
    %112 = arith.divf %108, %111 : vector<8x8xf32>
    %cst_45 = arith.constant dense<0.000000e+00> : vector<8x16xf32>
    %113 = tpu.matmul %112, %100, %cst_45 {dimension_numbers = #tpu.dot_dimension_numbers<[1], [0], [0], [1], [0, 0, 1, 1], [], []>} : vector<8x8xf32>, vector<8x16xf32>, vector<8x16xf32> -> vector<8x16xf32>
    %114 = vector.extract_strided_slice %7 {offsets = [0, 96], sizes = [8, 16], strides = [1, 1]} : vector<8x128xf32> to vector<8x16xf32>
    %115 = vector.extract_strided_slice %12 {offsets = [0, 96], sizes = [8, 16], strides = [1, 1]} : vector<8x128xf32> to vector<8x16xf32>
    %116 = vector.extract_strided_slice %17 {offsets = [0, 96], sizes = [8, 16], strides = [1, 1]} : vector<8x128xf32> to vector<8x16xf32>
    %cst_46 = arith.constant dense<0.000000e+00> : vector<8x8xf32>
    %117 = tpu.matmul %114, %115, %cst_46 {dimension_numbers = #tpu.dot_dimension_numbers<[1], [1], [0], [0], [0, 0, 1, 0], [], []>} : vector<8x16xf32>, vector<8x16xf32>, vector<8x8xf32> -> vector<8x8xf32>
    %cst_47 = arith.constant 2.500000e-01 : f32
    %118 = vector.broadcast %cst_47 : f32 to vector<8x8xf32>
    %119 = arith.mulf %117, %118 : vector<8x8xf32>
    %cst_48 = arith.constant dense<0xFF800000> : vector<8xf32>
    %120 = vector.multi_reduction <maximumf>, %119, %cst_48 [1] : vector<8x8xf32> to vector<8xf32>
    %121 = vector.shape_cast %120 : vector<8xf32> to vector<8x1xf32>
    %122 = vector.broadcast %121 : vector<8x1xf32> to vector<8x8xf32>
    %123 = arith.subf %119, %122 : vector<8x8xf32>
    %124 = math.exp %123 : vector<8x8xf32>
    %cst_49 = arith.constant dense<0.000000e+00> : vector<8xf32>
    %125 = vector.multi_reduction <add>, %124, %cst_49 [1] : vector<8x8xf32> to vector<8xf32>
    %126 = vector.shape_cast %125 : vector<8xf32> to vector<8x1xf32>
    %127 = vector.broadcast %126 : vector<8x1xf32> to vector<8x8xf32>
    %128 = arith.divf %124, %127 : vector<8x8xf32>
    %cst_50 = arith.constant dense<0.000000e+00> : vector<8x16xf32>
    %129 = tpu.matmul %128, %116, %cst_50 {dimension_numbers = #tpu.dot_dimension_numbers<[1], [0], [0], [1], [0, 0, 1, 1], [], []>} : vector<8x8xf32>, vector<8x16xf32>, vector<8x16xf32> -> vector<8x16xf32>
    %130 = vector.extract_strided_slice %7 {offsets = [0, 112], sizes = [8, 16], strides = [1, 1]} : vector<8x128xf32> to vector<8x16xf32>
    %131 = vector.extract_strided_slice %12 {offsets = [0, 112], sizes = [8, 16], strides = [1, 1]} : vector<8x128xf32> to vector<8x16xf32>
    %132 = vector.extract_strided_slice %17 {offsets = [0, 112], sizes = [8, 16], strides = [1, 1]} : vector<8x128xf32> to vector<8x16xf32>
    %cst_51 = arith.constant dense<0.000000e+00> : vector<8x8xf32>
    %133 = tpu.matmul %130, %131, %cst_51 {dimension_numbers = #tpu.dot_dimension_numbers<[1], [1], [0], [0], [0, 0, 1, 0], [], []>} : vector<8x16xf32>, vector<8x16xf32>, vector<8x8xf32> -> vector<8x8xf32>
    %cst_52 = arith.constant 2.500000e-01 : f32
    %134 = vector.broadcast %cst_52 : f32 to vector<8x8xf32>
    %135 = arith.mulf %133, %134 : vector<8x8xf32>
    %cst_53 = arith.constant dense<0xFF800000> : vector<8xf32>
    %136 = vector.multi_reduction <maximumf>, %135, %cst_53 [1] : vector<8x8xf32> to vector<8xf32>
    %137 = vector.shape_cast %136 : vector<8xf32> to vector<8x1xf32>
    %138 = vector.broadcast %137 : vector<8x1xf32> to vector<8x8xf32>
    %139 = arith.subf %135, %138 : vector<8x8xf32>
    %140 = math.exp %139 : vector<8x8xf32>
    %cst_54 = arith.constant dense<0.000000e+00> : vector<8xf32>
    %141 = vector.multi_reduction <add>, %140, %cst_54 [1] : vector<8x8xf32> to vector<8xf32>
    %142 = vector.shape_cast %141 : vector<8xf32> to vector<8x1xf32>
    %143 = vector.broadcast %142 : vector<8x1xf32> to vector<8x8xf32>
    %144 = arith.divf %140, %143 : vector<8x8xf32>
    %cst_55 = arith.constant dense<0.000000e+00> : vector<8x16xf32>
    %145 = tpu.matmul %144, %132, %cst_55 {dimension_numbers = #tpu.dot_dimension_numbers<[1], [0], [0], [1], [0, 0, 1, 1], [], []>} : vector<8x8xf32>, vector<8x16xf32>, vector<8x16xf32> -> vector<8x16xf32>
    %146 = tpu.concatenate %33, %49, %65, %81, %97, %113, %129, %145 in 1 : vector<8x16xf32>, vector<8x16xf32>, vector<8x16xf32>, vector<8x16xf32>, vector<8x16xf32>, vector<8x16xf32>, vector<8x16xf32>, vector<8x16xf32> -> vector<8x128xf32>
    %147 = arith.truncf %146 : vector<8x128xf32> to vector<8x128xbf16>
    %c0_56 = arith.constant 0 : index
    %c0_57 = arith.constant 0 : index
    %148 = vector.load %arg8[%c0_56, %c0_57] : memref<128x128xbf16, #tpu.memory_space<vmem>>, vector<128x128xbf16>
    %cst_58 = arith.constant dense<0.000000e+00> : vector<8x128xf32>
    %149 = tpu.matmul %147, %148, %cst_58 {dimension_numbers = #tpu.dot_dimension_numbers<[1], [0], [0], [1], [0, 0, 1, 1], [], []>} : vector<8x128xbf16>, vector<128x128xbf16>, vector<8x128xf32> -> vector<8x128xf32>
    %c0_59 = arith.constant 0 : index
    %c0_60 = arith.constant 0 : index
    %150 = vector.load %arg9[%c0_59, %c0_60] : memref<1x128xf32, #tpu.memory_space<vmem>>, vector<1x128xf32>
    %151 = vector.broadcast %150 : vector<1x128xf32> to vector<8x128xf32>
    %152 = arith.addf %149, %151 : vector<8x128xf32>
    %153 = arith.addf %1, %152 : vector<8x128xf32>
    %c0_61 = arith.constant 0 : index
    %c0_62 = arith.constant 0 : index
    %154 = vector.load %arg10[%c0_61, %c0_62] : memref<1x128xf32, #tpu.memory_space<vmem>>, vector<1x128xf32>
    %c0_63 = arith.constant 0 : index
    %c0_64 = arith.constant 0 : index
    %155 = vector.load %arg11[%c0_63, %c0_64] : memref<1x128xf32, #tpu.memory_space<vmem>>, vector<1x128xf32>
    %cst_65 = arith.constant dense<0.000000e+00> : vector<8xf32>
    %156 = vector.multi_reduction <add>, %153, %cst_65 [1] : vector<8x128xf32> to vector<8xf32>
    %157 = vector.shape_cast %156 : vector<8xf32> to vector<8x1xf32>
    %cst_66 = arith.constant 1.280000e+02 : f32
    %158 = vector.broadcast %cst_66 : f32 to vector<8x1xf32>
    %159 = arith.divf %157, %158 : vector<8x1xf32>
    %160 = vector.broadcast %159 : vector<8x1xf32> to vector<8x128xf32>
    %161 = arith.subf %153, %160 : vector<8x128xf32>
    %162 = arith.mulf %161, %161 : vector<8x128xf32>
    %cst_67 = arith.constant dense<0.000000e+00> : vector<8xf32>
    %163 = vector.multi_reduction <add>, %162, %cst_67 [1] : vector<8x128xf32> to vector<8xf32>
    %164 = vector.shape_cast %163 : vector<8xf32> to vector<8x1xf32>
    %cst_68 = arith.constant 1.280000e+02 : f32
    %165 = vector.broadcast %cst_68 : f32 to vector<8x1xf32>
    %166 = arith.divf %164, %165 : vector<8x1xf32>
    %cst_69 = arith.constant 9.99999974E-6 : f32
    %167 = vector.broadcast %cst_69 : f32 to vector<8x1xf32>
    %168 = arith.addf %166, %167 : vector<8x1xf32>
    %169 = math.rsqrt %168 : vector<8x1xf32>
    %170 = vector.broadcast %169 : vector<8x1xf32> to vector<8x128xf32>
    %171 = arith.mulf %161, %170 : vector<8x128xf32>
    %172 = vector.broadcast %154 : vector<1x128xf32> to vector<8x128xf32>
    %173 = arith.mulf %171, %172 : vector<8x128xf32>
    %174 = vector.broadcast %155 : vector<1x128xf32> to vector<8x128xf32>
    %175 = arith.addf %173, %174 : vector<8x128xf32>
    %176 = arith.truncf %175 : vector<8x128xf32> to vector<8x128xbf16>
    %c0_70 = arith.constant 0 : index
    %c0_71 = arith.constant 0 : index
    %177 = vector.load %arg12[%c0_70, %c0_71] : memref<128x512xbf16, #tpu.memory_space<vmem>>, vector<128x512xbf16>
    %cst_72 = arith.constant dense<0.000000e+00> : vector<8x512xf32>
    %178 = tpu.matmul %176, %177, %cst_72 {dimension_numbers = #tpu.dot_dimension_numbers<[1], [0], [0], [1], [0, 0, 1, 1], [], []>} : vector<8x128xbf16>, vector<128x512xbf16>, vector<8x512xf32> -> vector<8x512xf32>
    %c0_73 = arith.constant 0 : index
    %c0_74 = arith.constant 0 : index
    %179 = vector.load %arg13[%c0_73, %c0_74] : memref<1x512xf32, #tpu.memory_space<vmem>>, vector<1x512xf32>
    %180 = vector.broadcast %179 : vector<1x512xf32> to vector<8x512xf32>
    %181 = arith.addf %178, %180 : vector<8x512xf32>
    %cst_75 = arith.constant 5.000000e-01 : f32
    %182 = vector.broadcast %cst_75 : f32 to vector<8x512xf32>
    %183 = arith.mulf %182, %181 : vector<8x512xf32>
    %cst_76 = arith.constant 4.471500e-02 : f32
    %184 = vector.broadcast %cst_76 : f32 to vector<8x512xf32>
    %185 = arith.mulf %184, %181 : vector<8x512xf32>
    %186 = arith.mulf %185, %181 : vector<8x512xf32>
    %187 = arith.mulf %186, %181 : vector<8x512xf32>
    %188 = arith.addf %181, %187 : vector<8x512xf32>
    %cst_77 = arith.constant 0.797884583 : f32
    %189 = vector.broadcast %cst_77 : f32 to vector<8x512xf32>
    %190 = arith.mulf %189, %188 : vector<8x512xf32>
    %191 = math.tanh %190 : vector<8x512xf32>
    %cst_78 = arith.constant 1.000000e+00 : f32
    %192 = vector.broadcast %cst_78 : f32 to vector<8x512xf32>
    %193 = arith.addf %192, %191 : vector<8x512xf32>
    %194 = arith.mulf %183, %193 : vector<8x512xf32>
    %195 = arith.truncf %194 : vector<8x512xf32> to vector<8x512xbf16>
    %c0_79 = arith.constant 0 : index
    %c0_80 = arith.constant 0 : index
    %196 = vector.load %arg14[%c0_79, %c0_80] : memref<512x128xbf16, #tpu.memory_space<vmem>>, vector<512x128xbf16>
    %cst_81 = arith.constant dense<0.000000e+00> : vector<8x128xf32>
    %197 = tpu.matmul %195, %196, %cst_81 {dimension_numbers = #tpu.dot_dimension_numbers<[1], [0], [0], [1], [0, 0, 1, 1], [], []>} : vector<8x512xbf16>, vector<512x128xbf16>, vector<8x128xf32> -> vector<8x128xf32>
    %c0_82 = arith.constant 0 : index
    %c0_83 = arith.constant 0 : index
    %198 = vector.load %arg15[%c0_82, %c0_83] : memref<1x128xf32, #tpu.memory_space<vmem>>, vector<1x128xf32>
    %199 = vector.broadcast %198 : vector<1x128xf32> to vector<8x128xf32>
    %200 = arith.addf %197, %199 : vector<8x128xf32>
    %201 = arith.addf %175, %200 : vector<8x128xf32>
    %c0_84 = arith.constant 0 : index
    %c0_85 = arith.constant 0 : index
    %202 = vector.load %arg16[%c0_84, %c0_85] : memref<1x128xf32, #tpu.memory_space<vmem>>, vector<1x128xf32>
    %c0_86 = arith.constant 0 : index
    %c0_87 = arith.constant 0 : index
    %203 = vector.load %arg17[%c0_86, %c0_87] : memref<1x128xf32, #tpu.memory_space<vmem>>, vector<1x128xf32>
    %cst_88 = arith.constant dense<0.000000e+00> : vector<8xf32>
    %204 = vector.multi_reduction <add>, %201, %cst_88 [1] : vector<8x128xf32> to vector<8xf32>
    %205 = vector.shape_cast %204 : vector<8xf32> to vector<8x1xf32>
    %cst_89 = arith.constant 1.280000e+02 : f32
    %206 = vector.broadcast %cst_89 : f32 to vector<8x1xf32>
    %207 = arith.divf %205, %206 : vector<8x1xf32>
    %208 = vector.broadcast %207 : vector<8x1xf32> to vector<8x128xf32>
    %209 = arith.subf %201, %208 : vector<8x128xf32>
    %210 = arith.mulf %209, %209 : vector<8x128xf32>
    %cst_90 = arith.constant dense<0.000000e+00> : vector<8xf32>
    %211 = vector.multi_reduction <add>, %210, %cst_90 [1] : vector<8x128xf32> to vector<8xf32>
    %212 = vector.shape_cast %211 : vector<8xf32> to vector<8x1xf32>
    %cst_91 = arith.constant 1.280000e+02 : f32
    %213 = vector.broadcast %cst_91 : f32 to vector<8x1xf32>
    %214 = arith.divf %212, %213 : vector<8x1xf32>
    %cst_92 = arith.constant 9.99999974E-6 : f32
    %215 = vector.broadcast %cst_92 : f32 to vector<8x1xf32>
    %216 = arith.addf %214, %215 : vector<8x1xf32>
    %217 = math.rsqrt %216 : vector<8x1xf32>
    %218 = vector.broadcast %217 : vector<8x1xf32> to vector<8x128xf32>
    %219 = arith.mulf %209, %218 : vector<8x128xf32>
    %220 = vector.broadcast %202 : vector<1x128xf32> to vector<8x128xf32>
    %221 = arith.mulf %219, %220 : vector<8x128xf32>
    %222 = vector.broadcast %203 : vector<1x128xf32> to vector<8x128xf32>
    %223 = arith.addf %221, %222 : vector<8x128xf32>
    %c0_93 = arith.constant 0 : index
    %c0_94 = arith.constant 0 : index
    %c0_95 = arith.constant 0 : index
    %224 = vector.load %arg18[%c0_93, %c0_94, %c0_95] : memref<1x8x128xf32, #tpu.memory_space<vmem>>, vector<1x8x128xf32>
    %225 = vector.shape_cast %224 : vector<1x8x128xf32> to vector<8x128xf32>
    %226 = vector.shape_cast %223 : vector<8x128xf32> to vector<1x8x128xf32>
    tpu.vector_store %arg18[%c0_93, %c0_94, %c0_95], %226 {strides = array<i32>} : memref<1x8x128xf32, #tpu.memory_space<vmem>>, vector<1x8x128xf32>,
    return
  }
  func.func @transform_0(%arg0: i32) -> (i32, i32, i32) {
    %c0_i32 = arith.constant 0 : i32
    %c0_i32_0 = arith.constant 0 : i32
    %c0_i32_1 = arith.constant 0 : i32
    return %arg0, %c0_i32, %c0_i32_0 : i32, i32, i32
  }
  func.func @transform_1(%arg0: i32) -> (i32, i32) {
    %c0_i32 = arith.constant 0 : i32
    %c0_i32_0 = arith.constant 0 : i32
    %c0_i32_1 = arith.constant 0 : i32
    return %c0_i32, %c0_i32_0 : i32, i32
  }
  func.func @transform_2(%arg0: i32) -> (i32, i32) {
    %c0_i32 = arith.constant 0 : i32
    %c0_i32_0 = arith.constant 0 : i32
    %c0_i32_1 = arith.constant 0 : i32
    return %c0_i32, %c0_i32_0 : i32, i32
  }
  func.func @transform_3(%arg0: i32) -> (i32, i32) {
    %c0_i32 = arith.constant 0 : i32
    %c0_i32_0 = arith.constant 0 : i32
    %c0_i32_1 = arith.constant 0 : i32
    return %c0_i32, %c0_i32_0 : i32, i32
  }
  func.func @transform_4(%arg0: i32) -> (i32, i32) {
    %c0_i32 = arith.constant 0 : i32
    %c0_i32_0 = arith.constant 0 : i32
    %c0_i32_1 = arith.constant 0 : i32
    return %c0_i32, %c0_i32_0 : i32, i32
  }
  func.func @transform_5(%arg0: i32) -> (i32, i32) {
    %c0_i32 = arith.constant 0 : i32
    %c0_i32_0 = arith.constant 0 : i32
    %c0_i32_1 = arith.constant 0 : i32
    return %c0_i32, %c0_i32_0 : i32, i32
  }
  func.func @transform_6(%arg0: i32) -> (i32, i32) {
    %c0_i32 = arith.constant 0 : i32
    %c0_i32_0 = arith.constant 0 : i32
    %c0_i32_1 = arith.constant 0 : i32
    return %c0_i32, %c0_i32_0 : i32, i32
  }
  func.func @transform_7(%arg0: i32) -> (i32, i32) {
    %c0_i32 = arith.constant 0 : i32
    %c0_i32_0 = arith.constant 0 : i32
    %c0_i32_1 = arith.constant 0 : i32
    return %c0_i32, %c0_i32_0 : i32, i32
  }
  func.func @transform_8(%arg0: i32) -> (i32, i32) {
    %c0_i32 = arith.constant 0 : i32
    %c0_i32_0 = arith.constant 0 : i32
    %c0_i32_1 = arith.constant 0 : i32
    return %c0_i32, %c0_i32_0 : i32, i32
  }
  func.func @transform_9(%arg0: i32) -> (i32, i32) {
    %c0_i32 = arith.constant 0 : i32
    %c0_i32_0 = arith.constant 0 : i32
    %c0_i32_1 = arith.constant 0 : i32
    return %c0_i32, %c0_i32_0 : i32, i32
  }
  func.func @transform_10(%arg0: i32) -> (i32, i32) {
    %c0_i32 = arith.constant 0 : i32
    %c0_i32_0 = arith.constant 0 : i32
    %c0_i32_1 = arith.constant 0 : i32
    return %c0_i32, %c0_i32_0 : i32, i32
  }
  func.func @transform_11(%arg0: i32) -> (i32, i32) {
    %c0_i32 = arith.constant 0 : i32
    %c0_i32_0 = arith.constant 0 : i32
    %c0_i32_1 = arith.constant 0 : i32
    return %c0_i32, %c0_i32_0 : i32, i32
  }
  func.func @transform_12(%arg0: i32) -> (i32, i32) {
    %c0_i32 = arith.constant 0 : i32
    %c0_i32_0 = arith.constant 0 : i32
    %c0_i32_1 = arith.constant 0 : i32
    return %c0_i32, %c0_i32_0 : i32, i32
  }
  func.func @transform_13(%arg0: i32) -> (i32, i32) {
    %c0_i32 = arith.constant 0 : i32
    %c0_i32_0 = arith.constant 0 : i32
    %c0_i32_1 = arith.constant 0 : i32
    return %c0_i32, %c0_i32_0 : i32, i32
  }
  func.func @transform_14(%arg0: i32) -> (i32, i32) {
    %c0_i32 = arith.constant 0 : i32
    %c0_i32_0 = arith.constant 0 : i32
    %c0_i32_1 = arith.constant 0 : i32
    return %c0_i32, %c0_i32_0 : i32, i32
  }
  func.func @transform_15(%arg0: i32) -> (i32, i32) {
    %c0_i32 = arith.constant 0 : i32
    %c0_i32_0 = arith.constant 0 : i32
    %c0_i32_1 = arith.constant 0 : i32
    return %c0_i32, %c0_i32_0 : i32, i32
  }
  func.func @transform_16(%arg0: i32) -> (i32, i32) {
    %c0_i32 = arith.constant 0 : i32
    %c0_i32_0 = arith.constant 0 : i32
    %c0_i32_1 = arith.constant 0 : i32
    return %c0_i32, %c0_i32_0 : i32, i32
  }
  func.func @transform_17(%arg0: i32) -> (i32, i32, i32) {
    %c0_i32 = arith.constant 0 : i32
    %c0_i32_0 = arith.constant 0 : i32
    %c0_i32_1 = arith.constant 0 : i32
    return %arg0, %c0_i32, %c0_i32_0 : i32, i32, i32
  }
}

</mosaic_0001>

<llo_original>
// kernel: difference_extractor_forward.1
$region0: #{difference_extractor_forward.1}
  #allocation0 [shape = 'u32[]', space=smem, size = 0x4, offset = 0x4, fixed_abs, tag = 'smem constant byte address 0x4 - core index']
  #allocation1 [shape = 'u32[144,128]{1,0:T(1,128)}', space=vmem, size = 0x12000, scoped, tag = 'internal scratch']
  %s0 = inlined_call_operand.vmem [shape: f32[2,8,128], index: 0, kind: input, shape index: {}]
  %s1 = inlined_call_operand.vmem [shape: bf16[128,128], index: 1, kind: input, shape index: {}]
  %s2 = inlined_call_operand.vmem [shape: bf16[128,128], index: 2, kind: input, shape index: {}]
  %s3 = inlined_call_operand.vmem [shape: bf16[128,128], index: 3, kind: input, shape index: {}]
  %s4 = inlined_call_operand.vmem [shape: f32[1,128], index: 4, kind: input, shape index: {}]
  %s5 = inlined_call_operand.vmem [shape: f32[1,128], index: 5, kind: input, shape index: {}]
  %s6 = inlined_call_operand.vmem [shape: f32[1,128], index: 6, kind: input, shape index: {}]
  %s7 = inlined_call_operand.vmem [shape: bf16[128,128], index: 7, kind: input, shape index: {}]
  %s8 = inlined_call_operand.vmem [shape: f32[1,128], index: 8, kind: input, shape index: {}]
  %s9 = inlined_call_operand.vmem [shape: f32[1,128], index: 9, kind: input, shape index: {}]
  %s10 = inlined_call_operand.vmem [shape: f32[1,128], index: 10, kind: input, shape index: {}]
  %s11 = inlined_call_operand.vmem [shape: bf16[128,512], index: 11, kind: input, shape index: {}]
  %s12 = inlined_call_operand.vmem [shape: f32[1,512], index: 12, kind: input, shape index: {}]
  %s13 = inlined_call_operand.vmem [shape: bf16[512,128], index: 13, kind: input, shape index: {}]
  %s14 = inlined_call_operand.vmem [shape: f32[1,128], index: 14, kind: input, shape index: {}]
  %s15 = inlined_call_operand.vmem [shape: f32[1,128], index: 15, kind: input, shape index: {}]
  %s16 = inlined_call_operand.vmem [shape: f32[1,128], index: 16, kind: input, shape index: {}]
  %s17 = inlined_call_operand.hbm [shape: f32[2,8,128], index: 17, kind: output, shape index: {}]
  %s18 = sld [smem:[#allocation0]]
  $region101: #{difference_extractor_forward.1} parent=0
    _
  %s20 = ssub.s32 1, %s18
  %s21 = scalar_select 0, %s20, %s18
  $region1: #{difference_extractor_forward.1} parent=0
    #allocation2 [shape = 'u8[8192]{0}', space=vmem, size = 0x2000, scoped, tag = 'output window, operand 0']
    #allocation3 [shape = 's32[2]{0}', space=sflag, size = 0x8, scoped, tag = 'scoped memory for difference_extractor_forward.1']
    %22 = vsyncpa [#allocation3], 0
    %s23 = scalar_lea.sflag [#allocation3], 1
    %24 = vsyncpa %s23, 0
    loop: start=0, step=1, limit=4
    $region2: #{difference_extractor_forward.1} parent=1 // loop_pre_header
      _
    $region3: #{difference_extractor_forward.1} parent=1 // loop_header
      %s26 = sphi 0, %s30
      %p27 = scmp.ge.s32.totalorder %s26, 4
      %s36 = sphi 0, %s38
      %s39 = sphi 0, %s36
      %s40 = sphi 0, %s39
      %s56 = sphi 0, %s40
      %s60 = sphi 0, %s60
      %s62 = sphi 0, %s60
      %s63 = sphi 0, %s62
      %s77 = sphi 0, %s63
      %s81 = sphi 0, %s81
      %s83 = sphi 0, %s81
      %s84 = sphi 0, %s83
      %s98 = sphi 0, %s84
      %s102 = sphi 0, %s102
      %s104 = sphi 0, %s102
      %s105 = sphi 0, %s104
      %s119 = sphi 0, %s105
      %s123 = sphi 0, %s123
      %s125 = sphi 0, %s123
      %s126 = sphi 0, %s125
      %s140 = sphi 0, %s126
      %s144 = sphi 0, %s144
      %s146 = sphi 0, %s144
      %s147 = sphi 0, %s146
      %s161 = sphi 0, %s147
      %s165 = sphi 0, %s165
      %s167 = sphi 0, %s165
      %s168 = sphi 0, %s167
      %s182 = sphi 0, %s168
      %s186 = sphi 0, %s186
      %s188 = sphi 0, %s186
      %s189 = sphi 0, %s188
      %s203 = sphi 0, %s189
      %s207 = sphi 0, %s207
      %s209 = sphi 0, %s207
      %s210 = sphi 0, %s209
      %s224 = sphi 0, %s210
      %s228 = sphi 0, %s228
      %s230 = sphi 0, %s228
      %s231 = sphi 0, %s230
      %s245 = sphi 0, %s231
      %s249 = sphi 0, %s249
      %s251 = sphi 0, %s249
      %s252 = sphi 0, %s251
      %s266 = sphi 0, %s252
      %s270 = sphi 0, %s270
      %s272 = sphi 0, %s270
      %s273 = sphi 0, %s272
      %s287 = sphi 0, %s273
      %s291 = sphi 0, %s291
      %s293 = sphi 0, %s291
      %s294 = sphi 0, %s293
      %s308 = sphi 0, %s294
      %s312 = sphi 0, %s312
      %s314 = sphi 0, %s312
      %s315 = sphi 0, %s314
      %s329 = sphi 0, %s315
      %s333 = sphi 0, %s333
      %s335 = sphi 0, %s333
      %s336 = sphi 0, %s335
      %s350 = sphi 0, %s336
      %s354 = sphi 0, %s354
      %s356 = sphi 0, %s354
      %s357 = sphi 0, %s356
      %s371 = sphi 0, %s357
      %s375 = sphi 0, %s375
      %s377 = sphi 0, %s375
      %s378 = sphi 0, %s377
      %s392 = sphi 0, %s378
      %s398 = sphi 0, %s400
      %s401 = sphi 0, %s398
      %s402 = sphi 0, %s401
      %s418 = sphi 0, %s402
    $region4: #{difference_extractor_forward.1} parent=1 // loop_header_branch
      %29 = sbr.rel (%p27) target = $region8
    $region5: #{difference_extractor_forward.1} parent=1 // loop_body
      %s31 = ssub.s32 %s26, 1
      %s32 = ssub.s32 %s26, 2
      %s33 = sadd.s32 %s26, 1
      %s34 = ssub.s32 %s26, %s33
      %p35 = scmp.eq.s32.totalorder %s34, 0
      %s37 = sadd.s32 %s36, 1
      %s38 = scalar_select %p35, %s36, %s37
      %p41 = pneg %p35
      %p42 = scmp.eq.s32.totalorder %s26, 1
      %p43 = por %p41, %p42
      %p44 = scmp.ne.s32.totalorder %s36, %s39
      %p45 = scmp.eq.s32.totalorder %s26, 0
      %p46 = por %p44, %p45
      %p47 = scmp.ne.s32.totalorder %s36, %s39
      %p48 = scmp.eq.s32.totalorder %s31, 1
      %p49 = por %p47, %p48
      %p50 = scmp.ne.s32.totalorder %s39, %s40
      %p51 = scmp.eq.s32.totalorder %s31, 0
      %p52 = por %p50, %p51
      %p53 = scmp.ne.s32.totalorder %s39, %s40
      %p54 = scmp.eq.s32.totalorder %s32, 1
      %p55 = por %p53, %p54
      %p57 = scmp.ne.s32.totalorder %s40, %s56
      %p58 = scmp.eq.s32.totalorder %s32, 0
      %p59 = por %p57, %p58
      %s61 = sadd.s32 %s60, 1
      %p64 = scmp.eq.s32.totalorder %s26, 1
      %p65 = scmp.ne.s32.totalorder %s60, %s62
      %p66 = scmp.eq.s32.totalorder %s26, 0
      %p67 = por %p65, %p66
      %p68 = scmp.ne.s32.totalorder %s60, %s62
      %p69 = scmp.eq.s32.totalorder %s31, 1
      %p70 = por %p68, %p69
      %p71 = scmp.ne.s32.totalorder %s62, %s63
      %p72 = scmp.eq.s32.totalorder %s31, 0
      %p73 = por %p71, %p72
      %p74 = scmp.ne.s32.totalorder %s62, %s63
      %p75 = scmp.eq.s32.totalorder %s32, 1
      %p76 = por %p74, %p75
      %p78 = scmp.ne.s32.totalorder %s63, %s77
      %p79 = scmp.eq.s32.totalorder %s32, 0
      %p80 = por %p78, %p79
      %s82 = sadd.s32 %s81, 1
      %p85 = scmp.eq.s32.totalorder %s26, 1
      %p86 = scmp.ne.s32.totalorder %s81, %s83
      %p87 = scmp.eq.s32.totalorder %s26, 0
      %p88 = por %p86, %p87
      %p89 = scmp.ne.s32.totalorder %s81, %s83
      %p90 = scmp.eq.s32.totalorder %s31, 1
      %p91 = por %p89, %p90
      %p92 = scmp.ne.s32.totalorder %s83, %s84
      %p93 = scmp.eq.s32.totalorder %s31, 0
      %p94 = por %p92, %p93
      %p95 = scmp.ne.s32.totalorder %s83, %s84
      %p96 = scmp.eq.s32.totalorder %s32, 1
      %p97 = por %p95, %p96
      %p99 = scmp.ne.s32.totalorder %s84, %s98
      %p100 = scmp.eq.s32.totalorder %s32, 0
      %p101 = por %p99, %p100
      %s103 = sadd.s32 %s102, 1
      %p106 = scmp.eq.s32.totalorder %s26, 1
      %p107 = scmp.ne.s32.totalorder %s102, %s104
      %p108 = scmp.eq.s32.totalorder %s26, 0
      %p109 = por %p107, %p108
      %p110 = scmp.ne.s32.totalorder %s102, %s104
      %p111 = scmp.eq.s32.totalorder %s31, 1
      %p112 = por %p110, %p111
      %p113 = scmp.ne.s32.totalorder %s104, %s105
      %p114 = scmp.eq.s32.totalorder %s31, 0
      %p115 = por %p113, %p114
      %p116 = scmp.ne.s32.totalorder %s104, %s105
      %p117 = scmp.eq.s32.totalorder %s32, 1
      %p118 = por %p116, %p117
      %p120 = scmp.ne.s32.totalorder %s105, %s119
      %p121 = scmp.eq.s32.totalorder %s32, 0
      %p122 = por %p120, %p121
      %s124 = sadd.s32 %s123, 1
      %p127 = scmp.eq.s32.totalorder %s26, 1
      %p128 = scmp.ne.s32.totalorder %s123, %s125
      %p129 = scmp.eq.s32.totalorder %s26, 0
      %p130 = por %p128, %p129
      %p131 = scmp.ne.s32.totalorder %s123, %s125
      %p132 = scmp.eq.s32.totalorder %s31, 1
      %p133 = por %p131, %p132
      %p134 = scmp.ne.s32.totalorder %s125, %s126
      %p135 = scmp.eq.s32.totalorder %s31, 0
      %p136 = por %p134, %p135
      %p137 = scmp.ne.s32.totalorder %s125, %s126
      %p138 = scmp.eq.s32.totalorder %s32, 1
      %p139 = por %p137, %p138
      %p141 = scmp.ne.s32.totalorder %s126, %s140
      %p142 = scmp.eq.s32.totalorder %s32, 0
      %p143 = por %p141, %p142
      %s145 = sadd.s32 %s144, 1
      %p148 = scmp.eq.s32.totalorder %s26, 1
      %p149 = scmp.ne.s32.totalorder %s144, %s146
      %p150 = scmp.eq.s32.totalorder %s26, 0
      %p151 = por %p149, %p150
      %p152 = scmp.ne.s32.totalorder %s144, %s146
      %p153 = scmp.eq.s32.totalorder %s31, 1
      %p154 = por %p152, %p153
      %p155 = scmp.ne.s32.totalorder %s146, %s147
      %p156 = scmp.eq.s32.totalorder %s31, 0
      %p157 = por %p155, %p156
      %p158 = scmp.ne.s32.totalorder %s146, %s147
      %p159 = scmp.eq.s32.totalorder %s32, 1
      %p160 = por %p158, %p159
      %p162 = scmp.ne.s32.totalorder %s147, %s161
      %p163 = scmp.eq.s32.totalorder %s32, 0
      %p164 = por %p162, %p163
      %s166 = sadd.s32 %s165, 1
      %p169 = scmp.eq.s32.totalorder %s26, 1
      %p170 = scmp.ne.s32.totalorder %s165, %s167
      %p171 = scmp.eq.s32.totalorder %s26, 0
      %p172 = por %p170, %p171
      %p173 = scmp.ne.s32.totalorder %s165, %s167
      %p174 = scmp.eq.s32.totalorder %s31, 1
      %p175 = por %p173, %p174
      %p176 = scmp.ne.s32.totalorder %s167, %s168
      %p177 = scmp.eq.s32.totalorder %s31, 0
      %p178 = por %p176, %p177
      %p179 = scmp.ne.s32.totalorder %s167, %s168
      %p180 = scmp.eq.s32.totalorder %s32, 1
      %p181 = por %p179, %p180
      %p183 = scmp.ne.s32.totalorder %s168, %s182
      %p184 = scmp.eq.s32.totalorder %s32, 0
      %p185 = por %p183, %p184
      %s187 = sadd.s32 %s186, 1
      %p190 = scmp.eq.s32.totalorder %s26, 1
      %p191 = scmp.ne.s32.totalorder %s186, %s188
      %p192 = scmp.eq.s32.totalorder %s26, 0
      %p193 = por %p191, %p192
      %p194 = scmp.ne.s32.totalorder %s186, %s188
      %p195 = scmp.eq.s32.totalorder %s31, 1
      %p196 = por %p194, %p195
      %p197 = scmp.ne.s32.totalorder %s188, %s189
      %p198 = scmp.eq.s32.totalorder %s31, 0
      %p199 = por %p197, %p198
      %p200 = scmp.ne.s32.totalorder %s188, %s189
      %p201 = scmp.eq.s32.totalorder %s32, 1
      %p202 = por %p200, %p201
      %p204 = scmp.ne.s32.totalorder %s189, %s203
      %p205 = scmp.eq.s32.totalorder %s32, 0
      %p206 = por %p204, %p205
      %s208 = sadd.s32 %s207, 1
      %p211 = scmp.eq.s32.totalorder %s26, 1
      %p212 = scmp.ne.s32.totalorder %s207, %s209
      %p213 = scmp.eq.s32.totalorder %s26, 0
      %p214 = por %p212, %p213
      %p215 = scmp.ne.s32.totalorder %s207, %s209
      %p216 = scmp.eq.s32.totalorder %s31, 1
      %p217 = por %p215, %p216
      %p218 = scmp.ne.s32.totalorder %s209, %s210
      %p219 = scmp.eq.s32.totalorder %s31, 0
      %p220 = por %p218, %p219
      %p221 = scmp.ne.s32.totalorder %s209, %s210
      %p222 = scmp.eq.s32.totalorder %s32, 1
      %p223 = por %p221, %p222
      %p225 = scmp.ne.s32.totalorder %s210, %s224
      %p226 = scmp.eq.s32.totalorder %s32, 0
      %p227 = por %p225, %p226
      %s229 = sadd.s32 %s228, 1
      %p232 = scmp.eq.s32.totalorder %s26, 1
      %p233 = scmp.ne.s32.totalorder %s228, %s230
      %p234 = scmp.eq.s32.totalorder %s26, 0
      %p235 = por %p233, %p234
      %p236 = scmp.ne.s32.totalorder %s228, %s230
      %p237 = scmp.eq.s32.totalorder %s31, 1
      %p238 = por %p236, %p237
      %p239 = scmp.ne.s32.totalorder %s230, %s231
      %p240 = scmp.eq.s32.totalorder %s31, 0
      %p241 = por %p239, %p240
      %p242 = scmp.ne.s32.totalorder %s230, %s231
      %p243 = scmp.eq.s32.totalorder %s32, 1
      %p244 = por %p242, %p243
      %p246 = scmp.ne.s32.totalorder %s231, %s245
      %p247 = scmp.eq.s32.totalorder %s32, 0
      %p248 = por %p246, %p247
      %s250 = sadd.s32 %s249, 1
      %p253 = scmp.eq.s32.totalorder %s26, 1
      %p254 = scmp.ne.s32.totalorder %s249, %s251
      %p255 = scmp.eq.s32.totalorder %s26, 0
      %p256 = por %p254, %p255
      %p257 = scmp.ne.s32.totalorder %s249, %s251
      %p258 = scmp.eq.s32.totalorder %s31, 1
      %p259 = por %p257, %p258
      %p260 = scmp.ne.s32.totalorder %s251, %s252
      %p261 = scmp.eq.s32.totalorder %s31, 0
      %p262 = por %p260, %p261
      %p263 = scmp.ne.s32.totalorder %s251, %s252
      %p264 = scmp.eq.s32.totalorder %s32, 1
      %p265 = por %p263, %p264
      %p267 = scmp.ne.s32.totalorder %s252, %s266
      %p268 = scmp.eq.s32.totalorder %s32, 0
      %p269 = por %p267, %p268
      %s271 = sadd.s32 %s270, 1
      %p274 = scmp.eq.s32.totalorder %s26, 1
      %p275 = scmp.ne.s32.totalorder %s270, %s272
      %p276 = scmp.eq.s32.totalorder %s26, 0
      %p277 = por %p275, %p276
      %p278 = scmp.ne.s32.totalorder %s270, %s272
      %p279 = scmp.eq.s32.totalorder %s31, 1
      %p280 = por %p278, %p279
      %p281 = scmp.ne.s32.totalorder %s272, %s273
      %p282 = scmp.eq.s32.totalorder %s31, 0
      %p283 = por %p281, %p282
      %p284 = scmp.ne.s32.totalorder %s272, %s273
      %p285 = scmp.eq.s32.totalorder %s32, 1
      %p286 = por %p284, %p285
      %p288 = scmp.ne.s32.totalorder %s273, %s287
      %p289 = scmp.eq.s32.totalorder %s32, 0
      %p290 = por %p288, %p289
      %s292 = sadd.s32 %s291, 1
      %p295 = scmp.eq.s32.totalorder %s26, 1
      %p296 = scmp.ne.s32.totalorder %s291, %s293
      %p297 = scmp.eq.s32.totalorder %s26, 0
      %p298 = por %p296, %p297
      %p299 = scmp.ne.s32.totalorder %s291, %s293
      %p300 = scmp.eq.s32.totalorder %s31, 1
      %p301 = por %p299, %p300
      %p302 = scmp.ne.s32.totalorder %s293, %s294
      %p303 = scmp.eq.s32.totalorder %s31, 0
      %p304 = por %p302, %p303
      %p305 = scmp.ne.s32.totalorder %s293, %s294
      %p306 = scmp.eq.s32.totalorder %s32, 1
      %p307 = por %p305, %p306
      %p309 = scmp.ne.s32.totalorder %s294, %s308
      %p310 = scmp.eq.s32.totalorder %s32, 0
      %p311 = por %p309, %p310
      %s313 = sadd.s32 %s312, 1
      %p316 = scmp.eq.s32.totalorder %s26, 1
      %p317 = scmp.ne.s32.totalorder %s312, %s314
      %p318 = scmp.eq.s32.totalorder %s26, 0
      %p319 = por %p317, %p318
      %p320 = scmp.ne.s32.totalorder %s312, %s314
      %p321 = scmp.eq.s32.totalorder %s31, 1
      %p322 = por %p320, %p321
      %p323 = scmp.ne.s32.totalorder %s314, %s315
      %p324 = scmp.eq.s32.totalorder %s31, 0
      %p325 = por %p323, %p324
      %p326 = scmp.ne.s32.totalorder %s314, %s315
      %p327 = scmp.eq.s32.totalorder %s32, 1
      %p328 = por %p326, %p327
      %p330 = scmp.ne.s32.totalorder %s315, %s329
      %p331 = scmp.eq.s32.totalorder %s32, 0
      %p332 = por %p330, %p331
      %s334 = sadd.s32 %s333, 1
      %p337 = scmp.eq.s32.totalorder %s26, 1
      %p338 = scmp.ne.s32.totalorder %s333, %s335
      %p339 = scmp.eq.s32.totalorder %s26, 0
      %p340 = por %p338, %p339
      %p341 = scmp.ne.s32.totalorder %s333, %s335
      %p342 = scmp.eq.s32.totalorder %s31, 1
      %p343 = por %p341, %p342
      %p344 = scmp.ne.s32.totalorder %s335, %s336
      %p345 = scmp.eq.s32.totalorder %s31, 0
      %p346 = por %p344, %p345
      %p347 = scmp.ne.s32.totalorder %s335, %s336
      %p348 = scmp.eq.s32.totalorder %s32, 1
      %p349 = por %p347, %p348
      %p351 = scmp.ne.s32.totalorder %s336, %s350
      %p352 = scmp.eq.s32.totalorder %s32, 0
      %p353 = por %p351, %p352
      %s355 = sadd.s32 %s354, 1
      %p358 = scmp.eq.s32.totalorder %s26, 1
      %p359 = scmp.ne.s32.totalorder %s354, %s356
      %p360 = scmp.eq.s32.totalorder %s26, 0
      %p361 = por %p359, %p360
      %p362 = scmp.ne.s32.totalorder %s354, %s356
      %p363 = scmp.eq.s32.totalorder %s31, 1
      %p364 = por %p362, %p363
      %p365 = scmp.ne.s32.totalorder %s356, %s357
      %p366 = scmp.eq.s32.totalorder %s31, 0
      %p367 = por %p365, %p366
      %p368 = scmp.ne.s32.totalorder %s356, %s357
      %p369 = scmp.eq.s32.totalorder %s32, 1
      %p370 = por %p368, %p369
      %p372 = scmp.ne.s32.totalorder %s357, %s371
      %p373 = scmp.eq.s32.totalorder %s32, 0
      %p374 = por %p372, %p373
      %s376 = sadd.s32 %s375, 1
      %p379 = scmp.eq.s32.totalorder %s26, 1
      %p380 = scmp.ne.s32.totalorder %s375, %s377
      %p381 = scmp.eq.s32.totalorder %s26, 0
      %p382 = por %p380, %p381
      %p383 = scmp.ne.s32.totalorder %s375, %s377
      %p384 = scmp.eq.s32.totalorder %s31, 1
      %p385 = por %p383, %p384
      %p386 = scmp.ne.s32.totalorder %s377, %s378
      %p387 = scmp.eq.s32.totalorder %s31, 0
      %p388 = por %p386, %p387
      %p389 = scmp.ne.s32.totalorder %s377, %s378
      %p390 = scmp.eq.s32.totalorder %s32, 1
      %p391 = por %p389, %p390
      %p393 = scmp.ne.s32.totalorder %s378, %s392
      %p394 = scmp.eq.s32.totalorder %s32, 0
      %p395 = por %p393, %p394
      %s396 = ssub.s32 %s26, %s33
      %p397 = scmp.eq.s32.totalorder %s396, 0
      %s399 = sadd.s32 %s398, 1
      %s400 = scalar_select %p397, %s398, %s399
      %p403 = pneg %p397
      %p404 = scmp.eq.s32.totalorder %s26, 1
      %p405 = por %p403, %p404
      %p406 = scmp.ne.s32.totalorder %s398, %s401
      %p407 = scmp.eq.s32.totalorder %s26, 0
      %p408 = por %p406, %p407
      %p409 = scmp.ne.s32.totalorder %s398, %s401
      %p410 = scmp.eq.s32.totalorder %s31, 1
      %p411 = por %p409, %p410
      %p412 = scmp.ne.s32.totalorder %s401, %s402
      %p413 = scmp.eq.s32.totalorder %s31, 0
      %p414 = por %p412, %p413
      %p415 = scmp.ne.s32.totalorder %s401, %s402
      %p416 = scmp.eq.s32.totalorder %s32, 1
      %p417 = por %p415, %p416
      %p419 = scmp.ne.s32.totalorder %s402, %s418
      %p420 = scmp.eq.s32.totalorder %s32, 0
      %p421 = por %p419, %p420
      %p422 = scmp.le.s32.totalorder 1, %s26
      %p423 = scmp.lt.s32.totalorder %s26, 3
      %p424 = pnand %p422, %p423
      %p425 = pneg %p424
      // Predicated region
      $region9: #{difference_extractor_forward.1} parent=5 // pred_check
        _
      $region10: #{difference_extractor_forward.1} parent=5 // pred_check_branch
        %427 = sbr.rel (%p424) target = $region12
      $region11: #{difference_extractor_forward.1} parent=5 // pred_region
        %s428 = ssub.s32 %s26, 1
        // Predicated region
        $region13: #{difference_extractor_forward.1} parent=11 // pred_check
          %p429 = pneg %p73
        $region14: #{difference_extractor_forward.1} parent=11 // pred_check_branch
          %431 = sbr.rel (%p429) target = $region16
        $region15: #{difference_extractor_forward.1} parent=11 // pred_region
          _
        $region16: #{difference_extractor_forward.1} parent=11 // pred_fallthru
          _
        // Predicated region
        $region17: #{difference_extractor_forward.1} parent=11 // pred_check
          %p432 = pneg %p94
        $region18: #{difference_extractor_forward.1} parent=11 // pred_check_branch
          %434 = sbr.rel (%p432) target = $region20
        $region19: #{difference_extractor_forward.1} parent=11 // pred_region
          _
        $region20: #{difference_extractor_forward.1} parent=11 // pred_fallthru
          _
        // Predicated region
        $region21: #{difference_extractor_forward.1} parent=11 // pred_check
          %p435 = pneg %p115
        $region22: #{difference_extractor_forward.1} parent=11 // pred_check_branch
          %437 = sbr.rel (%p435) target = $region24
        $region23: #{difference_extractor_forward.1} parent=11 // pred_region
          _
        $region24: #{difference_extractor_forward.1} parent=11 // pred_fallthru
          _
        // Predicated region
        $region25: #{difference_extractor_forward.1} parent=11 // pred_check
          %p438 = pneg %p136
        $region26: #{difference_extractor_forward.1} parent=11 // pred_check_branch
          %440 = sbr.rel (%p438) target = $region28
        $region27: #{difference_extractor_forward.1} parent=11 // pred_region
          _
        $region28: #{difference_extractor_forward.1} parent=11 // pred_fallthru
          _
        // Predicated region
        $region29: #{difference_extractor_forward.1} parent=11 // pred_check
          %p441 = pneg %p157
        $region30: #{difference_extractor_forward.1} parent=11 // pred_check_branch
          %443 = sbr.rel (%p441) target = $region32
        $region31: #{difference_extractor_forward.1} parent=11 // pred_region
          _
        $region32: #{difference_extractor_forward.1} parent=11 // pred_fallthru
          _
        // Predicated region
        $region33: #{difference_extractor_forward.1} parent=11 // pred_check
          %p444 = pneg %p178
        $region34: #{difference_extractor_forward.1} parent=11 // pred_check_branch
          %446 = sbr.rel (%p444) target = $region36
        $region35: #{difference_extractor_forward.1} parent=11 // pred_region
          _
        $region36: #{difference_extractor_forward.1} parent=11 // pred_fallthru
          _
        // Predicated region
        $region37: #{difference_extractor_forward.1} parent=11 // pred_check
          %p447 = pneg %p199
        $region38: #{difference_extractor_forward.1} parent=11 // pred_check_branch
          %449 = sbr.rel (%p447) target = $region40
        $region39: #{difference_extractor_forward.1} parent=11 // pred_region
          _
        $region40: #{difference_extractor_forward.1} parent=11 // pred_fallthru
          _
        // Predicated region
        $region41: #{difference_extractor_forward.1} parent=11 // pred_check
          %p450 = pneg %p220
        $region42: #{difference_extractor_forward.1} parent=11 // pred_check_branch
          %452 = sbr.rel (%p450) target = $region44
        $region43: #{difference_extractor_forward.1} parent=11 // pred_region
          _
        $region44: #{difference_extractor_forward.1} parent=11 // pred_fallthru
          _
        // Predicated region
        $region45: #{difference_extractor_forward.1} parent=11 // pred_check
          %p453 = pneg %p241
        $region46: #{difference_extractor_forward.1} parent=11 // pred_check_branch
          %455 = sbr.rel (%p453) target = $region48
        $region47: #{difference_extractor_forward.1} parent=11 // pred_region
          _
        $region48: #{difference_extractor_forward.1} parent=11 // pred_fallthru
          _
        // Predicated region
        $region49: #{difference_extractor_forward.1} parent=11 // pred_check
          %p456 = pneg %p262
        $region50: #{difference_extractor_forward.1} parent=11 // pred_check_branch
          %458 = sbr.rel (%p456) target = $region52
        $region51: #{difference_extractor_forward.1} parent=11 // pred_region
          _
        $region52: #{difference_extractor_forward.1} parent=11 // pred_fallthru
          _
        // Predicated region
        $region53: #{difference_extractor_forward.1} parent=11 // pred_check
          %p459 = pneg %p283
        $region54: #{difference_extractor_forward.1} parent=11 // pred_check_branch
          %461 = sbr.rel (%p459) target = $region56
        $region55: #{difference_extractor_forward.1} parent=11 // pred_region
          _
        $region56: #{difference_extractor_forward.1} parent=11 // pred_fallthru
          _
        // Predicated region
        $region57: #{difference_extractor_forward.1} parent=11 // pred_check
          %p462 = pneg %p304
        $region58: #{difference_extractor_forward.1} parent=11 // pred_check_branch
          %464 = sbr.rel (%p462) target = $region60
        $region59: #{difference_extractor_forward.1} parent=11 // pred_region
          _
        $region60: #{difference_extractor_forward.1} parent=11 // pred_fallthru
          _
        // Predicated region
        $region61: #{difference_extractor_forward.1} parent=11 // pred_check
          %p465 = pneg %p325
        $region62: #{difference_extractor_forward.1} parent=11 // pred_check_branch
          %467 = sbr.rel (%p465) target = $region64
        $region63: #{difference_extractor_forward.1} parent=11 // pred_region
          _
        $region64: #{difference_extractor_forward.1} parent=11 // pred_fallthru
          _
        // Predicated region
        $region65: #{difference_extractor_forward.1} parent=11 // pred_check
          %p468 = pneg %p346
        $region66: #{difference_extractor_forward.1} parent=11 // pred_check_branch
          %470 = sbr.rel (%p468) target = $region68
        $region67: #{difference_extractor_forward.1} parent=11 // pred_region
          _
        $region68: #{difference_extractor_forward.1} parent=11 // pred_fallthru
          _
        // Predicated region
        $region69: #{difference_extractor_forward.1} parent=11 // pred_check
          %p471 = pneg %p367
        $region70: #{difference_extractor_forward.1} parent=11 // pred_check_branch
          %473 = sbr.rel (%p471) target = $region72
        $region71: #{difference_extractor_forward.1} parent=11 // pred_region
          _
        $region72: #{difference_extractor_forward.1} parent=11 // pred_fallthru
          _
        // Predicated region
        $region73: #{difference_extractor_forward.1} parent=11 // pred_check
          %p474 = pneg %p388
        $region74: #{difference_extractor_forward.1} parent=11 // pred_check_branch
          %476 = sbr.rel (%p474) target = $region76
        $region75: #{difference_extractor_forward.1} parent=11 // pred_region
          _
        $region76: #{difference_extractor_forward.1} parent=11 // pred_fallthru
          _
      $region12: #{difference_extractor_forward.1} parent=5 // pred_fallthru
        _
      %p477 = scmp.lt.s32.totalorder %s26, 2
      // Predicated region
      $region77: #{difference_extractor_forward.1} parent=5 // pred_check
        %p478 = pneg %p477
      $region78: #{difference_extractor_forward.1} parent=5 // pred_check_branch
        %480 = sbr.rel (%p478) target = $region80
      $region79: #{difference_extractor_forward.1} parent=5 // pred_region
        // Predicated region
        $region81: #{difference_extractor_forward.1} parent=79 // pred_check
          %p481 = pneg %p46
        $region82: #{difference_extractor_forward.1} parent=79 // pred_check_branch
          %483 = sbr.rel (%p481) target = $region84
        $region83: #{difference_extractor_forward.1} parent=79 // pred_region
          %p484 = scmp.lt.s32.totalorder %s26, 1
          %s485 = scalar_select %p484, %s26, 1
          %s486 = smul.addr %s485, 8
          %s487 = scalar_lea.vmem %s0, %s486
        $region84: #{difference_extractor_forward.1} parent=79 // pred_fallthru
          _
      $region80: #{difference_extractor_forward.1} parent=5 // pred_fallthru
        _
      %p488 = scmp.le.s32.totalorder 1, %s26
      %p489 = scmp.lt.s32.totalorder %s26, 3
      %p490 = pnand %p488, %p489
      %p491 = pneg %p490
      // Predicated region
      $region85: #{difference_extractor_forward.1} parent=5 // pred_check
        _
      $region86: #{difference_extractor_forward.1} parent=5 // pred_check_branch
        %493 = sbr.rel (%p490) target = $region88
      $region87: #{difference_extractor_forward.1} parent=5 // pred_region
        %s494 = ssub.s32 %s26, 1
        %p495 = scmp.lt.s32.totalorder %s31, 1
        %s496 = scalar_select %p495, %s31, 1
        %s497 = smul.addr %s496, 8
        %s498 = scalar_lea.vmem %s0, %s497
        %p499 = pneg %p52
        %p500 = pneg %p49
        %p501 = pneg %p73
        %p502 = pneg %p70
        %p503 = pneg %p94
        %p504 = pneg %p91
        %p505 = pneg %p115
        %p506 = pneg %p112
        %p507 = pneg %p136
        %p508 = pneg %p133
        %p509 = pneg %p157
        %p510 = pneg %p154
        %p511 = pneg %p178
        %p512 = pneg %p175
        %p513 = pneg %p199
        %p514 = pneg %p196
        %p515 = pneg %p220
        %p516 = pneg %p217
        %p517 = pneg %p241
        %p518 = pneg %p238
        %p519 = pneg %p262
        %p520 = pneg %p259
        %p521 = pneg %p283
        %p522 = pneg %p280
        %p523 = pneg %p304
        %p524 = pneg %p301
        %p525 = pneg %p325
        %p526 = pneg %p322
        %p527 = pneg %p346
        %p528 = pneg %p343
        %p529 = pneg %p367
        %p530 = pneg %p364
        %p531 = pneg %p388
        %p532 = pneg %p385
        %p533 = pneg %p414
        %p534 = pneg %p411
        %s535 = sand.u32 %s401, 1
        %s536 = scalar_lea.sflag [#allocation3], %s535
        %s537 = sand.u32 %s401, 1
        %s538 = smul.addr %s537, 8
        %s539 = scalar_lea.vmem [#allocation2], %s538
        %p540 = scmp.lt.s32.totalorder %s31, 1
        %s541 = scalar_select %p540, %s31, 1
        %s542 = smul.addr %s541, 8
        %s543 = scalar_lea.vmem %s0, %s542
        %v545 = vld [vmem:[%s543] sm:$0xff]
        %v546 = vpack.c.bf16 %v545, %v545
        %v547 = vld [vmem:[%s1] sm:$0xf]
        %v548 = vld [vmem:[%s1 + $0x4] sm:$0xf]
        %v549 = vld [vmem:[%s1 + $0x8] sm:$0xf]
        %v550 = vld [vmem:[%s1 + $0xc] sm:$0xf]
        %v551 = vld [vmem:[%s1 + $0x10] sm:$0xf]
        %v552 = vld [vmem:[%s1 + $0x14] sm:$0xf]
        %v553 = vld [vmem:[%s1 + $0x18] sm:$0xf]
        %v554 = vld [vmem:[%s1 + $0x1c] sm:$0xf]
        %v555 = vld [vmem:[%s1 + $0x20] sm:$0xf]
        %v556 = vld [vmem:[%s1 + $0x24] sm:$0xf]
        %v557 = vld [vmem:[%s1 + $0x28] sm:$0xf]
        %v558 = vld [vmem:[%s1 + $0x2c] sm:$0xf]
        %v559 = vld [vmem:[%s1 + $0x30] sm:$0xf]
        %v560 = vld [vmem:[%s1 + $0x34] sm:$0xf]
        %v561 = vld [vmem:[%s1 + $0x38] sm:$0xf]
        %v562 = vld [vmem:[%s1 + $0x3c] sm:$0xf]
        %v563 = vld [vmem:[%s4] sm:$0x1]
        %v565 = vlaneseq
        %v566 = vshrl.u32 %v565, 7
        %v567 = vsub.s32 0, %v566
        %v568 = vrot.slane %v563, %v567
        %v586 = vunpack.c.l.b16 %v547
        %v587 = vunpack.c.l.b16 %v548
        %v588 = vunpack.c.l.b16 %v549
        %v589 = vunpack.c.l.b16 %v550
        %v590 = vunpack.c.l.b16 %v551
        %v591 = vunpack.c.l.b16 %v552
        %v592 = vunpack.c.l.b16 %v553
        %v593 = vunpack.c.l.b16 %v554
        %v594 = vunpack.c.l.b16 %v555
        %v595 = vunpack.c.l.b16 %v556
        %v596 = vunpack.c.l.b16 %v557
        %v597 = vunpack.c.l.b16 %v558
        %v598 = vunpack.c.l.b16 %v559
        %v599 = vunpack.c.l.b16 %v560
        %v600 = vunpack.c.l.b16 %v561
        %v601 = vunpack.c.l.b16 %v562
        %v602 = vpack.c.b16 %v587, %v586
        %v603 = vpack.c.b16 %v589, %v588
        %v604 = vpack.c.b16 %v591, %v590
        %v605 = vpack.c.b16 %v593, %v592
        %v606 = vpack.c.b16 %v595, %v594
        %v607 = vpack.c.b16 %v597, %v596
        %v608 = vpack.c.b16 %v599, %v598
        %v609 = vpack.c.b16 %v601, %v600
        %618 = vmatprep.subr.bf16.mxu0 0
        %619 = vmatpush1.bf16.msra.mxu0 %v609
        %620 = vmatprep.subr.bf16.mxu0 0
        %621 = vmatpush1.bf16.msra.mxu0 %v608
        %622 = vmatprep.subr.bf16.mxu0 0
        %623 = vmatpush1.bf16.msra.mxu0 %v607
        %624 = vmatprep.subr.bf16.mxu0 0
        %625 = vmatpush1.bf16.msra.mxu0 %v606
        %626 = vmatprep.subr.bf16.mxu0 0
        %627 = vmatpush1.bf16.msra.mxu0 %v605
        %628 = vmatprep.subr.bf16.mxu0 0
        %629 = vmatpush1.bf16.msra.mxu0 %v604
        %630 = vmatprep.subr.bf16.mxu0 0
        %631 = vmatpush1.bf16.msra.mxu0 %v603
        %632 = vmatprep.subr.bf16.mxu0 0
        %633 = vmatpush1.bf16.msra.mxu0 %v602
        %634 = vmatprep.subr.bf16.mxu0 0
        %635 = vmatpush2.bf16.msra.mxu0 0
        %636 = vmatprep.subr.bf16.mxu0 0
        %637 = vmatpush2.bf16.msra.mxu0 0
        %638 = vmatprep.subr.bf16.mxu0 0
        %639 = vmatpush2.bf16.msra.mxu0 0
        %640 = vmatprep.subr.bf16.mxu0 0
        %641 = vmatpush2.bf16.msra.mxu0 0
        %642 = vmatprep.subr.bf16.mxu0 0
        %643 = vmatpush2.bf16.msra.mxu0 0
        %644 = vmatprep.subr.bf16.mxu0 0
        %645 = vmatpush2.bf16.msra.mxu0 0
        %646 = vmatprep.subr.bf16.mxu0 0
        %647 = vmatpush2.bf16.msra.mxu0 0
        %648 = vmatprep.subr.bf16.mxu0 0
        %649 = vmatpush2.bf16.msra.mxu0 0
        %650 = vmatprep.mubr.bf16.mxu0 0
        %651 = vmatmul.mubr.bf16.gmra.mxu0 %v546
        %v652 = vpop.f32.mrf.mxu0
        %v653 = vadd.f32 %v568, %v652
        %v654 = vpop.f32.mrf.mxu0
        %v655 = vpop.f32.mrf.mxu0
        %v656 = vpop.f32.mrf.mxu0
        %657 = vdwg.mxu0
        %v658 = vld [vmem:[%s2] sm:$0xf]
        %v659 = vld [vmem:[%s2 + $0x4] sm:$0xf]
        %v660 = vld [vmem:[%s2 + $0x8] sm:$0xf]
        %v661 = vld [vmem:[%s2 + $0xc] sm:$0xf]
        %v662 = vld [vmem:[%s2 + $0x10] sm:$0xf]
        %v663 = vld [vmem:[%s2 + $0x14] sm:$0xf]
        %v664 = vld [vmem:[%s2 + $0x18] sm:$0xf]
        %v665 = vld [vmem:[%s2 + $0x1c] sm:$0xf]
        %v666 = vld [vmem:[%s2 + $0x20] sm:$0xf]
        %v667 = vld [vmem:[%s2 + $0x24] sm:$0xf]
        %v668 = vld [vmem:[%s2 + $0x28] sm:$0xf]
        %v669 = vld [vmem:[%s2 + $0x2c] sm:$0xf]
        %v670 = vld [vmem:[%s2 + $0x30] sm:$0xf]
        %v671 = vld [vmem:[%s2 + $0x34] sm:$0xf]
        %v672 = vld [vmem:[%s2 + $0x38] sm:$0xf]
        %v673 = vld [vmem:[%s2 + $0x3c] sm:$0xf]
        %v674 = vld [vmem:[%s5] sm:$0x1]
        %v676 = vlaneseq
        %v677 = vshrl.u32 %v676, 7
        %v678 = vsub.s32 0, %v677
        %v679 = vrot.slane %v674, %v678
        %v697 = vunpack.c.l.b16 %v658
        %v698 = vunpack.c.l.b16 %v659
        %v699 = vunpack.c.l.b16 %v660
        %v700 = vunpack.c.l.b16 %v661
        %v701 = vunpack.c.l.b16 %v662
        %v702 = vunpack.c.l.b16 %v663
        %v703 = vunpack.c.l.b16 %v664
        %v704 = vunpack.c.l.b16 %v665
        %v705 = vunpack.c.l.b16 %v666
        %v706 = vunpack.c.l.b16 %v667
        %v707 = vunpack.c.l.b16 %v668
        %v708 = vunpack.c.l.b16 %v669
        %v709 = vunpack.c.l.b16 %v670
        %v710 = vunpack.c.l.b16 %v671
        %v711 = vunpack.c.l.b16 %v672
        %v712 = vunpack.c.l.b16 %v673
        %v713 = vpack.c.b16 %v698, %v697
        %v714 = vpack.c.b16 %v700, %v699
        %v715 = vpack.c.b16 %v702, %v701
        %v716 = vpack.c.b16 %v704, %v703
        %v717 = vpack.c.b16 %v706, %v705
        %v718 = vpack.c.b16 %v708, %v707
        %v719 = vpack.c.b16 %v710, %v709
        %v720 = vpack.c.b16 %v712, %v711
        %729 = vmatprep.subr.bf16.mxu0 0
        %730 = vmatpush1.bf16.msra.mxu0 %v720
        %731 = vmatprep.subr.bf16.mxu0 0
        %732 = vmatpush1.bf16.msra.mxu0 %v719
        %733 = vmatprep.subr.bf16.mxu0 0
        %734 = vmatpush1.bf16.msra.mxu0 %v718
        %735 = vmatprep.subr.bf16.mxu0 0
        %736 = vmatpush1.bf16.msra.mxu0 %v717
        %737 = vmatprep.subr.bf16.mxu0 0
        %738 = vmatpush1.bf16.msra.mxu0 %v716
        %739 = vmatprep.subr.bf16.mxu0 0
        %740 = vmatpush1.bf16.msra.mxu0 %v715
        %741 = vmatprep.subr.bf16.mxu0 0
        %742 = vmatpush1.bf16.msra.mxu0 %v714
        %743 = vmatprep.subr.bf16.mxu0 0
        %744 = vmatpush1.bf16.msra.mxu0 %v713
        %745 = vmatprep.subr.bf16.mxu0 0
        %746 = vmatpush2.bf16.msra.mxu0 0
        %747 = vmatprep.subr.bf16.mxu0 0
        %748 = vmatpush2.bf16.msra.mxu0 0
        %749 = vmatprep.subr.bf16.mxu0 0
        %750 = vmatpush2.bf16.msra.mxu0 0
        %751 = vmatprep.subr.bf16.mxu0 0
        %752 = vmatpush2.bf16.msra.mxu0 0
        %753 = vmatprep.subr.bf16.mxu0 0
        %754 = vmatpush2.bf16.msra.mxu0 0
        %755 = vmatprep.subr.bf16.mxu0 0
        %756 = vmatpush2.bf16.msra.mxu0 0
        %757 = vmatprep.subr.bf16.mxu0 0
        %758 = vmatpush2.bf16.msra.mxu0 0
        %759 = vmatprep.subr.bf16.mxu0 0
        %760 = vmatpush2.bf16.msra.mxu0 0
        %761 = vmatprep.mubr.bf16.mxu0 0
        %762 = vmatmul.mubr.bf16.gmra.mxu0 %v546
        %v763 = vpop.f32.mrf.mxu0
        %v764 = vadd.f32 %v679, %v763
        %v765 = vpop.f32.mrf.mxu0
        %v766 = vpop.f32.mrf.mxu0
        %v767 = vpop.f32.mrf.mxu0
        %768 = vdwg.mxu0
        %v769 = vld [vmem:[%s3] sm:$0xf]
        %v770 = vld [vmem:[%s3 + $0x4] sm:$0xf]
        %v771 = vld [vmem:[%s3 + $0x8] sm:$0xf]
        %v772 = vld [vmem:[%s3 + $0xc] sm:$0xf]
        %v773 = vld [vmem:[%s3 + $0x10] sm:$0xf]
        %v774 = vld [vmem:[%s3 + $0x14] sm:$0xf]
        %v775 = vld [vmem:[%s3 + $0x18] sm:$0xf]
        %v776 = vld [vmem:[%s3 + $0x1c] sm:$0xf]
        %v777 = vld [vmem:[%s3 + $0x20] sm:$0xf]
        %v778 = vld [vmem:[%s3 + $0x24] sm:$0xf]
        %v779 = vld [vmem:[%s3 + $0x28] sm:$0xf]
        %v780 = vld [vmem:[%s3 + $0x2c] sm:$0xf]
        %v781 = vld [vmem:[%s3 + $0x30] sm:$0xf]
        %v782 = vld [vmem:[%s3 + $0x34] sm:$0xf]
        %v783 = vld [vmem:[%s3 + $0x38] sm:$0xf]
        %v784 = vld [vmem:[%s3 + $0x3c] sm:$0xf]
        %v785 = vld [vmem:[%s6] sm:$0x1]
        %v787 = vlaneseq
        %v788 = vshrl.u32 %v787, 7
        %v789 = vsub.s32 0, %v788
        %v790 = vrot.slane %v785, %v789
        %v808 = vunpack.c.l.b16 %v769
        %v809 = vunpack.c.l.b16 %v770
        %v810 = vunpack.c.l.b16 %v771
        %v811 = vunpack.c.l.b16 %v772
        %v812 = vunpack.c.l.b16 %v773
        %v813 = vunpack.c.l.b16 %v774
        %v814 = vunpack.c.l.b16 %v775
        %v815 = vunpack.c.l.b16 %v776
        %v816 = vunpack.c.l.b16 %v777
        %v817 = vunpack.c.l.b16 %v778
        %v818 = vunpack.c.l.b16 %v779
        %v819 = vunpack.c.l.b16 %v780
        %v820 = vunpack.c.l.b16 %v781
        %v821 = vunpack.c.l.b16 %v782
        %v822 = vunpack.c.l.b16 %v783
        %v823 = vunpack.c.l.b16 %v784
        %v824 = vpack.c.b16 %v809, %v808
        %v825 = vpack.c.b16 %v811, %v810
        %v826 = vpack.c.b16 %v813, %v812
        %v827 = vpack.c.b16 %v815, %v814
        %v828 = vpack.c.b16 %v817, %v816
        %v829 = vpack.c.b16 %v819, %v818
        %v830 = vpack.c.b16 %v821, %v820
        %v831 = vpack.c.b16 %v823, %v822
        %840 = vmatprep.subr.bf16.mxu0 0
        %841 = vmatpush1.bf16.msra.mxu0 %v831
        %842 = vmatprep.subr.bf16.mxu0 0
        %843 = vmatpush1.bf16.msra.mxu0 %v830
        %844 = vmatprep.subr.bf16.mxu0 0
        %845 = vmatpush1.bf16.msra.mxu0 %v829
        %846 = vmatprep.subr.bf16.mxu0 0
        %847 = vmatpush1.bf16.msra.mxu0 %v828
        %848 = vmatprep.subr.bf16.mxu0 0
        %849 = vmatpush1.bf16.msra.mxu0 %v827
        %850 = vmatprep.subr.bf16.mxu0 0
        %851 = vmatpush1.bf16.msra.mxu0 %v826
        %852 = vmatprep.subr.bf16.mxu0 0
        %853 = vmatpush1.bf16.msra.mxu0 %v825
        %854 = vmatprep.subr.bf16.mxu0 0
        %855 = vmatpush1.bf16.msra.mxu0 %v824
        %856 = vmatprep.subr.bf16.mxu0 0
        %857 = vmatpush2.bf16.msra.mxu0 0
        %858 = vmatprep.subr.bf16.mxu0 0
        %859 = vmatpush2.bf16.msra.mxu0 0
        %860 = vmatprep.subr.bf16.mxu0 0
        %861 = vmatpush2.bf16.msra.mxu0 0
        %862 = vmatprep.subr.bf16.mxu0 0
        %863 = vmatpush2.bf16.msra.mxu0 0
        %864 = vmatprep.subr.bf16.mxu0 0
        %865 = vmatpush2.bf16.msra.mxu0 0
        %866 = vmatprep.subr.bf16.mxu0 0
        %867 = vmatpush2.bf16.msra.mxu0 0
        %868 = vmatprep.subr.bf16.mxu0 0
        %869 = vmatpush2.bf16.msra.mxu0 0
        %870 = vmatprep.subr.bf16.mxu0 0
        %871 = vmatpush2.bf16.msra.mxu0 0
        %872 = vmatprep.mubr.bf16.mxu0 0
        %873 = vmatmul.mubr.bf16.gmra.mxu0 %v546
        %v874 = vpop.f32.mrf.mxu0
        %v875 = vadd.f32 %v790, %v874
        %v876 = vpop.f32.mrf.mxu0
        %v877 = vpop.f32.mrf.mxu0
        %v878 = vpop.f32.mrf.mxu0
        %879 = vdwg.mxu0
        %vm880 = vcmask 130048
        %v882 = vsel %vm880, %v653, 0
        %v885 = vsel %vm880, %v764, 0
        %887 = vmatprep.subr.mxu0 0.0
        %888 = vmatpush1.xpose.msra.mxu0 0.0
        %889 = vmatprep.subr.mxu0 0.0
        %890 = vmatpush1.xpose.msra.mxu0 0.0
        %891 = vmatprep.subr.mxu0 0.0
        %892 = vmatpush1.xpose.msra.mxu0 0.0
        %893 = vmatprep.subr.mxu0 0.0
        %894 = vmatpush1.xpose.msra.mxu0 0.0
        %895 = vmatprep.subr.mxu0 0.0
        %896 = vmatpush1.xpose.msra.mxu0 0.0
        %897 = vmatprep.subr.mxu0 0.0
        %898 = vmatpush1.xpose.msra.mxu0 0.0
        %899 = vmatprep.subr.mxu0 0.0
        %900 = vmatpush1.xpose.msra.mxu0 0.0
        %901 = vmatprep.subr.mxu0 0.0
        %902 = vmatpush1.xpose.msra.mxu0 0.0
        %903 = vmatprep.subr.mxu0 0.0
        %904 = vmatpush1.xpose.msra.mxu0 0.0
        %905 = vmatprep.subr.mxu0 0.0
        %906 = vmatpush1.xpose.msra.mxu0 0.0
        %907 = vmatprep.subr.mxu0 0.0
        %908 = vmatpush1.xpose.msra.mxu0 0.0
        %909 = vmatprep.subr.mxu0 0.0
        %910 = vmatpush1.xpose.msra.mxu0 0.0
        %911 = vmatprep.subr.mxu0 0.0
        %912 = vmatpush1.xpose.msra.mxu0 0.0
        %913 = vmatprep.subr.mxu0 0.0
        %914 = vmatpush1.xpose.msra.mxu0 0.0
        %915 = vmatprep.subr.mxu0 0.0
        %916 = vmatpush1.xpose.msra.mxu0 0.0
        %917 = vmatprep.subr.mxu0 0.0
        %918 = vmatpush1.xpose.msra.mxu0 %v885
        %919 = vmatprep.subr.mxu0 0.0
        %920 = vmatpush2.xpose.msra.mxu0 0.0
        %921 = vmatprep.subr.mxu0 0.0
        %922 = vmatpush2.xpose.msra.mxu0 0.0
        %923 = vmatprep.subr.mxu0 0.0
        %924 = vmatpush2.xpose.msra.mxu0 0.0
        %925 = vmatprep.subr.mxu0 0.0
        %926 = vmatpush2.xpose.msra.mxu0 0.0
        %927 = vmatprep.subr.mxu0 0.0
        %928 = vmatpush2.xpose.msra.mxu0 0.0
        %929 = vmatprep.subr.mxu0 0.0
        %930 = vmatpush2.xpose.msra.mxu0 0.0
        %931 = vmatprep.subr.mxu0 0.0
        %932 = vmatpush2.xpose.msra.mxu0 0.0
        %933 = vmatprep.subr.mxu0 0.0
        %934 = vmatpush2.xpose.msra.mxu0 0.0
        %935 = vmatprep.subr.mxu0 0.0
        %936 = vmatpush2.xpose.msra.mxu0 0.0
        %937 = vmatprep.subr.mxu0 0.0
        %938 = vmatpush2.xpose.msra.mxu0 0.0
        %939 = vmatprep.subr.mxu0 0.0
        %940 = vmatpush2.xpose.msra.mxu0 0.0
        %941 = vmatprep.subr.mxu0 0.0
        %942 = vmatpush2.xpose.msra.mxu0 0.0
        %943 = vmatprep.subr.mxu0 0.0
        %944 = vmatpush2.xpose.msra.mxu0 0.0
        %945 = vmatprep.subr.mxu0 0.0
        %946 = vmatpush2.xpose.msra.mxu0 0.0
        %947 = vmatprep.subr.mxu0 0.0
        %948 = vmatpush2.xpose.msra.mxu0 0.0
        %949 = vmatprep.subr.mxu0 0.0
        %950 = vmatpush2.xpose.msra.mxu0 0.0
        %951 = vmatprep.mubr.f32.mxu0 0.0
        %952 = vmatmul.mubr.f32.gmra.mxu0 %v882
        %v953 = vpop.f32.mrf.mxu0
        %v954 = vadd.f32 0.0, %v953
        %v955 = vpop.f32.mrf.mxu0
        %956 = vdwg.mxu0
        %v957 = vmul.f32 %v954, 0.25
        %vm958 = vcmask 64512
        %v959 = vsel %vm958, %v957, -inf
        %960 = vmax.xlane.f32.xlu0 %v959
        %v961 = vpop.xlane.xlu0 %960
        %v962 = vsub.f32 %v957, %v961
        %v963 = vmul.f32 %v962, 1.442695
        %v964 = vpow.pop %v963
        %v965 = vsel %vm958, %v964, 0.0
        %966 = vadd.xlane.f32.xlu0 %v965
        %v967 = vpop.xlane.xlu0 %966
        %v968 = vrcp.pop %v967
        %v969 = vmul.f32 %v964, %v968
        %v971 = vsel %vm958, %v969, 0
        %973 = vmatprep.subr.mxu0 0.0
        %974 = vmatpush1.msra.mxu0 0.0
        %975 = vmatprep.subr.mxu0 0.0
        %976 = vmatpush1.msra.mxu0 0.0
        %977 = vmatprep.subr.mxu0 0.0
        %978 = vmatpush1.msra.mxu0 0.0
        %979 = vmatprep.subr.mxu0 0.0
        %980 = vmatpush1.msra.mxu0 0.0
        %981 = vmatprep.subr.mxu0 0.0
        %982 = vmatpush1.msra.mxu0 0.0
        %983 = vmatprep.subr.mxu0 0.0
        %984 = vmatpush1.msra.mxu0 0.0
        %985 = vmatprep.subr.mxu0 0.0
        %986 = vmatpush1.msra.mxu0 0.0
        %987 = vmatprep.subr.mxu0 0.0
        %988 = vmatpush1.msra.mxu0 0.0
        %989 = vmatprep.subr.mxu0 0.0
        %990 = vmatpush1.msra.mxu0 0.0
        %991 = vmatprep.subr.mxu0 0.0
        %992 = vmatpush1.msra.mxu0 0.0
        %993 = vmatprep.subr.mxu0 0.0
        %994 = vmatpush1.msra.mxu0 0.0
        %995 = vmatprep.subr.mxu0 0.0
        %996 = vmatpush1.msra.mxu0 0.0
        %997 = vmatprep.subr.mxu0 0.0
        %998 = vmatpush1.msra.mxu0 0.0
        %999 = vmatprep.subr.mxu0 0.0
        %1000 = vmatpush1.msra.mxu0 0.0
        %1001 = vmatprep.subr.mxu0 0.0
        %1002 = vmatpush1.msra.mxu0 0.0
        %1003 = vmatprep.subr.mxu0 0.0
        %1004 = vmatpush1.msra.mxu0 %v875
        %1005 = vmatprep.subr.mxu0 0.0
        %1006 = vmatpush2.msra.mxu0 0.0
        %1007 = vmatprep.subr.mxu0 0.0
        %1008 = vmatpush2.msra.mxu0 0.0
        %1009 = vmatprep.subr.mxu0 0.0
        %1010 = vmatpush2.msra.mxu0 0.0
        %1011 = vmatprep.subr.mxu0 0.0
        %1012 = vmatpush2.msra.mxu0 0.0
        %1013 = vmatprep.subr.mxu0 0.0
        %1014 = vmatpush2.msra.mxu0 0.0
        %1015 = vmatprep.subr.mxu0 0.0
        %1016 = vmatpush2.msra.mxu0 0.0
        %1017 = vmatprep.subr.mxu0 0.0
        %1018 = vmatpush2.msra.mxu0 0.0
        %1019 = vmatprep.subr.mxu0 0.0
        %1020 = vmatpush2.msra.mxu0 0.0
        %1021 = vmatprep.subr.mxu0 0.0
        %1022 = vmatpush2.msra.mxu0 0.0
        %1023 = vmatprep.subr.mxu0 0.0
        %1024 = vmatpush2.msra.mxu0 0.0
        %1025 = vmatprep.subr.mxu0 0.0
        %1026 = vmatpush2.msra.mxu0 0.0
        %1027 = vmatprep.subr.mxu0 0.0
        %1028 = vmatpush2.msra.mxu0 0.0
        %1029 = vmatprep.subr.mxu0 0.0
        %1030 = vmatpush2.msra.mxu0 0.0
        %1031 = vmatprep.subr.mxu0 0.0
        %1032 = vmatpush2.msra.mxu0 0.0
        %1033 = vmatprep.subr.mxu0 0.0
        %1034 = vmatpush2.msra.mxu0 0.0
        %1035 = vmatprep.subr.mxu0 0.0
        %1036 = vmatpush2.msra.mxu0 0.0
        %1037 = vmatprep.mubr.f32.mxu0 0.0
        %1038 = vmatmul.mubr.f32.gmra.mxu0 %v971
        %v1039 = vpop.f32.mrf.mxu0
        %v1040 = vadd.f32 0.0, %v1039
        %v1041 = vpop.f32.mrf.mxu0
        %1042 = vdwg.mxu0
        %1043 = vrot.lane.b32.xlu0 %v653, 112
        %v1044 = vpop.permute.xlu0 %1043
        %1045 = vrot.lane.b32.xlu0 %v764, 112
        %v1046 = vpop.permute.xlu0 %1045
        %v1047 = vsel %vm880, %v1044, 0
        %v1049 = vsel %vm880, %v1046, 0
        %1051 = vmatprep.subr.mxu0 0.0
        %1052 = vmatpush1.xpose.msra.mxu0 0.0
        %1053 = vmatprep.subr.mxu0 0.0
        %1054 = vmatpush1.xpose.msra.mxu0 0.0
        %1055 = vmatprep.subr.mxu0 0.0
        %1056 = vmatpush1.xpose.msra.mxu0 0.0
        %1057 = vmatprep.subr.mxu0 0.0
        %1058 = vmatpush1.xpose.msra.mxu0 0.0
        %1059 = vmatprep.subr.mxu0 0.0
        %1060 = vmatpush1.xpose.msra.mxu0 0.0
        %1061 = vmatprep.subr.mxu0 0.0
        %1062 = vmatpush1.xpose.msra.mxu0 0.0
        %1063 = vmatprep.subr.mxu0 0.0
        %1064 = vmatpush1.xpose.msra.mxu0 0.0
        %1065 = vmatprep.subr.mxu0 0.0
        %1066 = vmatpush1.xpose.msra.mxu0 0.0
        %1067 = vmatprep.subr.mxu0 0.0
        %1068 = vmatpush1.xpose.msra.mxu0 0.0
        %1069 = vmatprep.subr.mxu0 0.0
        %1070 = vmatpush1.xpose.msra.mxu0 0.0
        %1071 = vmatprep.subr.mxu0 0.0
        %1072 = vmatpush1.xpose.msra.mxu0 0.0
        %1073 = vmatprep.subr.mxu0 0.0
        %1074 = vmatpush1.xpose.msra.mxu0 0.0
        %1075 = vmatprep.subr.mxu0 0.0
        %1076 = vmatpush1.xpose.msra.mxu0 0.0
        %1077 = vmatprep.subr.mxu0 0.0
        %1078 = vmatpush1.xpose.msra.mxu0 0.0
        %1079 = vmatprep.subr.mxu0 0.0
        %1080 = vmatpush1.xpose.msra.mxu0 0.0
        %1081 = vmatprep.subr.mxu0 0.0
        %1082 = vmatpush1.xpose.msra.mxu0 %v1049
        %1083 = vmatprep.subr.mxu0 0.0
        %1084 = vmatpush2.xpose.msra.mxu0 0.0
        %1085 = vmatprep.subr.mxu0 0.0
        %1086 = vmatpush2.xpose.msra.mxu0 0.0
        %1087 = vmatprep.subr.mxu0 0.0
        %1088 = vmatpush2.xpose.msra.mxu0 0.0
        %1089 = vmatprep.subr.mxu0 0.0
        %1090 = vmatpush2.xpose.msra.mxu0 0.0
        %1091 = vmatprep.subr.mxu0 0.0
        %1092 = vmatpush2.xpose.msra.mxu0 0.0
        %1093 = vmatprep.subr.mxu0 0.0
        %1094 = vmatpush2.xpose.msra.mxu0 0.0
        %1095 = vmatprep.subr.mxu0 0.0
        %1096 = vmatpush2.xpose.msra.mxu0 0.0
        %1097 = vmatprep.subr.mxu0 0.0
        %1098 = vmatpush2.xpose.msra.mxu0 0.0
        %1099 = vmatprep.subr.mxu0 0.0
        %1100 = vmatpush2.xpose.msra.mxu0 0.0
        %1101 = vmatprep.subr.mxu0 0.0
        %1102 = vmatpush2.xpose.msra.mxu0 0.0
        %1103 = vmatprep.subr.mxu0 0.0
        %1104 = vmatpush2.xpose.msra.mxu0 0.0
        %1105 = vmatprep.subr.mxu0 0.0
        %1106 = vmatpush2.xpose.msra.mxu0 0.0
        %1107 = vmatprep.subr.mxu0 0.0
        %1108 = vmatpush2.xpose.msra.mxu0 0.0
        %1109 = vmatprep.subr.mxu0 0.0
        %1110 = vmatpush2.xpose.msra.mxu0 0.0
        %1111 = vmatprep.subr.mxu0 0.0
        %1112 = vmatpush2.xpose.msra.mxu0 0.0
        %1113 = vmatprep.subr.mxu0 0.0
        %1114 = vmatpush2.xpose.msra.mxu0 0.0
        %1115 = vmatprep.mubr.f32.mxu0 0.0
        %1116 = vmatmul.mubr.f32.gmra.mxu0 %v1047
        %v1117 = vpop.f32.mrf.mxu0
        %v1118 = vadd.f32 0.0, %v1117
        %v1119 = vpop.f32.mrf.mxu0
        %1120 = vdwg.mxu0
        %v1121 = vmul.f32 %v1118, 0.25
        %v1122 = vsel %vm958, %v1121, -inf
        %1123 = vmax.xlane.f32.xlu0 %v1122
        %v1124 = vpop.xlane.xlu0 %1123
        %v1125 = vsub.f32 %v1121, %v1124
        %v1126 = vmul.f32 %v1125, 1.442695
        %v1127 = vpow.pop %v1126
        %v1128 = vsel %vm958, %v1127, 0.0
        %1129 = vadd.xlane.f32.xlu0 %v1128
        %v1130 = vpop.xlane.xlu0 %1129
        %v1131 = vrcp.pop %v1130
        %v1132 = vmul.f32 %v1127, %v1131
        %1134 = vrot.lane.b32.xlu0 %v875, 112
        %v1135 = vpop.permute.xlu0 %1134
        %v1138 = vsel %vm958, %v1132, 0
        %1140 = vmatprep.subr.mxu0 0.0
        %1141 = vmatpush1.msra.mxu0 0.0
        %1142 = vmatprep.subr.mxu0 0.0
        %1143 = vmatpush1.msra.mxu0 0.0
        %1144 = vmatprep.subr.mxu0 0.0
        %1145 = vmatpush1.msra.mxu0 0.0
        %1146 = vmatprep.subr.mxu0 0.0
        %1147 = vmatpush1.msra.mxu0 0.0
        %1148 = vmatprep.subr.mxu0 0.0
        %1149 = vmatpush1.msra.mxu0 0.0
        %1150 = vmatprep.subr.mxu0 0.0
        %1151 = vmatpush1.msra.mxu0 0.0
        %1152 = vmatprep.subr.mxu0 0.0
        %1153 = vmatpush1.msra.mxu0 0.0
        %1154 = vmatprep.subr.mxu0 0.0
        %1155 = vmatpush1.msra.mxu0 0.0
        %1156 = vmatprep.subr.mxu0 0.0
        %1157 = vmatpush1.msra.mxu0 0.0
        %1158 = vmatprep.subr.mxu0 0.0
        %1159 = vmatpush1.msra.mxu0 0.0
        %1160 = vmatprep.subr.mxu0 0.0
        %1161 = vmatpush1.msra.mxu0 0.0
        %1162 = vmatprep.subr.mxu0 0.0
        %1163 = vmatpush1.msra.mxu0 0.0
        %1164 = vmatprep.subr.mxu0 0.0
        %1165 = vmatpush1.msra.mxu0 0.0
        %1166 = vmatprep.subr.mxu0 0.0
        %1167 = vmatpush1.msra.mxu0 0.0
        %1168 = vmatprep.subr.mxu0 0.0
        %1169 = vmatpush1.msra.mxu0 0.0
        %1170 = vmatprep.subr.mxu0 0.0
        %1171 = vmatpush1.msra.mxu0 %v1135
        %1172 = vmatprep.subr.mxu0 0.0
        %1173 = vmatpush2.msra.mxu0 0.0
        %1174 = vmatprep.subr.mxu0 0.0
        %1175 = vmatpush2.msra.mxu0 0.0
        %1176 = vmatprep.subr.mxu0 0.0
        %1177 = vmatpush2.msra.mxu0 0.0
        %1178 = vmatprep.subr.mxu0 0.0
        %1179 = vmatpush2.msra.mxu0 0.0
        %1180 = vmatprep.subr.mxu0 0.0
        %1181 = vmatpush2.msra.mxu0 0.0
        %1182 = vmatprep.subr.mxu0 0.0
        %1183 = vmatpush2.msra.mxu0 0.0
        %1184 = vmatprep.subr.mxu0 0.0
        %1185 = vmatpush2.msra.mxu0 0.0
        %1186 = vmatprep.subr.mxu0 0.0
        %1187 = vmatpush2.msra.mxu0 0.0
        %1188 = vmatprep.subr.mxu0 0.0
        %1189 = vmatpush2.msra.mxu0 0.0
        %1190 = vmatprep.subr.mxu0 0.0
        %1191 = vmatpush2.msra.mxu0 0.0
        %1192 = vmatprep.subr.mxu0 0.0
        %1193 = vmatpush2.msra.mxu0 0.0
        %1194 = vmatprep.subr.mxu0 0.0
        %1195 = vmatpush2.msra.mxu0 0.0
        %1196 = vmatprep.subr.mxu0 0.0
        %1197 = vmatpush2.msra.mxu0 0.0
        %1198 = vmatprep.subr.mxu0 0.0
        %1199 = vmatpush2.msra.mxu0 0.0
        %1200 = vmatprep.subr.mxu0 0.0
        %1201 = vmatpush2.msra.mxu0 0.0
        %1202 = vmatprep.subr.mxu0 0.0
        %1203 = vmatpush2.msra.mxu0 0.0
        %1204 = vmatprep.mubr.f32.mxu0 0.0
        %1205 = vmatmul.mubr.f32.gmra.mxu0 %v1138
        %v1206 = vpop.f32.mrf.mxu0
        %v1207 = vadd.f32 0.0, %v1206
        %v1208 = vpop.f32.mrf.mxu0
        %1209 = vdwg.mxu0
        %1210 = vrot.lane.b32.xlu0 %v653, 96
        %v1211 = vpop.permute.xlu0 %1210
        %1212 = vrot.lane.b32.xlu0 %v764, 96
        %v1213 = vpop.permute.xlu0 %1212
        %v1214 = vsel %vm880, %v1211, 0
        %v1216 = vsel %vm880, %v1213, 0
        %1218 = vmatprep.subr.mxu0 0.0
        %1219 = vmatpush1.xpose.msra.mxu0 0.0
        %1220 = vmatprep.subr.mxu0 0.0
        %1221 = vmatpush1.xpose.msra.mxu0 0.0
        %1222 = vmatprep.subr.mxu0 0.0
        %1223 = vmatpush1.xpose.msra.mxu0 0.0
        %1224 = vmatprep.subr.mxu0 0.0
        %1225 = vmatpush1.xpose.msra.mxu0 0.0
        %1226 = vmatprep.subr.mxu0 0.0
        %1227 = vmatpush1.xpose.msra.mxu0 0.0
        %1228 = vmatprep.subr.mxu0 0.0
        %1229 = vmatpush1.xpose.msra.mxu0 0.0
        %1230 = vmatprep.subr.mxu0 0.0
        %1231 = vmatpush1.xpose.msra.mxu0 0.0
        %1232 = vmatprep.subr.mxu0 0.0
        %1233 = vmatpush1.xpose.msra.mxu0 0.0
        %1234 = vmatprep.subr.mxu0 0.0
        %1235 = vmatpush1.xpose.msra.mxu0 0.0
        %1236 = vmatprep.subr.mxu0 0.0
        %1237 = vmatpush1.xpose.msra.mxu0 0.0
        %1238 = vmatprep.subr.mxu0 0.0
        %1239 = vmatpush1.xpose.msra.mxu0 0.0
        %1240 = vmatprep.subr.mxu0 0.0
        %1241 = vmatpush1.xpose.msra.mxu0 0.0
        %1242 = vmatprep.subr.mxu0 0.0
        %1243 = vmatpush1.xpose.msra.mxu0 0.0
        %1244 = vmatprep.subr.mxu0 0.0
        %1245 = vmatpush1.xpose.msra.mxu0 0.0
        %1246 = vmatprep.subr.mxu0 0.0
        %1247 = vmatpush1.xpose.msra.mxu0 0.0
        %1248 = vmatprep.subr.mxu0 0.0
        %1249 = vmatpush1.xpose.msra.mxu0 %v1216
        %1250 = vmatprep.subr.mxu0 0.0
        %1251 = vmatpush2.xpose.msra.mxu0 0.0
        %1252 = vmatprep.subr.mxu0 0.0
        %1253 = vmatpush2.xpose.msra.mxu0 0.0
        %1254 = vmatprep.subr.mxu0 0.0
        %1255 = vmatpush2.xpose.msra.mxu0 0.0
        %1256 = vmatprep.subr.mxu0 0.0
        %1257 = vmatpush2.xpose.msra.mxu0 0.0
        %1258 = vmatprep.subr.mxu0 0.0
        %1259 = vmatpush2.xpose.msra.mxu0 0.0
        %1260 = vmatprep.subr.mxu0 0.0
        %1261 = vmatpush2.xpose.msra.mxu0 0.0
        %1262 = vmatprep.subr.mxu0 0.0
        %1263 = vmatpush2.xpose.msra.mxu0 0.0
        %1264 = vmatprep.subr.mxu0 0.0
        %1265 = vmatpush2.xpose.msra.mxu0 0.0
        %1266 = vmatprep.subr.mxu0 0.0
        %1267 = vmatpush2.xpose.msra.mxu0 0.0
        %1268 = vmatprep.subr.mxu0 0.0
        %1269 = vmatpush2.xpose.msra.mxu0 0.0
        %1270 = vmatprep.subr.mxu0 0.0
        %1271 = vmatpush2.xpose.msra.mxu0 0.0
        %1272 = vmatprep.subr.mxu0 0.0
        %1273 = vmatpush2.xpose.msra.mxu0 0.0
        %1274 = vmatprep.subr.mxu0 0.0
        %1275 = vmatpush2.xpose.msra.mxu0 0.0
        %1276 = vmatprep.subr.mxu0 0.0
        %1277 = vmatpush2.xpose.msra.mxu0 0.0
        %1278 = vmatprep.subr.mxu0 0.0
        %1279 = vmatpush2.xpose.msra.mxu0 0.0
        %1280 = vmatprep.subr.mxu0 0.0
        %1281 = vmatpush2.xpose.msra.mxu0 0.0
        %1282 = vmatprep.mubr.f32.mxu0 0.0
        %1283 = vmatmul.mubr.f32.gmra.mxu0 %v1214
        %v1284 = vpop.f32.mrf.mxu0
        %v1285 = vadd.f32 0.0, %v1284
        %v1286 = vpop.f32.mrf.mxu0
        %1287 = vdwg.mxu0
        %v1288 = vmul.f32 %v1285, 0.25
        %v1289 = vsel %vm958, %v1288, -inf
        %1290 = vmax.xlane.f32.xlu0 %v1289
        %v1291 = vpop.xlane.xlu0 %1290
        %v1292 = vsub.f32 %v1288, %v1291
        %v1293 = vmul.f32 %v1292, 1.442695
        %v1294 = vpow.pop %v1293
        %v1295 = vsel %vm958, %v1294, 0.0
        %1296 = vadd.xlane.f32.xlu0 %v1295
        %v1297 = vpop.xlane.xlu0 %1296
        %v1298 = vrcp.pop %v1297
        %v1299 = vmul.f32 %v1294, %v1298
        %1300 = vrot.lane.b32.xlu0 %v875, 96
        %v1301 = vpop.permute.xlu0 %1300
        %v1304 = vsel %vm958, %v1299, 0
        %1306 = vmatprep.subr.mxu0 0.0
        %1307 = vmatpush1.msra.mxu0 0.0
        %1308 = vmatprep.subr.mxu0 0.0
        %1309 = vmatpush1.msra.mxu0 0.0
        %1310 = vmatprep.subr.mxu0 0.0
        %1311 = vmatpush1.msra.mxu0 0.0
        %1312 = vmatprep.subr.mxu0 0.0
        %1313 = vmatpush1.msra.mxu0 0.0
        %1314 = vmatprep.subr.mxu0 0.0
        %1315 = vmatpush1.msra.mxu0 0.0
        %1316 = vmatprep.subr.mxu0 0.0
        %1317 = vmatpush1.msra.mxu0 0.0
        %1318 = vmatprep.subr.mxu0 0.0
        %1319 = vmatpush1.msra.mxu0 0.0
        %1320 = vmatprep.subr.mxu0 0.0
        %1321 = vmatpush1.msra.mxu0 0.0
        %1322 = vmatprep.subr.mxu0 0.0
        %1323 = vmatpush1.msra.mxu0 0.0
        %1324 = vmatprep.subr.mxu0 0.0
        %1325 = vmatpush1.msra.mxu0 0.0
        %1326 = vmatprep.subr.mxu0 0.0
        %1327 = vmatpush1.msra.mxu0 0.0
        %1328 = vmatprep.subr.mxu0 0.0
        %1329 = vmatpush1.msra.mxu0 0.0
        %1330 = vmatprep.subr.mxu0 0.0
        %1331 = vmatpush1.msra.mxu0 0.0
        %1332 = vmatprep.subr.mxu0 0.0
        %1333 = vmatpush1.msra.mxu0 0.0
        %1334 = vmatprep.subr.mxu0 0.0
        %1335 = vmatpush1.msra.mxu0 0.0
        %1336 = vmatprep.subr.mxu0 0.0
        %1337 = vmatpush1.msra.mxu0 %v1301
        %1338 = vmatprep.subr.mxu0 0.0
        %1339 = vmatpush2.msra.mxu0 0.0
        %1340 = vmatprep.subr.mxu0 0.0
        %1341 = vmatpush2.msra.mxu0 0.0
        %1342 = vmatprep.subr.mxu0 0.0
        %1343 = vmatpush2.msra.mxu0 0.0
        %1344 = vmatprep.subr.mxu0 0.0
        %1345 = vmatpush2.msra.mxu0 0.0
        %1346 = vmatprep.subr.mxu0 0.0
        %1347 = vmatpush2.msra.mxu0 0.0
        %1348 = vmatprep.subr.mxu0 0.0
        %1349 = vmatpush2.msra.mxu0 0.0
        %1350 = vmatprep.subr.mxu0 0.0
        %1351 = vmatpush2.msra.mxu0 0.0
        %1352 = vmatprep.subr.mxu0 0.0
        %1353 = vmatpush2.msra.mxu0 0.0
        %1354 = vmatprep.subr.mxu0 0.0
        %1355 = vmatpush2.msra.mxu0 0.0
        %1356 = vmatprep.subr.mxu0 0.0
        %1357 = vmatpush2.msra.mxu0 0.0
        %1358 = vmatprep.subr.mxu0 0.0
        %1359 = vmatpush2.msra.mxu0 0.0
        %1360 = vmatprep.subr.mxu0 0.0
        %1361 = vmatpush2.msra.mxu0 0.0
        %1362 = vmatprep.subr.mxu0 0.0
        %1363 = vmatpush2.msra.mxu0 0.0
        %1364 = vmatprep.subr.mxu0 0.0
        %1365 = vmatpush2.msra.mxu0 0.0
        %1366 = vmatprep.subr.mxu0 0.0
        %1367 = vmatpush2.msra.mxu0 0.0
        %1368 = vmatprep.subr.mxu0 0.0
        %1369 = vmatpush2.msra.mxu0 0.0
        %1370 = vmatprep.mubr.f32.mxu0 0.0
        %1371 = vmatmul.mubr.f32.gmra.mxu0 %v1304
        %v1372 = vpop.f32.mrf.mxu0
        %v1373 = vadd.f32 0.0, %v1372
        %v1374 = vpop.f32.mrf.mxu0
        %1375 = vdwg.mxu0
        %1376 = vrot.lane.b32.xlu0 %v653, 80
        %v1377 = vpop.permute.xlu0 %1376
        %1378 = vrot.lane.b32.xlu0 %v764, 80
        %v1379 = vpop.permute.xlu0 %1378
        %v1380 = vsel %vm880, %v1377, 0
        %v1382 = vsel %vm880, %v1379, 0
        %1384 = vmatprep.subr.mxu0 0.0
        %1385 = vmatpush1.xpose.msra.mxu0 0.0
        %1386 = vmatprep.subr.mxu0 0.0
        %1387 = vmatpush1.xpose.msra.mxu0 0.0
        %1388 = vmatprep.subr.mxu0 0.0
        %1389 = vmatpush1.xpose.msra.mxu0 0.0
        %1390 = vmatprep.subr.mxu0 0.0
        %1391 = vmatpush1.xpose.msra.mxu0 0.0
        %1392 = vmatprep.subr.mxu0 0.0
        %1393 = vmatpush1.xpose.msra.mxu0 0.0
        %1394 = vmatprep.subr.mxu0 0.0
        %1395 = vmatpush1.xpose.msra.mxu0 0.0
        %1396 = vmatprep.subr.mxu0 0.0
        %1397 = vmatpush1.xpose.msra.mxu0 0.0
        %1398 = vmatprep.subr.mxu0 0.0
        %1399 = vmatpush1.xpose.msra.mxu0 0.0
        %1400 = vmatprep.subr.mxu0 0.0
        %1401 = vmatpush1.xpose.msra.mxu0 0.0
        %1402 = vmatprep.subr.mxu0 0.0
        %1403 = vmatpush1.xpose.msra.mxu0 0.0
        %1404 = vmatprep.subr.mxu0 0.0
        %1405 = vmatpush1.xpose.msra.mxu0 0.0
        %1406 = vmatprep.subr.mxu0 0.0
        %1407 = vmatpush1.xpose.msra.mxu0 0.0
        %1408 = vmatprep.subr.mxu0 0.0
        %1409 = vmatpush1.xpose.msra.mxu0 0.0
        %1410 = vmatprep.subr.mxu0 0.0
        %1411 = vmatpush1.xpose.msra.mxu0 0.0
        %1412 = vmatprep.subr.mxu0 0.0
        %1413 = vmatpush1.xpose.msra.mxu0 0.0
        %1414 = vmatprep.subr.mxu0 0.0
        %1415 = vmatpush1.xpose.msra.mxu0 %v1382
        %1416 = vmatprep.subr.mxu0 0.0
        %1417 = vmatpush2.xpose.msra.mxu0 0.0
        %1418 = vmatprep.subr.mxu0 0.0
        %1419 = vmatpush2.xpose.msra.mxu0 0.0
        %1420 = vmatprep.subr.mxu0 0.0
        %1421 = vmatpush2.xpose.msra.mxu0 0.0
        %1422 = vmatprep.subr.mxu0 0.0
        %1423 = vmatpush2.xpose.msra.mxu0 0.0
        %1424 = vmatprep.subr.mxu0 0.0
        %1425 = vmatpush2.xpose.msra.mxu0 0.0
        %1426 = vmatprep.subr.mxu0 0.0
        %1427 = vmatpush2.xpose.msra.mxu0 0.0
        %1428 = vmatprep.subr.mxu0 0.0
        %1429 = vmatpush2.xpose.msra.mxu0 0.0
        %1430 = vmatprep.subr.mxu0 0.0
        %1431 = vmatpush2.xpose.msra.mxu0 0.0
        %1432 = vmatprep.subr.mxu0 0.0
        %1433 = vmatpush2.xpose.msra.mxu0 0.0
        %1434 = vmatprep.subr.mxu0 0.0
        %1435 = vmatpush2.xpose.msra.mxu0 0.0
        %1436 = vmatprep.subr.mxu0 0.0
        %1437 = vmatpush2.xpose.msra.mxu0 0.0
        %1438 = vmatprep.subr.mxu0 0.0
        %1439 = vmatpush2.xpose.msra.mxu0 0.0
        %1440 = vmatprep.subr.mxu0 0.0
        %1441 = vmatpush2.xpose.msra.mxu0 0.0
        %1442 = vmatprep.subr.mxu0 0.0
        %1443 = vmatpush2.xpose.msra.mxu0 0.0
        %1444 = vmatprep.subr.mxu0 0.0
        %1445 = vmatpush2.xpose.msra.mxu0 0.0
        %1446 = vmatprep.subr.mxu0 0.0
        %1447 = vmatpush2.xpose.msra.mxu0 0.0
        %1448 = vmatprep.mubr.f32.mxu0 0.0
        %1449 = vmatmul.mubr.f32.gmra.mxu0 %v1380
        %v1450 = vpop.f32.mrf.mxu0
        %v1451 = vadd.f32 0.0, %v1450
        %v1452 = vpop.f32.mrf.mxu0
        %1453 = vdwg.mxu0
        %v1454 = vmul.f32 %v1451, 0.25
        %v1455 = vsel %vm958, %v1454, -inf
        %1456 = vmax.xlane.f32.xlu0 %v1455
        %v1457 = vpop.xlane.xlu0 %1456
        %v1458 = vsub.f32 %v1454, %v1457
        %v1459 = vmul.f32 %v1458, 1.442695
        %v1460 = vpow.pop %v1459
        %v1461 = vsel %vm958, %v1460, 0.0
        %1462 = vadd.xlane.f32.xlu0 %v1461
        %v1463 = vpop.xlane.xlu0 %1462
        %v1464 = vrcp.pop %v1463
        %v1465 = vmul.f32 %v1460, %v1464
        %1466 = vrot.lane.b32.xlu0 %v875, 80
        %v1467 = vpop.permute.xlu0 %1466
        %v1470 = vsel %vm958, %v1465, 0
        %1472 = vmatprep.subr.mxu0 0.0
        %1473 = vmatpush1.msra.mxu0 0.0
        %1474 = vmatprep.subr.mxu0 0.0
        %1475 = vmatpush1.msra.mxu0 0.0
        %1476 = vmatprep.subr.mxu0 0.0
        %1477 = vmatpush1.msra.mxu0 0.0
        %1478 = vmatprep.subr.mxu0 0.0
        %1479 = vmatpush1.msra.mxu0 0.0
        %1480 = vmatprep.subr.mxu0 0.0
        %1481 = vmatpush1.msra.mxu0 0.0
        %1482 = vmatprep.subr.mxu0 0.0
        %1483 = vmatpush1.msra.mxu0 0.0
        %1484 = vmatprep.subr.mxu0 0.0
        %1485 = vmatpush1.msra.mxu0 0.0
        %1486 = vmatprep.subr.mxu0 0.0
        %1487 = vmatpush1.msra.mxu0 0.0
        %1488 = vmatprep.subr.mxu0 0.0
        %1489 = vmatpush1.msra.mxu0 0.0
        %1490 = vmatprep.subr.mxu0 0.0
        %1491 = vmatpush1.msra.mxu0 0.0
        %1492 = vmatprep.subr.mxu0 0.0
        %1493 = vmatpush1.msra.mxu0 0.0
        %1494 = vmatprep.subr.mxu0 0.0
        %1495 = vmatpush1.msra.mxu0 0.0
        %1496 = vmatprep.subr.mxu0 0.0
        %1497 = vmatpush1.msra.mxu0 0.0
        %1498 = vmatprep.subr.mxu0 0.0
        %1499 = vmatpush1.msra.mxu0 0.0
        %1500 = vmatprep.subr.mxu0 0.0
        %1501 = vmatpush1.msra.mxu0 0.0
        %1502 = vmatprep.subr.mxu0 0.0
        %1503 = vmatpush1.msra.mxu0 %v1467
        %1504 = vmatprep.subr.mxu0 0.0
        %1505 = vmatpush2.msra.mxu0 0.0
        %1506 = vmatprep.subr.mxu0 0.0
        %1507 = vmatpush2.msra.mxu0 0.0
        %1508 = vmatprep.subr.mxu0 0.0
        %1509 = vmatpush2.msra.mxu0 0.0
        %1510 = vmatprep.subr.mxu0 0.0
        %1511 = vmatpush2.msra.mxu0 0.0
        %1512 = vmatprep.subr.mxu0 0.0
        %1513 = vmatpush2.msra.mxu0 0.0
        %1514 = vmatprep.subr.mxu0 0.0
        %1515 = vmatpush2.msra.mxu0 0.0
        %1516 = vmatprep.subr.mxu0 0.0
        %1517 = vmatpush2.msra.mxu0 0.0
        %1518 = vmatprep.subr.mxu0 0.0
        %1519 = vmatpush2.msra.mxu0 0.0
        %1520 = vmatprep.subr.mxu0 0.0
        %1521 = vmatpush2.msra.mxu0 0.0
        %1522 = vmatprep.subr.mxu0 0.0
        %1523 = vmatpush2.msra.mxu0 0.0
        %1524 = vmatprep.subr.mxu0 0.0
        %1525 = vmatpush2.msra.mxu0 0.0
        %1526 = vmatprep.subr.mxu0 0.0
        %1527 = vmatpush2.msra.mxu0 0.0
        %1528 = vmatprep.subr.mxu0 0.0
        %1529 = vmatpush2.msra.mxu0 0.0
        %1530 = vmatprep.subr.mxu0 0.0
        %1531 = vmatpush2.msra.mxu0 0.0
        %1532 = vmatprep.subr.mxu0 0.0
        %1533 = vmatpush2.msra.mxu0 0.0
        %1534 = vmatprep.subr.mxu0 0.0
        %1535 = vmatpush2.msra.mxu0 0.0
        %1536 = vmatprep.mubr.f32.mxu0 0.0
        %1537 = vmatmul.mubr.f32.gmra.mxu0 %v1470
        %v1538 = vpop.f32.mrf.mxu0
        %v1539 = vadd.f32 0.0, %v1538
        %v1540 = vpop.f32.mrf.mxu0
        %1541 = vdwg.mxu0
        %1542 = vrot.lane.b32.xlu0 %v653, 64
        %v1543 = vpop.permute.xlu0 %1542
        %1544 = vrot.lane.b32.xlu0 %v764, 64
        %v1545 = vpop.permute.xlu0 %1544
        %v1546 = vsel %vm880, %v1543, 0
        %v1548 = vsel %vm880, %v1545, 0
        %1550 = vmatprep.subr.mxu0 0.0
        %1551 = vmatpush1.xpose.msra.mxu0 0.0
        %1552 = vmatprep.subr.mxu0 0.0
        %1553 = vmatpush1.xpose.msra.mxu0 0.0
        %1554 = vmatprep.subr.mxu0 0.0
        %1555 = vmatpush1.xpose.msra.mxu0 0.0
        %1556 = vmatprep.subr.mxu0 0.0
        %1557 = vmatpush1.xpose.msra.mxu0 0.0
        %1558 = vmatprep.subr.mxu0 0.0
        %1559 = vmatpush1.xpose.msra.mxu0 0.0
        %1560 = vmatprep.subr.mxu0 0.0
        %1561 = vmatpush1.xpose.msra.mxu0 0.0
        %1562 = vmatprep.subr.mxu0 0.0
        %1563 = vmatpush1.xpose.msra.mxu0 0.0
        %1564 = vmatprep.subr.mxu0 0.0
        %1565 = vmatpush1.xpose.msra.mxu0 0.0
        %1566 = vmatprep.subr.mxu0 0.0
        %1567 = vmatpush1.xpose.msra.mxu0 0.0
        %1568 = vmatprep.subr.mxu0 0.0
        %1569 = vmatpush1.xpose.msra.mxu0 0.0
        %1570 = vmatprep.subr.mxu0 0.0
        %1571 = vmatpush1.xpose.msra.mxu0 0.0
        %1572 = vmatprep.subr.mxu0 0.0
        %1573 = vmatpush1.xpose.msra.mxu0 0.0
        %1574 = vmatprep.subr.mxu0 0.0
        %1575 = vmatpush1.xpose.msra.mxu0 0.0
        %1576 = vmatprep.subr.mxu0 0.0
        %1577 = vmatpush1.xpose.msra.mxu0 0.0
        %1578 = vmatprep.subr.mxu0 0.0
        %1579 = vmatpush1.xpose.msra.mxu0 0.0
        %1580 = vmatprep.subr.mxu0 0.0
        %1581 = vmatpush1.xpose.msra.mxu0 %v1548
        %1582 = vmatprep.subr.mxu0 0.0
        %1583 = vmatpush2.xpose.msra.mxu0 0.0
        %1584 = vmatprep.subr.mxu0 0.0
        %1585 = vmatpush2.xpose.msra.mxu0 0.0
        %1586 = vmatprep.subr.mxu0 0.0
        %1587 = vmatpush2.xpose.msra.mxu0 0.0
        %1588 = vmatprep.subr.mxu0 0.0
        %1589 = vmatpush2.xpose.msra.mxu0 0.0
        %1590 = vmatprep.subr.mxu0 0.0
        %1591 = vmatpush2.xpose.msra.mxu0 0.0
        %1592 = vmatprep.subr.mxu0 0.0
        %1593 = vmatpush2.xpose.msra.mxu0 0.0
        %1594 = vmatprep.subr.mxu0 0.0
        %1595 = vmatpush2.xpose.msra.mxu0 0.0
        %1596 = vmatprep.subr.mxu0 0.0
        %1597 = vmatpush2.xpose.msra.mxu0 0.0
        %1598 = vmatprep.subr.mxu0 0.0
        %1599 = vmatpush2.xpose.msra.mxu0 0.0
        %1600 = vmatprep.subr.mxu0 0.0
        %1601 = vmatpush2.xpose.msra.mxu0 0.0
        %1602 = vmatprep.subr.mxu0 0.0
        %1603 = vmatpush2.xpose.msra.mxu0 0.0
        %1604 = vmatprep.subr.mxu0 0.0
        %1605 = vmatpush2.xpose.msra.mxu0 0.0
        %1606 = vmatprep.subr.mxu0 0.0
        %1607 = vmatpush2.xpose.msra.mxu0 0.0
        %1608 = vmatprep.subr.mxu0 0.0
        %1609 = vmatpush2.xpose.msra.mxu0 0.0
        %1610 = vmatprep.subr.mxu0 0.0
        %1611 = vmatpush2.xpose.msra.mxu0 0.0
        %1612 = vmatprep.subr.mxu0 0.0
        %1613 = vmatpush2.xpose.msra.mxu0 0.0
        %1614 = vmatprep.mubr.f32.mxu0 0.0
        %1615 = vmatmul.mubr.f32.gmra.mxu0 %v1546
        %v1616 = vpop.f32.mrf.mxu0
        %v1617 = vadd.f32 0.0, %v1616
        %v1618 = vpop.f32.mrf.mxu0
        %1619 = vdwg.mxu0
        %v1620 = vmul.f32 %v1617, 0.25
        %v1621 = vsel %vm958, %v1620, -inf
        %1622 = vmax.xlane.f32.xlu0 %v1621
        %v1623 = vpop.xlane.xlu0 %1622
        %v1624 = vsub.f32 %v1620, %v1623
        %v1625 = vmul.f32 %v1624, 1.442695
        %v1626 = vpow.pop %v1625
        %v1627 = vsel %vm958, %v1626, 0.0
        %1628 = vadd.xlane.f32.xlu0 %v1627
        %v1629 = vpop.xlane.xlu0 %1628
        %v1630 = vrcp.pop %v1629
        %v1631 = vmul.f32 %v1626, %v1630
        %1632 = vrot.lane.b32.xlu0 %v875, 64
        %v1633 = vpop.permute.xlu0 %1632
        %v1636 = vsel %vm958, %v1631, 0
        %1638 = vmatprep.subr.mxu0 0.0
        %1639 = vmatpush1.msra.mxu0 0.0
        %1640 = vmatprep.subr.mxu0 0.0
        %1641 = vmatpush1.msra.mxu0 0.0
        %1642 = vmatprep.subr.mxu0 0.0
        %1643 = vmatpush1.msra.mxu0 0.0
        %1644 = vmatprep.subr.mxu0 0.0
        %1645 = vmatpush1.msra.mxu0 0.0
        %1646 = vmatprep.subr.mxu0 0.0
        %1647 = vmatpush1.msra.mxu0 0.0
        %1648 = vmatprep.subr.mxu0 0.0
        %1649 = vmatpush1.msra.mxu0 0.0
        %1650 = vmatprep.subr.mxu0 0.0
        %1651 = vmatpush1.msra.mxu0 0.0
        %1652 = vmatprep.subr.mxu0 0.0
        %1653 = vmatpush1.msra.mxu0 0.0
        %1654 = vmatprep.subr.mxu0 0.0
        %1655 = vmatpush1.msra.mxu0 0.0
        %1656 = vmatprep.subr.mxu0 0.0
        %1657 = vmatpush1.msra.mxu0 0.0
        %1658 = vmatprep.subr.mxu0 0.0
        %1659 = vmatpush1.msra.mxu0 0.0
        %1660 = vmatprep.subr.mxu0 0.0
        %1661 = vmatpush1.msra.mxu0 0.0
        %1662 = vmatprep.subr.mxu0 0.0
        %1663 = vmatpush1.msra.mxu0 0.0
        %1664 = vmatprep.subr.mxu0 0.0
        %1665 = vmatpush1.msra.mxu0 0.0
        %1666 = vmatprep.subr.mxu0 0.0
        %1667 = vmatpush1.msra.mxu0 0.0
        %1668 = vmatprep.subr.mxu0 0.0
        %1669 = vmatpush1.msra.mxu0 %v1633
        %1670 = vmatprep.subr.mxu0 0.0
        %1671 = vmatpush2.msra.mxu0 0.0
        %1672 = vmatprep.subr.mxu0 0.0
        %1673 = vmatpush2.msra.mxu0 0.0
        %1674 = vmatprep.subr.mxu0 0.0
        %1675 = vmatpush2.msra.mxu0 0.0
        %1676 = vmatprep.subr.mxu0 0.0
        %1677 = vmatpush2.msra.mxu0 0.0
        %1678 = vmatprep.subr.mxu0 0.0
        %1679 = vmatpush2.msra.mxu0 0.0
        %1680 = vmatprep.subr.mxu0 0.0
        %1681 = vmatpush2.msra.mxu0 0.0
        %1682 = vmatprep.subr.mxu0 0.0
        %1683 = vmatpush2.msra.mxu0 0.0
        %1684 = vmatprep.subr.mxu0 0.0
        %1685 = vmatpush2.msra.mxu0 0.0
        %1686 = vmatprep.subr.mxu0 0.0
        %1687 = vmatpush2.msra.mxu0 0.0
        %1688 = vmatprep.subr.mxu0 0.0
        %1689 = vmatpush2.msra.mxu0 0.0
        %1690 = vmatprep.subr.mxu0 0.0
        %1691 = vmatpush2.msra.mxu0 0.0
        %1692 = vmatprep.subr.mxu0 0.0
        %1693 = vmatpush2.msra.mxu0 0.0
        %1694 = vmatprep.subr.mxu0 0.0
        %1695 = vmatpush2.msra.mxu0 0.0
        %1696 = vmatprep.subr.mxu0 0.0
        %1697 = vmatpush2.msra.mxu0 0.0
        %1698 = vmatprep.subr.mxu0 0.0
        %1699 = vmatpush2.msra.mxu0 0.0
        %1700 = vmatprep.subr.mxu0 0.0
        %1701 = vmatpush2.msra.mxu0 0.0
        %1702 = vmatprep.mubr.f32.mxu0 0.0
        %1703 = vmatmul.mubr.f32.gmra.mxu0 %v1636
        %v1704 = vpop.f32.mrf.mxu0
        %v1705 = vadd.f32 0.0, %v1704
        %v1706 = vpop.f32.mrf.mxu0
        %1707 = vdwg.mxu0
        %1708 = vrot.lane.b32.xlu0 %v653, 48
        %v1709 = vpop.permute.xlu0 %1708
        %1710 = vrot.lane.b32.xlu0 %v764, 48
        %v1711 = vpop.permute.xlu0 %1710
        %v1712 = vsel %vm880, %v1709, 0
        %v1714 = vsel %vm880, %v1711, 0
        %1716 = vmatprep.subr.mxu0 0.0
        %1717 = vmatpush1.xpose.msra.mxu0 0.0
        %1718 = vmatprep.subr.mxu0 0.0
        %1719 = vmatpush1.xpose.msra.mxu0 0.0
        %1720 = vmatprep.subr.mxu0 0.0
        %1721 = vmatpush1.xpose.msra.mxu0 0.0
        %1722 = vmatprep.subr.mxu0 0.0
        %1723 = vmatpush1.xpose.msra.mxu0 0.0
        %1724 = vmatprep.subr.mxu0 0.0
        %1725 = vmatpush1.xpose.msra.mxu0 0.0
        %1726 = vmatprep.subr.mxu0 0.0
        %1727 = vmatpush1.xpose.msra.mxu0 0.0
        %1728 = vmatprep.subr.mxu0 0.0
        %1729 = vmatpush1.xpose.msra.mxu0 0.0
        %1730 = vmatprep.subr.mxu0 0.0
        %1731 = vmatpush1.xpose.msra.mxu0 0.0
        %1732 = vmatprep.subr.mxu0 0.0
        %1733 = vmatpush1.xpose.msra.mxu0 0.0
        %1734 = vmatprep.subr.mxu0 0.0
        %1735 = vmatpush1.xpose.msra.mxu0 0.0
        %1736 = vmatprep.subr.mxu0 0.0
        %1737 = vmatpush1.xpose.msra.mxu0 0.0
        %1738 = vmatprep.subr.mxu0 0.0
        %1739 = vmatpush1.xpose.msra.mxu0 0.0
        %1740 = vmatprep.subr.mxu0 0.0
        %1741 = vmatpush1.xpose.msra.mxu0 0.0
        %1742 = vmatprep.subr.mxu0 0.0
        %1743 = vmatpush1.xpose.msra.mxu0 0.0
        %1744 = vmatprep.subr.mxu0 0.0
        %1745 = vmatpush1.xpose.msra.mxu0 0.0
        %1746 = vmatprep.subr.mxu0 0.0
        %1747 = vmatpush1.xpose.msra.mxu0 %v1714
        %1748 = vmatprep.subr.mxu0 0.0
        %1749 = vmatpush2.xpose.msra.mxu0 0.0
        %1750 = vmatprep.subr.mxu0 0.0
        %1751 = vmatpush2.xpose.msra.mxu0 0.0
        %1752 = vmatprep.subr.mxu0 0.0
        %1753 = vmatpush2.xpose.msra.mxu0 0.0
        %1754 = vmatprep.subr.mxu0 0.0
        %1755 = vmatpush2.xpose.msra.mxu0 0.0
        %1756 = vmatprep.subr.mxu0 0.0
        %1757 = vmatpush2.xpose.msra.mxu0 0.0
        %1758 = vmatprep.subr.mxu0 0.0
        %1759 = vmatpush2.xpose.msra.mxu0 0.0
        %1760 = vmatprep.subr.mxu0 0.0
        %1761 = vmatpush2.xpose.msra.mxu0 0.0
        %1762 = vmatprep.subr.mxu0 0.0
        %1763 = vmatpush2.xpose.msra.mxu0 0.0
        %1764 = vmatprep.subr.mxu0 0.0
        %1765 = vmatpush2.xpose.msra.mxu0 0.0
        %1766 = vmatprep.subr.mxu0 0.0
        %1767 = vmatpush2.xpose.msra.mxu0 0.0
        %1768 = vmatprep.subr.mxu0 0.0
        %1769 = vmatpush2.xpose.msra.mxu0 0.0
        %1770 = vmatprep.subr.mxu0 0.0
        %1771 = vmatpush2.xpose.msra.mxu0 0.0
        %1772 = vmatprep.subr.mxu0 0.0
        %1773 = vmatpush2.xpose.msra.mxu0 0.0
        %1774 = vmatprep.subr.mxu0 0.0
        %1775 = vmatpush2.xpose.msra.mxu0 0.0
        %1776 = vmatprep.subr.mxu0 0.0
        %1777 = vmatpush2.xpose.msra.mxu0 0.0
        %1778 = vmatprep.subr.mxu0 0.0
        %1779 = vmatpush2.xpose.msra.mxu0 0.0
        %1780 = vmatprep.mubr.f32.mxu0 0.0
        %1781 = vmatmul.mubr.f32.gmra.mxu0 %v1712
        %v1782 = vpop.f32.mrf.mxu0
        %v1783 = vadd.f32 0.0, %v1782
        %v1784 = vpop.f32.mrf.mxu0
        %1785 = vdwg.mxu0
        %v1786 = vmul.f32 %v1783, 0.25
        %v1787 = vsel %vm958, %v1786, -inf
        %1788 = vmax.xlane.f32.xlu0 %v1787
        %v1789 = vpop.xlane.xlu0 %1788
        %v1790 = vsub.f32 %v1786, %v1789
        %v1791 = vmul.f32 %v1790, 1.442695
        %v1792 = vpow.pop %v1791
        %v1793 = vsel %vm958, %v1792, 0.0
        %1794 = vadd.xlane.f32.xlu0 %v1793
        %v1795 = vpop.xlane.xlu0 %1794
        %v1796 = vrcp.pop %v1795
        %v1797 = vmul.f32 %v1792, %v1796
        %1798 = vrot.lane.b32.xlu0 %v875, 48
        %v1799 = vpop.permute.xlu0 %1798
        %v1802 = vsel %vm958, %v1797, 0
        %1804 = vmatprep.subr.mxu0 0.0
        %1805 = vmatpush1.msra.mxu0 0.0
        %1806 = vmatprep.subr.mxu0 0.0
        %1807 = vmatpush1.msra.mxu0 0.0
        %1808 = vmatprep.subr.mxu0 0.0
        %1809 = vmatpush1.msra.mxu0 0.0
        %1810 = vmatprep.subr.mxu0 0.0
        %1811 = vmatpush1.msra.mxu0 0.0
        %1812 = vmatprep.subr.mxu0 0.0
        %1813 = vmatpush1.msra.mxu0 0.0
        %1814 = vmatprep.subr.mxu0 0.0
        %1815 = vmatpush1.msra.mxu0 0.0
        %1816 = vmatprep.subr.mxu0 0.0
        %1817 = vmatpush1.msra.mxu0 0.0
        %1818 = vmatprep.subr.mxu0 0.0
        %1819 = vmatpush1.msra.mxu0 0.0
        %1820 = vmatprep.subr.mxu0 0.0
        %1821 = vmatpush1.msra.mxu0 0.0
        %1822 = vmatprep.subr.mxu0 0.0
        %1823 = vmatpush1.msra.mxu0 0.0
        %1824 = vmatprep.subr.mxu0 0.0
        %1825 = vmatpush1.msra.mxu0 0.0
        %1826 = vmatprep.subr.mxu0 0.0
        %1827 = vmatpush1.msra.mxu0 0.0
        %1828 = vmatprep.subr.mxu0 0.0
        %1829 = vmatpush1.msra.mxu0 0.0
        %1830 = vmatprep.subr.mxu0 0.0
        %1831 = vmatpush1.msra.mxu0 0.0
        %1832 = vmatprep.subr.mxu0 0.0
        %1833 = vmatpush1.msra.mxu0 0.0
        %1834 = vmatprep.subr.mxu0 0.0
        %1835 = vmatpush1.msra.mxu0 %v1799
        %1836 = vmatprep.subr.mxu0 0.0
        %1837 = vmatpush2.msra.mxu0 0.0
        %1838 = vmatprep.subr.mxu0 0.0
        %1839 = vmatpush2.msra.mxu0 0.0
        %1840 = vmatprep.subr.mxu0 0.0
        %1841 = vmatpush2.msra.mxu0 0.0
        %1842 = vmatprep.subr.mxu0 0.0
        %1843 = vmatpush2.msra.mxu0 0.0
        %1844 = vmatprep.subr.mxu0 0.0
        %1845 = vmatpush2.msra.mxu0 0.0
        %1846 = vmatprep.subr.mxu0 0.0
        %1847 = vmatpush2.msra.mxu0 0.0
        %1848 = vmatprep.subr.mxu0 0.0
        %1849 = vmatpush2.msra.mxu0 0.0
        %1850 = vmatprep.subr.mxu0 0.0
        %1851 = vmatpush2.msra.mxu0 0.0
        %1852 = vmatprep.subr.mxu0 0.0
        %1853 = vmatpush2.msra.mxu0 0.0
        %1854 = vmatprep.subr.mxu0 0.0
        %1855 = vmatpush2.msra.mxu0 0.0
        %1856 = vmatprep.subr.mxu0 0.0
        %1857 = vmatpush2.msra.mxu0 0.0
        %1858 = vmatprep.subr.mxu0 0.0
        %1859 = vmatpush2.msra.mxu0 0.0
        %1860 = vmatprep.subr.mxu0 0.0
        %1861 = vmatpush2.msra.mxu0 0.0
        %1862 = vmatprep.subr.mxu0 0.0
        %1863 = vmatpush2.msra.mxu0 0.0
        %1864 = vmatprep.subr.mxu0 0.0
        %1865 = vmatpush2.msra.mxu0 0.0
        %1866 = vmatprep.subr.mxu0 0.0
        %1867 = vmatpush2.msra.mxu0 0.0
        %1868 = vmatprep.mubr.f32.mxu0 0.0
        %1869 = vmatmul.mubr.f32.gmra.mxu0 %v1802
        %v1870 = vpop.f32.mrf.mxu0
        %v1871 = vadd.f32 0.0, %v1870
        %v1872 = vpop.f32.mrf.mxu0
        %1873 = vdwg.mxu0
        %1874 = vrot.lane.b32.xlu0 %v653, 32
        %v1875 = vpop.permute.xlu0 %1874
        %1876 = vrot.lane.b32.xlu0 %v764, 32
        %v1877 = vpop.permute.xlu0 %1876
        %v1878 = vsel %vm880, %v1875, 0
        %v1880 = vsel %vm880, %v1877, 0
        %1882 = vmatprep.subr.mxu0 0.0
        %1883 = vmatpush1.xpose.msra.mxu0 0.0
        %1884 = vmatprep.subr.mxu0 0.0
        %1885 = vmatpush1.xpose.msra.mxu0 0.0
        %1886 = vmatprep.subr.mxu0 0.0
        %1887 = vmatpush1.xpose.msra.mxu0 0.0
        %1888 = vmatprep.subr.mxu0 0.0
        %1889 = vmatpush1.xpose.msra.mxu0 0.0
        %1890 = vmatprep.subr.mxu0 0.0
        %1891 = vmatpush1.xpose.msra.mxu0 0.0
        %1892 = vmatprep.subr.mxu0 0.0
        %1893 = vmatpush1.xpose.msra.mxu0 0.0
        %1894 = vmatprep.subr.mxu0 0.0
        %1895 = vmatpush1.xpose.msra.mxu0 0.0
        %1896 = vmatprep.subr.mxu0 0.0
        %1897 = vmatpush1.xpose.msra.mxu0 0.0
        %1898 = vmatprep.subr.mxu0 0.0
        %1899 = vmatpush1.xpose.msra.mxu0 0.0
        %1900 = vmatprep.subr.mxu0 0.0
        %1901 = vmatpush1.xpose.msra.mxu0 0.0
        %1902 = vmatprep.subr.mxu0 0.0
        %1903 = vmatpush1.xpose.msra.mxu0 0.0
        %1904 = vmatprep.subr.mxu0 0.0
        %1905 = vmatpush1.xpose.msra.mxu0 0.0
        %1906 = vmatprep.subr.mxu0 0.0
        %1907 = vmatpush1.xpose.msra.mxu0 0.0
        %1908 = vmatprep.subr.mxu0 0.0
        %1909 = vmatpush1.xpose.msra.mxu0 0.0
        %1910 = vmatprep.subr.mxu0 0.0
        %1911 = vmatpush1.xpose.msra.mxu0 0.0
        %1912 = vmatprep.subr.mxu0 0.0
        %1913 = vmatpush1.xpose.msra.mxu0 %v1880
        %1914 = vmatprep.subr.mxu0 0.0
        %1915 = vmatpush2.xpose.msra.mxu0 0.0
        %1916 = vmatprep.subr.mxu0 0.0
        %1917 = vmatpush2.xpose.msra.mxu0 0.0
        %1918 = vmatprep.subr.mxu0 0.0
        %1919 = vmatpush2.xpose.msra.mxu0 0.0
        %1920 = vmatprep.subr.mxu0 0.0
        %1921 = vmatpush2.xpose.msra.mxu0 0.0
        %1922 = vmatprep.subr.mxu0 0.0
        %1923 = vmatpush2.xpose.msra.mxu0 0.0
        %1924 = vmatprep.subr.mxu0 0.0
        %1925 = vmatpush2.xpose.msra.mxu0 0.0
        %1926 = vmatprep.subr.mxu0 0.0
        %1927 = vmatpush2.xpose.msra.mxu0 0.0
        %1928 = vmatprep.subr.mxu0 0.0
        %1929 = vmatpush2.xpose.msra.mxu0 0.0
        %1930 = vmatprep.subr.mxu0 0.0
        %1931 = vmatpush2.xpose.msra.mxu0 0.0
        %1932 = vmatprep.subr.mxu0 0.0
        %1933 = vmatpush2.xpose.msra.mxu0 0.0
        %1934 = vmatprep.subr.mxu0 0.0
        %1935 = vmatpush2.xpose.msra.mxu0 0.0
        %1936 = vmatprep.subr.mxu0 0.0
        %1937 = vmatpush2.xpose.msra.mxu0 0.0
        %1938 = vmatprep.subr.mxu0 0.0
        %1939 = vmatpush2.xpose.msra.mxu0 0.0
        %1940 = vmatprep.subr.mxu0 0.0
        %1941 = vmatpush2.xpose.msra.mxu0 0.0
        %1942 = vmatprep.subr.mxu0 0.0
        %1943 = vmatpush2.xpose.msra.mxu0 0.0
        %1944 = vmatprep.subr.mxu0 0.0
        %1945 = vmatpush2.xpose.msra.mxu0 0.0
        %1946 = vmatprep.mubr.f32.mxu0 0.0
        %1947 = vmatmul.mubr.f32.gmra.mxu0 %v1878
        %v1948 = vpop.f32.mrf.mxu0
        %v1949 = vadd.f32 0.0, %v1948
        %v1950 = vpop.f32.mrf.mxu0
        %1951 = vdwg.mxu0
        %v1952 = vmul.f32 %v1949, 0.25
        %v1953 = vsel %vm958, %v1952, -inf
        %1954 = vmax.xlane.f32.xlu0 %v1953
        %v1955 = vpop.xlane.xlu0 %1954
        %v1956 = vsub.f32 %v1952, %v1955
        %v1957 = vmul.f32 %v1956, 1.442695
        %v1958 = vpow.pop %v1957
        %v1959 = vsel %vm958, %v1958, 0.0
        %1960 = vadd.xlane.f32.xlu0 %v1959
        %v1961 = vpop.xlane.xlu0 %1960
        %v1962 = vrcp.pop %v1961
        %v1963 = vmul.f32 %v1958, %v1962
        %1964 = vrot.lane.b32.xlu0 %v875, 32
        %v1965 = vpop.permute.xlu0 %1964
        %v1968 = vsel %vm958, %v1963, 0
        %1970 = vmatprep.subr.mxu0 0.0
        %1971 = vmatpush1.msra.mxu0 0.0
        %1972 = vmatprep.subr.mxu0 0.0
        %1973 = vmatpush1.msra.mxu0 0.0
        %1974 = vmatprep.subr.mxu0 0.0
        %1975 = vmatpush1.msra.mxu0 0.0
        %1976 = vmatprep.subr.mxu0 0.0
        %1977 = vmatpush1.msra.mxu0 0.0
        %1978 = vmatprep.subr.mxu0 0.0
        %1979 = vmatpush1.msra.mxu0 0.0
        %1980 = vmatprep.subr.mxu0 0.0
        %1981 = vmatpush1.msra.mxu0 0.0
        %1982 = vmatprep.subr.mxu0 0.0
        %1983 = vmatpush1.msra.mxu0 0.0
        %1984 = vmatprep.subr.mxu0 0.0
        %1985 = vmatpush1.msra.mxu0 0.0
        %1986 = vmatprep.subr.mxu0 0.0
        %1987 = vmatpush1.msra.mxu0 0.0
        %1988 = vmatprep.subr.mxu0 0.0
        %1989 = vmatpush1.msra.mxu0 0.0
        %1990 = vmatprep.subr.mxu0 0.0
        %1991 = vmatpush1.msra.mxu0 0.0
        %1992 = vmatprep.subr.mxu0 0.0
        %1993 = vmatpush1.msra.mxu0 0.0
        %1994 = vmatprep.subr.mxu0 0.0
        %1995 = vmatpush1.msra.mxu0 0.0
        %1996 = vmatprep.subr.mxu0 0.0
        %1997 = vmatpush1.msra.mxu0 0.0
        %1998 = vmatprep.subr.mxu0 0.0
        %1999 = vmatpush1.msra.mxu0 0.0
        %2000 = vmatprep.subr.mxu0 0.0
        %2001 = vmatpush1.msra.mxu0 %v1965
        %2002 = vmatprep.subr.mxu0 0.0
        %2003 = vmatpush2.msra.mxu0 0.0
        %2004 = vmatprep.subr.mxu0 0.0
        %2005 = vmatpush2.msra.mxu0 0.0
        %2006 = vmatprep.subr.mxu0 0.0
        %2007 = vmatpush2.msra.mxu0 0.0
        %2008 = vmatprep.subr.mxu0 0.0
        %2009 = vmatpush2.msra.mxu0 0.0
        %2010 = vmatprep.subr.mxu0 0.0
        %2011 = vmatpush2.msra.mxu0 0.0
        %2012 = vmatprep.subr.mxu0 0.0
        %2013 = vmatpush2.msra.mxu0 0.0
        %2014 = vmatprep.subr.mxu0 0.0
        %2015 = vmatpush2.msra.mxu0 0.0
        %2016 = vmatprep.subr.mxu0 0.0
        %2017 = vmatpush2.msra.mxu0 0.0
        %2018 = vmatprep.subr.mxu0 0.0
        %2019 = vmatpush2.msra.mxu0 0.0
        %2020 = vmatprep.subr.mxu0 0.0
        %2021 = vmatpush2.msra.mxu0 0.0
        %2022 = vmatprep.subr.mxu0 0.0
        %2023 = vmatpush2.msra.mxu0 0.0
        %2024 = vmatprep.subr.mxu0 0.0
        %2025 = vmatpush2.msra.mxu0 0.0
        %2026 = vmatprep.subr.mxu0 0.0
        %2027 = vmatpush2.msra.mxu0 0.0
        %2028 = vmatprep.subr.mxu0 0.0
        %2029 = vmatpush2.msra.mxu0 0.0
        %2030 = vmatprep.subr.mxu0 0.0
        %2031 = vmatpush2.msra.mxu0 0.0
        %2032 = vmatprep.subr.mxu0 0.0
        %2033 = vmatpush2.msra.mxu0 0.0
        %2034 = vmatprep.mubr.f32.mxu0 0.0
        %2035 = vmatmul.mubr.f32.gmra.mxu0 %v1968
        %v2036 = vpop.f32.mrf.mxu0
        %v2037 = vadd.f32 0.0, %v2036
        %v2038 = vpop.f32.mrf.mxu0
        %2039 = vdwg.mxu0
        %2040 = vrot.lane.b32.xlu0 %v653, 16
        %v2041 = vpop.permute.xlu0 %2040
        %2042 = vrot.lane.b32.xlu0 %v764, 16
        %v2043 = vpop.permute.xlu0 %2042
        %v2044 = vsel %vm880, %v2041, 0
        %v2046 = vsel %vm880, %v2043, 0
        %2048 = vmatprep.subr.mxu0 0.0
        %2049 = vmatpush1.xpose.msra.mxu0 0.0
        %2050 = vmatprep.subr.mxu0 0.0
        %2051 = vmatpush1.xpose.msra.mxu0 0.0
        %2052 = vmatprep.subr.mxu0 0.0
        %2053 = vmatpush1.xpose.msra.mxu0 0.0
        %2054 = vmatprep.subr.mxu0 0.0
        %2055 = vmatpush1.xpose.msra.mxu0 0.0
        %2056 = vmatprep.subr.mxu0 0.0
        %2057 = vmatpush1.xpose.msra.mxu0 0.0
        %2058 = vmatprep.subr.mxu0 0.0
        %2059 = vmatpush1.xpose.msra.mxu0 0.0
        %2060 = vmatprep.subr.mxu0 0.0
        %2061 = vmatpush1.xpose.msra.mxu0 0.0
        %2062 = vmatprep.subr.mxu0 0.0
        %2063 = vmatpush1.xpose.msra.mxu0 0.0
        %2064 = vmatprep.subr.mxu0 0.0
        %2065 = vmatpush1.xpose.msra.mxu0 0.0
        %2066 = vmatprep.subr.mxu0 0.0
        %2067 = vmatpush1.xpose.msra.mxu0 0.0
        %2068 = vmatprep.subr.mxu0 0.0
        %2069 = vmatpush1.xpose.msra.mxu0 0.0
        %2070 = vmatprep.subr.mxu0 0.0
        %2071 = vmatpush1.xpose.msra.mxu0 0.0
        %2072 = vmatprep.subr.mxu0 0.0
        %2073 = vmatpush1.xpose.msra.mxu0 0.0
        %2074 = vmatprep.subr.mxu0 0.0
        %2075 = vmatpush1.xpose.msra.mxu0 0.0
        %2076 = vmatprep.subr.mxu0 0.0
        %2077 = vmatpush1.xpose.msra.mxu0 0.0
        %2078 = vmatprep.subr.mxu0 0.0
        %2079 = vmatpush1.xpose.msra.mxu0 %v2046
        %2080 = vmatprep.subr.mxu0 0.0
        %2081 = vmatpush2.xpose.msra.mxu0 0.0
        %2082 = vmatprep.subr.mxu0 0.0
        %2083 = vmatpush2.xpose.msra.mxu0 0.0
        %2084 = vmatprep.subr.mxu0 0.0
        %2085 = vmatpush2.xpose.msra.mxu0 0.0
        %2086 = vmatprep.subr.mxu0 0.0
        %2087 = vmatpush2.xpose.msra.mxu0 0.0
        %2088 = vmatprep.subr.mxu0 0.0
        %2089 = vmatpush2.xpose.msra.mxu0 0.0
        %2090 = vmatprep.subr.mxu0 0.0
        %2091 = vmatpush2.xpose.msra.mxu0 0.0
        %2092 = vmatprep.subr.mxu0 0.0
        %2093 = vmatpush2.xpose.msra.mxu0 0.0
        %2094 = vmatprep.subr.mxu0 0.0
        %2095 = vmatpush2.xpose.msra.mxu0 0.0
        %2096 = vmatprep.subr.mxu0 0.0
        %2097 = vmatpush2.xpose.msra.mxu0 0.0
        %2098 = vmatprep.subr.mxu0 0.0
        %2099 = vmatpush2.xpose.msra.mxu0 0.0
        %2100 = vmatprep.subr.mxu0 0.0
        %2101 = vmatpush2.xpose.msra.mxu0 0.0
        %2102 = vmatprep.subr.mxu0 0.0
        %2103 = vmatpush2.xpose.msra.mxu0 0.0
        %2104 = vmatprep.subr.mxu0 0.0
        %2105 = vmatpush2.xpose.msra.mxu0 0.0
        %2106 = vmatprep.subr.mxu0 0.0
        %2107 = vmatpush2.xpose.msra.mxu0 0.0
        %2108 = vmatprep.subr.mxu0 0.0
        %2109 = vmatpush2.xpose.msra.mxu0 0.0
        %2110 = vmatprep.subr.mxu0 0.0
        %2111 = vmatpush2.xpose.msra.mxu0 0.0
        %2112 = vmatprep.mubr.f32.mxu0 0.0
        %2113 = vmatmul.mubr.f32.gmra.mxu0 %v2044
        %v2114 = vpop.f32.mrf.mxu0
        %v2115 = vadd.f32 0.0, %v2114
        %v2116 = vpop.f32.mrf.mxu0
        %2117 = vdwg.mxu0
        %v2118 = vmul.f32 %v2115, 0.25
        %v2119 = vsel %vm958, %v2118, -inf
        %2120 = vmax.xlane.f32.xlu0 %v2119
        %v2121 = vpop.xlane.xlu0 %2120
        %v2122 = vsub.f32 %v2118, %v2121
        %v2123 = vmul.f32 %v2122, 1.442695
        %v2124 = vpow.pop %v2123
        %v2125 = vsel %vm958, %v2124, 0.0
        %2126 = vadd.xlane.f32.xlu0 %v2125
        %v2127 = vpop.xlane.xlu0 %2126
        %v2128 = vrcp.pop %v2127
        %v2129 = vmul.f32 %v2124, %v2128
        %2130 = vrot.lane.b32.xlu0 %v875, 16
        %v2131 = vpop.permute.xlu0 %2130
        %v2134 = vsel %vm958, %v2129, 0
        %2136 = vmatprep.subr.mxu0 0.0
        %2137 = vmatpush1.msra.mxu0 0.0
        %2138 = vmatprep.subr.mxu0 0.0
        %2139 = vmatpush1.msra.mxu0 0.0
        %2140 = vmatprep.subr.mxu0 0.0
        %2141 = vmatpush1.msra.mxu0 0.0
        %2142 = vmatprep.subr.mxu0 0.0
        %2143 = vmatpush1.msra.mxu0 0.0
        %2144 = vmatprep.subr.mxu0 0.0
        %2145 = vmatpush1.msra.mxu0 0.0
        %2146 = vmatprep.subr.mxu0 0.0
        %2147 = vmatpush1.msra.mxu0 0.0
        %2148 = vmatprep.subr.mxu0 0.0
        %2149 = vmatpush1.msra.mxu0 0.0
        %2150 = vmatprep.subr.mxu0 0.0
        %2151 = vmatpush1.msra.mxu0 0.0
        %2152 = vmatprep.subr.mxu0 0.0
        %2153 = vmatpush1.msra.mxu0 0.0
        %2154 = vmatprep.subr.mxu0 0.0
        %2155 = vmatpush1.msra.mxu0 0.0
        %2156 = vmatprep.subr.mxu0 0.0
        %2157 = vmatpush1.msra.mxu0 0.0
        %2158 = vmatprep.subr.mxu0 0.0
        %2159 = vmatpush1.msra.mxu0 0.0
        %2160 = vmatprep.subr.mxu0 0.0
        %2161 = vmatpush1.msra.mxu0 0.0
        %2162 = vmatprep.subr.mxu0 0.0
        %2163 = vmatpush1.msra.mxu0 0.0
        %2164 = vmatprep.subr.mxu0 0.0
        %2165 = vmatpush1.msra.mxu0 0.0
        %2166 = vmatprep.subr.mxu0 0.0
        %2167 = vmatpush1.msra.mxu0 %v2131
        %2168 = vmatprep.subr.mxu0 0.0
        %2169 = vmatpush2.msra.mxu0 0.0
        %2170 = vmatprep.subr.mxu0 0.0
        %2171 = vmatpush2.msra.mxu0 0.0
        %2172 = vmatprep.subr.mxu0 0.0
        %2173 = vmatpush2.msra.mxu0 0.0
        %2174 = vmatprep.subr.mxu0 0.0
        %2175 = vmatpush2.msra.mxu0 0.0
        %2176 = vmatprep.subr.mxu0 0.0
        %2177 = vmatpush2.msra.mxu0 0.0
        %2178 = vmatprep.subr.mxu0 0.0
        %2179 = vmatpush2.msra.mxu0 0.0
        %2180 = vmatprep.subr.mxu0 0.0
        %2181 = vmatpush2.msra.mxu0 0.0
        %2182 = vmatprep.subr.mxu0 0.0
        %2183 = vmatpush2.msra.mxu0 0.0
        %2184 = vmatprep.subr.mxu0 0.0
        %2185 = vmatpush2.msra.mxu0 0.0
        %2186 = vmatprep.subr.mxu0 0.0
        %2187 = vmatpush2.msra.mxu0 0.0
        %2188 = vmatprep.subr.mxu0 0.0
        %2189 = vmatpush2.msra.mxu0 0.0
        %2190 = vmatprep.subr.mxu0 0.0
        %2191 = vmatpush2.msra.mxu0 0.0
        %2192 = vmatprep.subr.mxu0 0.0
        %2193 = vmatpush2.msra.mxu0 0.0
        %2194 = vmatprep.subr.mxu0 0.0
        %2195 = vmatpush2.msra.mxu0 0.0
        %2196 = vmatprep.subr.mxu0 0.0
        %2197 = vmatpush2.msra.mxu0 0.0
        %2198 = vmatprep.subr.mxu0 0.0
        %2199 = vmatpush2.msra.mxu0 0.0
        %2200 = vmatprep.mubr.f32.mxu0 0.0
        %2201 = vmatmul.mubr.f32.gmra.mxu0 %v2134
        %v2202 = vpop.f32.mrf.mxu0
        %v2203 = vadd.f32 0.0, %v2202
        %v2204 = vpop.f32.mrf.mxu0
        %2205 = vdwg.mxu0
        %2207 = vrot.lane.b32.xlu0 %v1207, 16
        %v2208 = vpop.permute.xlu0 %2207
        %2211 = vrot.lane.b32.xlu0 %v1373, 32
        %v2212 = vpop.permute.xlu0 %2211
        %2215 = vrot.lane.b32.xlu0 %v1539, 48
        %v2216 = vpop.permute.xlu0 %2215
        %2219 = vrot.lane.b32.xlu0 %v1705, 64
        %v2220 = vpop.permute.xlu0 %2219
        %2223 = vrot.lane.b32.xlu0 %v1871, 80
        %v2224 = vpop.permute.xlu0 %2223
        %2227 = vrot.lane.b32.xlu0 %v2037, 96
        %v2228 = vpop.permute.xlu0 %2227
        %2231 = vrot.lane.b32.xlu0 %v2203, 112
        %v2232 = vpop.permute.xlu0 %2231
        %v2234 = vsel %vm880, %v1040, %v2208
        %vm2235 = vcmask 261120
        %v2236 = vsel %vm2235, %v2234, %v2212
        %vm2237 = vcmask 392192
        %v2238 = vsel %vm2237, %v2236, %v2216
        %vm2239 = vcmask 523264
        %v2240 = vsel %vm2239, %v2238, %v2220
        %vm2241 = vcmask 654336
        %v2242 = vsel %vm2241, %v2240, %v2224
        %vm2243 = vcmask 785408
        %v2244 = vsel %vm2243, %v2242, %v2228
        %vm2245 = vcmask 916480
        %v2246 = vsel %vm2245, %v2244, %v2232
        %v2247 = vpack.c.bf16 %v2246, %v2246
        %v2248 = vld [vmem:[%s7] sm:$0xf]
        %v2249 = vld [vmem:[%s7 + $0x4] sm:$0xf]
        %v2250 = vld [vmem:[%s7 + $0x8] sm:$0xf]
        %v2251 = vld [vmem:[%s7 + $0xc] sm:$0xf]
        %v2252 = vld [vmem:[%s7 + $0x10] sm:$0xf]
        %v2253 = vld [vmem:[%s7 + $0x14] sm:$0xf]
        %v2254 = vld [vmem:[%s7 + $0x18] sm:$0xf]
        %v2255 = vld [vmem:[%s7 + $0x1c] sm:$0xf]
        %v2256 = vld [vmem:[%s7 + $0x20] sm:$0xf]
        %v2257 = vld [vmem:[%s7 + $0x24] sm:$0xf]
        %v2258 = vld [vmem:[%s7 + $0x28] sm:$0xf]
        %v2259 = vld [vmem:[%s7 + $0x2c] sm:$0xf]
        %v2260 = vld [vmem:[%s7 + $0x30] sm:$0xf]
        %v2261 = vld [vmem:[%s7 + $0x34] sm:$0xf]
        %v2262 = vld [vmem:[%s7 + $0x38] sm:$0xf]
        %v2263 = vld [vmem:[%s7 + $0x3c] sm:$0xf]
        %v2264 = vld [vmem:[%s8] sm:$0x1]
        %v2266 = vlaneseq
        %v2267 = vshrl.u32 %v2266, 7
        %v2268 = vsub.s32 0, %v2267
        %v2269 = vrot.slane %v2264, %v2268
        %v2287 = vunpack.c.l.b16 %v2248
        %v2288 = vunpack.c.l.b16 %v2249
        %v2289 = vunpack.c.l.b16 %v2250
        %v2290 = vunpack.c.l.b16 %v2251
        %v2291 = vunpack.c.l.b16 %v2252
        %v2292 = vunpack.c.l.b16 %v2253
        %v2293 = vunpack.c.l.b16 %v2254
        %v2294 = vunpack.c.l.b16 %v2255
        %v2295 = vunpack.c.l.b16 %v2256
        %v2296 = vunpack.c.l.b16 %v2257
        %v2297 = vunpack.c.l.b16 %v2258
        %v2298 = vunpack.c.l.b16 %v2259
        %v2299 = vunpack.c.l.b16 %v2260
        %v2300 = vunpack.c.l.b16 %v2261
        %v2301 = vunpack.c.l.b16 %v2262
        %v2302 = vunpack.c.l.b16 %v2263
        %v2303 = vpack.c.b16 %v2288, %v2287
        %v2304 = vpack.c.b16 %v2290, %v2289
        %v2305 = vpack.c.b16 %v2292, %v2291
        %v2306 = vpack.c.b16 %v2294, %v2293
        %v2307 = vpack.c.b16 %v2296, %v2295
        %v2308 = vpack.c.b16 %v2298, %v2297
        %v2309 = vpack.c.b16 %v2300, %v2299
        %v2310 = vpack.c.b16 %v2302, %v2301
        %2319 = vmatprep.subr.bf16.mxu0 0
        %2320 = vmatpush1.bf16.msra.mxu0 %v2310
        %2321 = vmatprep.subr.bf16.mxu0 0
        %2322 = vmatpush1.bf16.msra.mxu0 %v2309
        %2323 = vmatprep.subr.bf16.mxu0 0
        %2324 = vmatpush1.bf16.msra.mxu0 %v2308
        %2325 = vmatprep.subr.bf16.mxu0 0
        %2326 = vmatpush1.bf16.msra.mxu0 %v2307
        %2327 = vmatprep.subr.bf16.mxu0 0
        %2328 = vmatpush1.bf16.msra.mxu0 %v2306
        %2329 = vmatprep.subr.bf16.mxu0 0
        %2330 = vmatpush1.bf16.msra.mxu0 %v2305
        %2331 = vmatprep.subr.bf16.mxu0 0
        %2332 = vmatpush1.bf16.msra.mxu0 %v2304
        %2333 = vmatprep.subr.bf16.mxu0 0
        %2334 = vmatpush1.bf16.msra.mxu0 %v2303
        %2335 = vmatprep.subr.bf16.mxu0 0
        %2336 = vmatpush2.bf16.msra.mxu0 0
        %2337 = vmatprep.subr.bf16.mxu0 0
        %2338 = vmatpush2.bf16.msra.mxu0 0
        %2339 = vmatprep.subr.bf16.mxu0 0
        %2340 = vmatpush2.bf16.msra.mxu0 0
        %2341 = vmatprep.subr.bf16.mxu0 0
        %2342 = vmatpush2.bf16.msra.mxu0 0
        %2343 = vmatprep.subr.bf16.mxu0 0
        %2344 = vmatpush2.bf16.msra.mxu0 0
        %2345 = vmatprep.subr.bf16.mxu0 0
        %2346 = vmatpush2.bf16.msra.mxu0 0
        %2347 = vmatprep.subr.bf16.mxu0 0
        %2348 = vmatpush2.bf16.msra.mxu0 0
        %2349 = vmatprep.subr.bf16.mxu0 0
        %2350 = vmatpush2.bf16.msra.mxu0 0
        %2351 = vmatprep.mubr.bf16.mxu0 0
        %2352 = vmatmul.mubr.bf16.gmra.mxu0 %v2247
        %v2353 = vpop.f32.mrf.mxu0
        %v2354 = vadd.f32 %v2269, %v2353
        %v2355 = vpop.f32.mrf.mxu0
        %v2356 = vpop.f32.mrf.mxu0
        %v2357 = vpop.f32.mrf.mxu0
        %2358 = vdwg.mxu0
        %v2359 = vadd.f32 %v545, %v2354
        %v2360 = vld [vmem:[%s9] sm:$0x1]
        %v2361 = vld [vmem:[%s10] sm:$0x1]
        %2362 = vadd.xlane.f32.xlu0 %v2359
        %v2363 = vpop.xlane.xlu0 %2362
        %v2364 = vrcp.pop 128.0
        %v2365 = vmul.f32 %v2363, %v2364
        %v2366 = vsub.f32 %v2359, %v2365
        %v2367 = vmul.f32 %v2366, %v2366
        %2368 = vadd.xlane.f32.xlu0 %v2367
        %v2369 = vpop.xlane.xlu0 %2368
        %v2370 = vmul.f32 %v2369, %v2364
        %v2371 = vadd.f32 %v2370, 1e-05
        %v2372 = vrsqrt.pop %v2371
        %v2373 = vmul.f32 %v2366, %v2372
        %v2375 = vlaneseq
        %v2376 = vshrl.u32 %v2375, 7
        %v2377 = vsub.s32 0, %v2376
        %v2378 = vrot.slane %v2360, %v2377
        %v2380 = vmul.f32 %v2373, %v2378
        %v2382 = vlaneseq
        %v2383 = vshrl.u32 %v2382, 7
        %v2384 = vsub.s32 0, %v2383
        %v2385 = vrot.slane %v2361, %v2384
        %v2387 = vadd.f32 %v2380, %v2385
        %v2388 = vpack.c.bf16 %v2387, %v2387
        %v2389 = vld [vmem:[%s11] sm:$0xff]
        %v2390 = vld [vmem:[%s11 + $0x8] sm:$0xff]
        %v2391 = vld [vmem:[%s11 + $0x10] sm:$0xff]
        %v2392 = vld [vmem:[%s11 + $0x18] sm:$0xff]
        %v2393 = vld [vmem:[%s11 + $0x20] sm:$0xff]
        %v2394 = vld [vmem:[%s11 + $0x28] sm:$0xff]
        %v2395 = vld [vmem:[%s11 + $0x30] sm:$0xff]
        %v2396 = vld [vmem:[%s11 + $0x38] sm:$0xff]
        %v2397 = vld [vmem:[%s11 + $0x40] sm:$0xff]
        %v2398 = vld [vmem:[%s11 + $0x48] sm:$0xff]
        %v2399 = vld [vmem:[%s11 + $0x50] sm:$0xff]
        %v2400 = vld [vmem:[%s11 + $0x58] sm:$0xff]
        %v2401 = vld [vmem:[%s11 + $0x60] sm:$0xff]
        %v2402 = vld [vmem:[%s11 + $0x68] sm:$0xff]
        %v2403 = vld [vmem:[%s11 + $0x70] sm:$0xff]
        %v2404 = vld [vmem:[%s11 + $0x78] sm:$0xff]
        %v2405 = vld [vmem:[%s11 + $0x80] sm:$0xff]
        %v2406 = vld [vmem:[%s11 + $0x88] sm:$0xff]
        %v2407 = vld [vmem:[%s11 + $0x90] sm:$0xff]
        %v2408 = vld [vmem:[%s11 + $0x98] sm:$0xff]
        %v2409 = vld [vmem:[%s11 + $0xa0] sm:$0xff]
        %v2410 = vld [vmem:[%s11 + $0xa8] sm:$0xff]
        %v2411 = vld [vmem:[%s11 + $0xb0] sm:$0xff]
        %v2412 = vld [vmem:[%s11 + $0xb8] sm:$0xff]
        %v2413 = vld [vmem:[%s11 + $0xc0] sm:$0xff]
        %v2414 = vld [vmem:[%s11 + $0xc8] sm:$0xff]
        %v2415 = vld [vmem:[%s11 + $0xd0] sm:$0xff]
        %v2416 = vld [vmem:[%s11 + $0xd8] sm:$0xff]
        %v2417 = vld [vmem:[%s11 + $0xe0] sm:$0xff]
        %v2418 = vld [vmem:[%s11 + $0xe8] sm:$0xff]
        %v2419 = vld [vmem:[%s11 + $0xf0] sm:$0xff]
        %v2420 = vld [vmem:[%s11 + $0xf8] sm:$0xff]
        %v2421 = vld [vmem:[%s12] sm:$0xf]
        %v2423 = vlaneseq
        %v2424 = vshrl.u32 %v2423, 7
        %v2425 = vsub.s32 0, %v2424
        %v2426 = vrot.slane %v2421, %v2425
        %v2427 = vlaneseq
        %v2428 = vshrl.u32 %v2427, 7
        %v2429 = vsub.s32 1, %v2428
        %v2430 = vrot.slane %v2421, %v2429
        %v2431 = vlaneseq
        %v2432 = vshrl.u32 %v2431, 7
        %v2433 = vsub.s32 2, %v2432
        %v2434 = vrot.slane %v2421, %v2433
        %v2435 = vlaneseq
        %v2436 = vshrl.u32 %v2435, 7
        %v2437 = vsub.s32 3, %v2436
        %v2438 = vrot.slane %v2421, %v2437
        %v2475 = vunpack.c.l.b16 %v2389
        %v2476 = vunpack.c.h.b16 %v2389
        %v2477 = vunpack.c.l.b16 %v2390
        %v2478 = vunpack.c.h.b16 %v2390
        %v2479 = vunpack.c.l.b16 %v2391
        %v2480 = vunpack.c.h.b16 %v2391
        %v2481 = vunpack.c.l.b16 %v2392
        %v2482 = vunpack.c.h.b16 %v2392
        %v2483 = vunpack.c.l.b16 %v2393
        %v2484 = vunpack.c.h.b16 %v2393
        %v2485 = vunpack.c.l.b16 %v2394
        %v2486 = vunpack.c.h.b16 %v2394
        %v2487 = vunpack.c.l.b16 %v2395
        %v2488 = vunpack.c.h.b16 %v2395
        %v2489 = vunpack.c.l.b16 %v2396
        %v2490 = vunpack.c.h.b16 %v2396
        %v2491 = vunpack.c.l.b16 %v2397
        %v2492 = vunpack.c.h.b16 %v2397
        %v2493 = vunpack.c.l.b16 %v2398
        %v2494 = vunpack.c.h.b16 %v2398
        %v2495 = vunpack.c.l.b16 %v2399
        %v2496 = vunpack.c.h.b16 %v2399
        %v2497 = vunpack.c.l.b16 %v2400
        %v2498 = vunpack.c.h.b16 %v2400
        %v2499 = vunpack.c.l.b16 %v2401
        %v2500 = vunpack.c.h.b16 %v2401
        %v2501 = vunpack.c.l.b16 %v2402
        %v2502 = vunpack.c.h.b16 %v2402
        %v2503 = vunpack.c.l.b16 %v2403
        %v2504 = vunpack.c.h.b16 %v2403
        %v2505 = vunpack.c.l.b16 %v2404
        %v2506 = vunpack.c.h.b16 %v2404
        %v2507 = vunpack.c.l.b16 %v2405
        %v2508 = vunpack.c.h.b16 %v2405
        %v2509 = vunpack.c.l.b16 %v2406
        %v2510 = vunpack.c.h.b16 %v2406
        %v2511 = vunpack.c.l.b16 %v2407
        %v2512 = vunpack.c.h.b16 %v2407
        %v2513 = vunpack.c.l.b16 %v2408
        %v2514 = vunpack.c.h.b16 %v2408
        %v2515 = vunpack.c.l.b16 %v2409
        %v2516 = vunpack.c.h.b16 %v2409
        %v2517 = vunpack.c.l.b16 %v2410
        %v2518 = vunpack.c.h.b16 %v2410
        %v2519 = vunpack.c.l.b16 %v2411
        %v2520 = vunpack.c.h.b16 %v2411
        %v2521 = vunpack.c.l.b16 %v2412
        %v2522 = vunpack.c.h.b16 %v2412
        %v2523 = vunpack.c.l.b16 %v2413
        %v2524 = vunpack.c.h.b16 %v2413
        %v2525 = vunpack.c.l.b16 %v2414
        %v2526 = vunpack.c.h.b16 %v2414
        %v2527 = vunpack.c.l.b16 %v2415
        %v2528 = vunpack.c.h.b16 %v2415
        %v2529 = vunpack.c.l.b16 %v2416
        %v2530 = vunpack.c.h.b16 %v2416
        %v2531 = vunpack.c.l.b16 %v2417
        %v2532 = vunpack.c.h.b16 %v2417
        %v2533 = vunpack.c.l.b16 %v2418
        %v2534 = vunpack.c.h.b16 %v2418
        %v2535 = vunpack.c.l.b16 %v2419
        %v2536 = vunpack.c.h.b16 %v2419
        %v2537 = vunpack.c.l.b16 %v2420
        %v2538 = vunpack.c.h.b16 %v2420
        %v2539 = vpack.c.b16 %v2479, %v2475
        %v2540 = vpack.c.b16 %v2480, %v2476
        %v2541 = vpack.c.b16 %v2481, %v2477
        %v2542 = vpack.c.b16 %v2482, %v2478
        %v2543 = vpack.c.b16 %v2487, %v2483
        %v2544 = vpack.c.b16 %v2488, %v2484
        %v2545 = vpack.c.b16 %v2489, %v2485
        %v2546 = vpack.c.b16 %v2490, %v2486
        %v2547 = vpack.c.b16 %v2495, %v2491
        %v2548 = vpack.c.b16 %v2496, %v2492
        %v2549 = vpack.c.b16 %v2497, %v2493
        %v2550 = vpack.c.b16 %v2498, %v2494
        %v2551 = vpack.c.b16 %v2503, %v2499
        %v2552 = vpack.c.b16 %v2504, %v2500
        %v2553 = vpack.c.b16 %v2505, %v2501
        %v2554 = vpack.c.b16 %v2506, %v2502
        %v2555 = vpack.c.b16 %v2511, %v2507
        %v2556 = vpack.c.b16 %v2512, %v2508
        %v2557 = vpack.c.b16 %v2513, %v2509
        %v2558 = vpack.c.b16 %v2514, %v2510
        %v2559 = vpack.c.b16 %v2519, %v2515
        %v2560 = vpack.c.b16 %v2520, %v2516
        %v2561 = vpack.c.b16 %v2521, %v2517
        %v2562 = vpack.c.b16 %v2522, %v2518
        %v2563 = vpack.c.b16 %v2527, %v2523
        %v2564 = vpack.c.b16 %v2528, %v2524
        %v2565 = vpack.c.b16 %v2529, %v2525
        %v2566 = vpack.c.b16 %v2530, %v2526
        %v2567 = vpack.c.b16 %v2535, %v2531
        %v2568 = vpack.c.b16 %v2536, %v2532
        %v2569 = vpack.c.b16 %v2537, %v2533
        %v2570 = vpack.c.b16 %v2538, %v2534
        %2603 = vmatprep.subr.bf16.mxu0 %v2568
        %2604 = vmatpush1.bf16.msra.mxu0 %v2567
        %2605 = vmatprep.subr.bf16.mxu0 %v2564
        %2606 = vmatpush1.bf16.msra.mxu0 %v2563
        %2607 = vmatprep.subr.bf16.mxu0 %v2560
        %2608 = vmatpush1.bf16.msra.mxu0 %v2559
        %2609 = vmatprep.subr.bf16.mxu0 %v2556
        %2610 = vmatpush1.bf16.msra.mxu0 %v2555
        %2611 = vmatprep.subr.bf16.mxu0 %v2552
        %2612 = vmatpush1.bf16.msra.mxu0 %v2551
        %2613 = vmatprep.subr.bf16.mxu0 %v2548
        %2614 = vmatpush1.bf16.msra.mxu0 %v2547
        %2615 = vmatprep.subr.bf16.mxu0 %v2544
        %2616 = vmatpush1.bf16.msra.mxu0 %v2543
        %2617 = vmatprep.subr.bf16.mxu0 %v2540
        %2618 = vmatpush1.bf16.msra.mxu0 %v2539
        %2619 = vmatprep.subr.bf16.mxu0 0
        %2620 = vmatpush2.bf16.msra.mxu0 0
        %2621 = vmatprep.subr.bf16.mxu0 0
        %2622 = vmatpush2.bf16.msra.mxu0 0
        %2623 = vmatprep.subr.bf16.mxu0 0
        %2624 = vmatpush2.bf16.msra.mxu0 0
        %2625 = vmatprep.subr.bf16.mxu0 0
        %2626 = vmatpush2.bf16.msra.mxu0 0
        %2627 = vmatprep.subr.bf16.mxu0 0
        %2628 = vmatpush2.bf16.msra.mxu0 0
        %2629 = vmatprep.subr.bf16.mxu0 0
        %2630 = vmatpush2.bf16.msra.mxu0 0
        %2631 = vmatprep.subr.bf16.mxu0 0
        %2632 = vmatpush2.bf16.msra.mxu0 0
        %2633 = vmatprep.subr.bf16.mxu0 0
        %2634 = vmatpush2.bf16.msra.mxu0 0
        %2635 = vmatprep.mubr.bf16.mxu0 0
        %2636 = vmatmul.mubr.bf16.gmra.mxu0 %v2388
        %v2637 = vpop.f32.mrf.mxu0
        %v2638 = vadd.f32 %v2426, %v2637
        %v2639 = vpop.f32.mrf.mxu0
        %v2640 = vadd.f32 %v2430, %v2639
        %v2641 = vpop.f32.mrf.mxu0
        %v2642 = vpop.f32.mrf.mxu0
        %2643 = vdwg.mxu0
        %2644 = vmatprep.subr.bf16.mxu0 %v2570
        %2645 = vmatpush1.bf16.msra.mxu0 %v2569
        %2646 = vmatprep.subr.bf16.mxu0 %v2566
        %2647 = vmatpush1.bf16.msra.mxu0 %v2565
        %2648 = vmatprep.subr.bf16.mxu0 %v2562
        %2649 = vmatpush1.bf16.msra.mxu0 %v2561
        %2650 = vmatprep.subr.bf16.mxu0 %v2558
        %2651 = vmatpush1.bf16.msra.mxu0 %v2557
        %2652 = vmatprep.subr.bf16.mxu0 %v2554
        %2653 = vmatpush1.bf16.msra.mxu0 %v2553
        %2654 = vmatprep.subr.bf16.mxu0 %v2550
        %2655 = vmatpush1.bf16.msra.mxu0 %v2549
        %2656 = vmatprep.subr.bf16.mxu0 %v2546
        %2657 = vmatpush1.bf16.msra.mxu0 %v2545
        %2658 = vmatprep.subr.bf16.mxu0 %v2542
        %2659 = vmatpush1.bf16.msra.mxu0 %v2541
        %2660 = vmatprep.subr.bf16.mxu0 0
        %2661 = vmatpush2.bf16.msra.mxu0 0
        %2662 = vmatprep.subr.bf16.mxu0 0
        %2663 = vmatpush2.bf16.msra.mxu0 0
        %2664 = vmatprep.subr.bf16.mxu0 0
        %2665 = vmatpush2.bf16.msra.mxu0 0
        %2666 = vmatprep.subr.bf16.mxu0 0
        %2667 = vmatpush2.bf16.msra.mxu0 0
        %2668 = vmatprep.subr.bf16.mxu0 0
        %2669 = vmatpush2.bf16.msra.mxu0 0
        %2670 = vmatprep.subr.bf16.mxu0 0
        %2671 = vmatpush2.bf16.msra.mxu0 0
        %2672 = vmatprep.subr.bf16.mxu0 0
        %2673 = vmatpush2.bf16.msra.mxu0 0
        %2674 = vmatprep.subr.bf16.mxu0 0
        %2675 = vmatpush2.bf16.msra.mxu0 0
        %2676 = vmatprep.mubr.bf16.mxu0 0
        %2677 = vmatmul.mubr.bf16.gmra.mxu0 %v2388
        %v2678 = vpop.f32.mrf.mxu0
        %v2679 = vadd.f32 %v2434, %v2678
        %v2680 = vpop.f32.mrf.mxu0
        %v2681 = vadd.f32 %v2438, %v2680
        %v2682 = vpop.f32.mrf.mxu0
        %v2683 = vpop.f32.mrf.mxu0
        %2684 = vdwg.mxu0
        %v2685 = vmul.f32 %v2638, 0.5
        %v2686 = vmul.f32 %v2640, 0.5
        %v2687 = vmul.f32 %v2679, 0.5
        %v2688 = vmul.f32 %v2681, 0.5
        %v2689 = vmul.f32 %v2638, 0.044715
        %v2690 = vmul.f32 %v2640, 0.044715
        %v2691 = vmul.f32 %v2679, 0.044715
        %v2692 = vmul.f32 %v2681, 0.044715
        %v2693 = vmul.f32 %v2689, %v2638
        %v2694 = vmul.f32 %v2690, %v2640
        %v2695 = vmul.f32 %v2691, %v2679
        %v2696 = vmul.f32 %v2692, %v2681
        %v2697 = vmul.f32 %v2693, %v2638
        %v2698 = vmul.f32 %v2694, %v2640
        %v2699 = vmul.f32 %v2695, %v2679
        %v2700 = vmul.f32 %v2696, %v2681
        %v2701 = vadd.f32 %v2638, %v2697
        %v2702 = vadd.f32 %v2640, %v2698
        %v2703 = vadd.f32 %v2679, %v2699
        %v2704 = vadd.f32 %v2681, %v2700
        %v2705 = vmul.f32 %v2701, 0.7978846
        %v2706 = vmul.f32 %v2702, 0.7978846
        %v2707 = vmul.f32 %v2703, 0.7978846
        %v2708 = vmul.f32 %v2704, 0.7978846
        %v2709 = vtanh.pop %v2705
        %v2710 = vtanh.pop %v2706
        %v2711 = vtanh.pop %v2707
        %v2712 = vtanh.pop %v2708
        %v2713 = vadd.f32 %v2709, 1.0
        %v2714 = vadd.f32 %v2710, 1.0
        %v2715 = vadd.f32 %v2711, 1.0
        %v2716 = vadd.f32 %v2712, 1.0
        %v2717 = vmul.f32 %v2685, %v2713
        %v2718 = vmul.f32 %v2686, %v2714
        %v2719 = vmul.f32 %v2687, %v2715
        %v2720 = vmul.f32 %v2688, %v2716
        %v2721 = vpack.c.bf16 %v2717, %v2717
        %v2722 = vpack.c.bf16 %v2718, %v2718
        %v2723 = vpack.c.bf16 %v2719, %v2719
        %v2724 = vpack.c.bf16 %v2720, %v2720
        %v2725 = vld [vmem:[%s13] sm:$0xf]
        %v2726 = vld [vmem:[%s13 + $0x4] sm:$0xf]
        %v2727 = vld [vmem:[%s13 + $0x8] sm:$0xf]
        %v2728 = vld [vmem:[%s13 + $0xc] sm:$0xf]
        %v2729 = vld [vmem:[%s13 + $0x10] sm:$0xf]
        %v2730 = vld [vmem:[%s13 + $0x14] sm:$0xf]
        %v2731 = vld [vmem:[%s13 + $0x18] sm:$0xf]
        %v2732 = vld [vmem:[%s13 + $0x1c] sm:$0xf]
        %v2733 = vld [vmem:[%s13 + $0x20] sm:$0xf]
        %v2734 = vld [vmem:[%s13 + $0x24] sm:$0xf]
        %v2735 = vld [vmem:[%s13 + $0x28] sm:$0xf]
        %v2736 = vld [vmem:[%s13 + $0x2c] sm:$0xf]
        %v2737 = vld [vmem:[%s13 + $0x30] sm:$0xf]
        %v2738 = vld [vmem:[%s13 + $0x34] sm:$0xf]
        %v2739 = vld [vmem:[%s13 + $0x38] sm:$0xf]
        %v2740 = vld [vmem:[%s13 + $0x3c] sm:$0xf]
        %v2741 = vld [vmem:[%s13 + $0x40] sm:$0xf]
        %v2742 = vld [vmem:[%s13 + $0x44] sm:$0xf]
        %v2743 = vld [vmem:[%s13 + $0x48] sm:$0xf]
        %v2744 = vld [vmem:[%s13 + $0x4c] sm:$0xf]
        %v2745 = vld [vmem:[%s13 + $0x50] sm:$0xf]
        %v2746 = vld [vmem:[%s13 + $0x54] sm:$0xf]
        %v2747 = vld [vmem:[%s13 + $0x58] sm:$0xf]
        %v2748 = vld [vmem:[%s13 + $0x5c] sm:$0xf]
        %v2749 = vld [vmem:[%s13 + $0x60] sm:$0xf]
        %v2750 = vld [vmem:[%s13 + $0x64] sm:$0xf]
        %v2751 = vld [vmem:[%s13 + $0x68] sm:$0xf]
        %v2752 = vld [vmem:[%s13 + $0x6c] sm:$0xf]
        %v2753 = vld [vmem:[%s13 + $0x70] sm:$0xf]
        %v2754 = vld [vmem:[%s13 + $0x74] sm:$0xf]
        %v2755 = vld [vmem:[%s13 + $0x78] sm:$0xf]
        %v2756 = vld [vmem:[%s13 + $0x7c] sm:$0xf]
        %v2757 = vld [vmem:[%s13 + $0x80] sm:$0xf]
        %v2758 = vld [vmem:[%s13 + $0x84] sm:$0xf]
        %v2759 = vld [vmem:[%s13 + $0x88] sm:$0xf]
        %v2760 = vld [vmem:[%s13 + $0x8c] sm:$0xf]
        %v2761 = vld [vmem:[%s13 + $0x90] sm:$0xf]
        %v2762 = vld [vmem:[%s13 + $0x94] sm:$0xf]
        %v2763 = vld [vmem:[%s13 + $0x98] sm:$0xf]
        %v2764 = vld [vmem:[%s13 + $0x9c] sm:$0xf]
        %v2765 = vld [vmem:[%s13 + $0xa0] sm:$0xf]
        %v2766 = vld [vmem:[%s13 + $0xa4] sm:$0xf]
        %v2767 = vld [vmem:[%s13 + $0xa8] sm:$0xf]
        %v2768 = vld [vmem:[%s13 + $0xac] sm:$0xf]
        %v2769 = vld [vmem:[%s13 + $0xb0] sm:$0xf]
        %v2770 = vld [vmem:[%s13 + $0xb4] sm:$0xf]
        %v2771 = vld [vmem:[%s13 + $0xb8] sm:$0xf]
        %v2772 = vld [vmem:[%s13 + $0xbc] sm:$0xf]
        %v2773 = vld [vmem:[%s13 + $0xc0] sm:$0xf]
        %v2774 = vld [vmem:[%s13 + $0xc4] sm:$0xf]
        %v2775 = vld [vmem:[%s13 + $0xc8] sm:$0xf]
        %v2776 = vld [vmem:[%s13 + $0xcc] sm:$0xf]
        %v2777 = vld [vmem:[%s13 + $0xd0] sm:$0xf]
        %v2778 = vld [vmem:[%s13 + $0xd4] sm:$0xf]
        %v2779 = vld [vmem:[%s13 + $0xd8] sm:$0xf]
        %v2780 = vld [vmem:[%s13 + $0xdc] sm:$0xf]
        %v2781 = vld [vmem:[%s13 + $0xe0] sm:$0xf]
        %v2782 = vld [vmem:[%s13 + $0xe4] sm:$0xf]
        %v2783 = vld [vmem:[%s13 + $0xe8] sm:$0xf]
        %v2784 = vld [vmem:[%s13 + $0xec] sm:$0xf]
        %v2785 = vld [vmem:[%s13 + $0xf0] sm:$0xf]
        %v2786 = vld [vmem:[%s13 + $0xf4] sm:$0xf]
        %v2787 = vld [vmem:[%s13 + $0xf8] sm:$0xf]
        %v2788 = vld [vmem:[%s13 + $0xfc] sm:$0xf]
        %v2789 = vld [vmem:[%s14] sm:$0x1]
        %v2791 = vlaneseq
        %v2792 = vshrl.u32 %v2791, 7
        %v2793 = vsub.s32 0, %v2792
        %v2794 = vrot.slane %v2789, %v2793
        %v2860 = vunpack.c.l.b16 %v2725
        %v2861 = vunpack.c.l.b16 %v2726
        %v2862 = vunpack.c.l.b16 %v2727
        %v2863 = vunpack.c.l.b16 %v2728
        %v2864 = vunpack.c.l.b16 %v2729
        %v2865 = vunpack.c.l.b16 %v2730
        %v2866 = vunpack.c.l.b16 %v2731
        %v2867 = vunpack.c.l.b16 %v2732
        %v2868 = vunpack.c.l.b16 %v2733
        %v2869 = vunpack.c.l.b16 %v2734
        %v2870 = vunpack.c.l.b16 %v2735
        %v2871 = vunpack.c.l.b16 %v2736
        %v2872 = vunpack.c.l.b16 %v2737
        %v2873 = vunpack.c.l.b16 %v2738
        %v2874 = vunpack.c.l.b16 %v2739
        %v2875 = vunpack.c.l.b16 %v2740
        %v2876 = vunpack.c.l.b16 %v2741
        %v2877 = vunpack.c.l.b16 %v2742
        %v2878 = vunpack.c.l.b16 %v2743
        %v2879 = vunpack.c.l.b16 %v2744
        %v2880 = vunpack.c.l.b16 %v2745
        %v2881 = vunpack.c.l.b16 %v2746
        %v2882 = vunpack.c.l.b16 %v2747
        %v2883 = vunpack.c.l.b16 %v2748
        %v2884 = vunpack.c.l.b16 %v2749
        %v2885 = vunpack.c.l.b16 %v2750
        %v2886 = vunpack.c.l.b16 %v2751
        %v2887 = vunpack.c.l.b16 %v2752
        %v2888 = vunpack.c.l.b16 %v2753
        %v2889 = vunpack.c.l.b16 %v2754
        %v2890 = vunpack.c.l.b16 %v2755
        %v2891 = vunpack.c.l.b16 %v2756
        %v2892 = vunpack.c.l.b16 %v2757
        %v2893 = vunpack.c.l.b16 %v2758
        %v2894 = vunpack.c.l.b16 %v2759
        %v2895 = vunpack.c.l.b16 %v2760
        %v2896 = vunpack.c.l.b16 %v2761
        %v2897 = vunpack.c.l.b16 %v2762
        %v2898 = vunpack.c.l.b16 %v2763
        %v2899 = vunpack.c.l.b16 %v2764
        %v2900 = vunpack.c.l.b16 %v2765
        %v2901 = vunpack.c.l.b16 %v2766
        %v2902 = vunpack.c.l.b16 %v2767
        %v2903 = vunpack.c.l.b16 %v2768
        %v2904 = vunpack.c.l.b16 %v2769
        %v2905 = vunpack.c.l.b16 %v2770
        %v2906 = vunpack.c.l.b16 %v2771
        %v2907 = vunpack.c.l.b16 %v2772
        %v2908 = vunpack.c.l.b16 %v2773
        %v2909 = vunpack.c.l.b16 %v2774
        %v2910 = vunpack.c.l.b16 %v2775
        %v2911 = vunpack.c.l.b16 %v2776
        %v2912 = vunpack.c.l.b16 %v2777
        %v2913 = vunpack.c.l.b16 %v2778
        %v2914 = vunpack.c.l.b16 %v2779
        %v2915 = vunpack.c.l.b16 %v2780
        %v2916 = vunpack.c.l.b16 %v2781
        %v2917 = vunpack.c.l.b16 %v2782
        %v2918 = vunpack.c.l.b16 %v2783
        %v2919 = vunpack.c.l.b16 %v2784
        %v2920 = vunpack.c.l.b16 %v2785
        %v2921 = vunpack.c.l.b16 %v2786
        %v2922 = vunpack.c.l.b16 %v2787
        %v2923 = vunpack.c.l.b16 %v2788
        %v2924 = vpack.c.b16 %v2861, %v2860
        %v2925 = vpack.c.b16 %v2863, %v2862
        %v2926 = vpack.c.b16 %v2865, %v2864
        %v2927 = vpack.c.b16 %v2867, %v2866
        %v2928 = vpack.c.b16 %v2869, %v2868
        %v2929 = vpack.c.b16 %v2871, %v2870
        %v2930 = vpack.c.b16 %v2873, %v2872
        %v2931 = vpack.c.b16 %v2875, %v2874
        %v2932 = vpack.c.b16 %v2877, %v2876
        %v2933 = vpack.c.b16 %v2879, %v2878
        %v2934 = vpack.c.b16 %v2881, %v2880
        %v2935 = vpack.c.b16 %v2883, %v2882
        %v2936 = vpack.c.b16 %v2885, %v2884
        %v2937 = vpack.c.b16 %v2887, %v2886
        %v2938 = vpack.c.b16 %v2889, %v2888
        %v2939 = vpack.c.b16 %v2891, %v2890
        %v2940 = vpack.c.b16 %v2893, %v2892
        %v2941 = vpack.c.b16 %v2895, %v2894
        %v2942 = vpack.c.b16 %v2897, %v2896
        %v2943 = vpack.c.b16 %v2899, %v2898
        %v2944 = vpack.c.b16 %v2901, %v2900
        %v2945 = vpack.c.b16 %v2903, %v2902
        %v2946 = vpack.c.b16 %v2905, %v2904
        %v2947 = vpack.c.b16 %v2907, %v2906
        %v2948 = vpack.c.b16 %v2909, %v2908
        %v2949 = vpack.c.b16 %v2911, %v2910
        %v2950 = vpack.c.b16 %v2913, %v2912
        %v2951 = vpack.c.b16 %v2915, %v2914
        %v2952 = vpack.c.b16 %v2917, %v2916
        %v2953 = vpack.c.b16 %v2919, %v2918
        %v2954 = vpack.c.b16 %v2921, %v2920
        %v2955 = vpack.c.b16 %v2923, %v2922
        %2988 = vmatprep.subr.bf16.mxu0 0
        %2989 = vmatpush1.bf16.msra.mxu0 %v2931
        %2990 = vmatprep.subr.bf16.mxu0 0
        %2991 = vmatpush1.bf16.msra.mxu0 %v2930
        %2992 = vmatprep.subr.bf16.mxu0 0
        %2993 = vmatpush1.bf16.msra.mxu0 %v2929
        %2994 = vmatprep.subr.bf16.mxu0 0
        %2995 = vmatpush1.bf16.msra.mxu0 %v2928
        %2996 = vmatprep.subr.bf16.mxu0 0
        %2997 = vmatpush1.bf16.msra.mxu0 %v2927
        %2998 = vmatprep.subr.bf16.mxu0 0
        %2999 = vmatpush1.bf16.msra.mxu0 %v2926
        %3000 = vmatprep.subr.bf16.mxu0 0
        %3001 = vmatpush1.bf16.msra.mxu0 %v2925
        %3002 = vmatprep.subr.bf16.mxu0 0
        %3003 = vmatpush1.bf16.msra.mxu0 %v2924
        %3004 = vmatprep.subr.bf16.mxu0 0
        %3005 = vmatpush2.bf16.msra.mxu0 %v2939
        %3006 = vmatprep.subr.bf16.mxu0 0
        %3007 = vmatpush2.bf16.msra.mxu0 %v2938
        %3008 = vmatprep.subr.bf16.mxu0 0
        %3009 = vmatpush2.bf16.msra.mxu0 %v2937
        %3010 = vmatprep.subr.bf16.mxu0 0
        %3011 = vmatpush2.bf16.msra.mxu0 %v2936
        %3012 = vmatprep.subr.bf16.mxu0 0
        %3013 = vmatpush2.bf16.msra.mxu0 %v2935
        %3014 = vmatprep.subr.bf16.mxu0 0
        %3015 = vmatpush2.bf16.msra.mxu0 %v2934
        %3016 = vmatprep.subr.bf16.mxu0 0
        %3017 = vmatpush2.bf16.msra.mxu0 %v2933
        %3018 = vmatprep.subr.bf16.mxu0 0
        %3019 = vmatpush2.bf16.msra.mxu0 %v2932
        %3020 = vmatprep.mubr.bf16.mxu0 %v2722
        %3021 = vmatmul.mubr.bf16.gmra.mxu0 %v2721
        %v3022 = vpop.f32.mrf.mxu0
        %v3023 = vadd.f32 %v2794, %v3022
        %v3024 = vpop.f32.mrf.mxu0
        %v3025 = vpop.f32.mrf.mxu0
        %v3026 = vpop.f32.mrf.mxu0
        %3027 = vdwg.mxu0
        %3028 = vmatprep.subr.bf16.mxu0 0
        %3029 = vmatpush1.bf16.msra.mxu0 %v2947
        %3030 = vmatprep.subr.bf16.mxu0 0
        %3031 = vmatpush1.bf16.msra.mxu0 %v2946
        %3032 = vmatprep.subr.bf16.mxu0 0
        %3033 = vmatpush1.bf16.msra.mxu0 %v2945
        %3034 = vmatprep.subr.bf16.mxu0 0
        %3035 = vmatpush1.bf16.msra.mxu0 %v2944
        %3036 = vmatprep.subr.bf16.mxu0 0
        %3037 = vmatpush1.bf16.msra.mxu0 %v2943
        %3038 = vmatprep.subr.bf16.mxu0 0
        %3039 = vmatpush1.bf16.msra.mxu0 %v2942
        %3040 = vmatprep.subr.bf16.mxu0 0
        %3041 = vmatpush1.bf16.msra.mxu0 %v2941
        %3042 = vmatprep.subr.bf16.mxu0 0
        %3043 = vmatpush1.bf16.msra.mxu0 %v2940
        %3044 = vmatprep.subr.bf16.mxu0 0
        %3045 = vmatpush2.bf16.msra.mxu0 %v2955
        %3046 = vmatprep.subr.bf16.mxu0 0
        %3047 = vmatpush2.bf16.msra.mxu0 %v2954
        %3048 = vmatprep.subr.bf16.mxu0 0
        %3049 = vmatpush2.bf16.msra.mxu0 %v2953
        %3050 = vmatprep.subr.bf16.mxu0 0
        %3051 = vmatpush2.bf16.msra.mxu0 %v2952
        %3052 = vmatprep.subr.bf16.mxu0 0
        %3053 = vmatpush2.bf16.msra.mxu0 %v2951
        %3054 = vmatprep.subr.bf16.mxu0 0
        %3055 = vmatpush2.bf16.msra.mxu0 %v2950
        %3056 = vmatprep.subr.bf16.mxu0 0
        %3057 = vmatpush2.bf16.msra.mxu0 %v2949
        %3058 = vmatprep.subr.bf16.mxu0 0
        %3059 = vmatpush2.bf16.msra.mxu0 %v2948
        %3060 = vmatprep.mubr.bf16.mxu0 %v2724
        %3061 = vmatmul.mubr.bf16.gmra.mxu0 %v2723
        %v3062 = vpop.f32.mrf.mxu0
        %v3063 = vadd.f32 %v3023, %v3062
        %v3064 = vpop.f32.mrf.mxu0
        %v3065 = vpop.f32.mrf.mxu0
        %v3066 = vpop.f32.mrf.mxu0
        %3067 = vdwg.mxu0
        %v3068 = vadd.f32 %v2387, %v3063
        %v3069 = vld [vmem:[%s15] sm:$0x1]
        %v3070 = vld [vmem:[%s16] sm:$0x1]
        %3071 = vadd.xlane.f32.xlu0 %v3068
        %v3072 = vpop.xlane.xlu0 %3071
        %v3073 = vmul.f32 %v3072, %v2364
        %v3074 = vsub.f32 %v3068, %v3073
        %v3075 = vmul.f32 %v3074, %v3074
        %3076 = vadd.xlane.f32.xlu0 %v3075
        %v3077 = vpop.xlane.xlu0 %3076
        %v3078 = vmul.f32 %v3077, %v2364
        %v3079 = vadd.f32 %v3078, 1e-05
        %v3080 = vrsqrt.pop %v3079
        %v3081 = vmul.f32 %v3074, %v3080
        %v3083 = vlaneseq
        %v3084 = vshrl.u32 %v3083, 7
        %v3085 = vsub.s32 0, %v3084
        %v3086 = vrot.slane %v3069, %v3085
        %v3088 = vmul.f32 %v3081, %v3086
        %v3090 = vlaneseq
        %v3091 = vshrl.u32 %v3090, 7
        %v3092 = vsub.s32 0, %v3091
        %v3093 = vrot.slane %v3070, %v3092
        %v3095 = vadd.f32 %v3088, %v3093
        %3096 = vst [vmem:[%s539] sm:$0xff] %v3095
        %s3097 = sand.u32 %s401, 1
        %s3098 = scalar_lea.sflag [#allocation3], %s3097
        %s3099 = sand.u32 %s401, 1
        %s3100 = smul.addr %s3099, 8
        %s3101 = scalar_lea.vmem [#allocation2], %s3100
        // Predicated region
        $region89: #{difference_extractor_forward.1} parent=87 // pred_check
          %p3102 = pneg %p411
        $region90: #{difference_extractor_forward.1} parent=87 // pred_check_branch
          %3104 = sbr.rel (%p3102) target = $region92
        $region91: #{difference_extractor_forward.1} parent=87 // pred_region
          %s3106 = ssub.s32 128, 128
          %3107 = vsyncadd %s3098, %s3106
          %s3108 = smul.addr %s31, 128
          %s3109 = scalar_lea.hbm %s17, %s3108
          %s3111 = sshll.u32 %s3101, 4
          %s3112 = int_to_ptr.vmem [resolvable:$true] %s3111
          %3114 = dma.vmem_to_hbm [thread:$0]  %s3112, 128, %s3109, %s3098
        $region92: #{difference_extractor_forward.1} parent=87 // pred_fallthru
          _
      $region88: #{difference_extractor_forward.1} parent=5 // pred_fallthru
        _
      %p3115 = scmp.le.s32.totalorder 2, %s26
      // Predicated region
      $region93: #{difference_extractor_forward.1} parent=5 // pred_check
        %p3116 = pneg %p3115
      $region94: #{difference_extractor_forward.1} parent=5 // pred_check_branch
        %3118 = sbr.rel (%p3116) target = $region96
      $region95: #{difference_extractor_forward.1} parent=5 // pred_region
        %s3119 = ssub.s32 %s26, 2
        // Predicated region
        $region97: #{difference_extractor_forward.1} parent=95 // pred_check
          %p3120 = pneg %p417
        $region98: #{difference_extractor_forward.1} parent=95 // pred_check_branch
          %3122 = sbr.rel (%p3120) target = $region100
        $region99: #{difference_extractor_forward.1} parent=95 // pred_region
          %s3123 = sand.u32 %s402, 1
          %s3124 = scalar_lea.sflag [#allocation3], %s3123
          %s3125 = sand.u32 %s402, 1
          %s3126 = smul.addr %s3125, 8
          %s3127 = scalar_lea.vmem [#allocation2], %s3126
          %3128 = dma.done %s3124, 128
        $region100: #{difference_extractor_forward.1} parent=95 // pred_fallthru
          _
      $region96: #{difference_extractor_forward.1} parent=5 // pred_fallthru
        _
    $region6: #{difference_extractor_forward.1} parent=1 // loop_footer
      %s30 = sadd.s32 1, %s26
    $region7: #{difference_extractor_forward.1} parent=1 // loop_footer_branch
      %25 = sbr.rel target = $region3
    $region8: #{difference_extractor_forward.1} parent=1 // loop_exit
      _
    %3129 = vsyncpa [#allocation3], 1
    %s3130 = scalar_lea.sflag [#allocation3], 1
    %3131 = vsyncpa %s3130, 1

</llo_original>
